<compile_context>
chip_gen: v7x
topology: tpu7x:2x2x1
jax: 0.10.0
libtpu: 0.0.40
codegen_flags: <defaults>
</compile_context>

<pallas_src>
import math
from functools import partial

import jax
import jax.numpy as jnp
from jax import lax
from jax.experimental import pallas as pl
from jax.experimental.pallas import tpu as pltpu


def _uniform_block(shape, seed, row_off, col_off, in_dim, out_dim):
    """U(0,1) noise for a (G, TI, TO) weight block via a counter-based hash.

    Pure jnp integer ops (VPU only): lowers on real TPU *and* in interpret mode,
    unlike pltpu.prng_*.  Keyed on the global (g, in, out) element index so the
    sampled noise is independent of the tiling / grid shape and of the batch
    grid index (the gate is shared across the batch, as in PyTorch).
    """
    g = lax.broadcasted_iota(jnp.int32, shape, 0).astype(jnp.uint32)
    i = (lax.broadcasted_iota(jnp.int32, shape, 1) + row_off).astype(jnp.uint32)
    j = (lax.broadcasted_iota(jnp.int32, shape, 2) + col_off).astype(jnp.uint32)
    idx = (g * jnp.uint32(in_dim) + i) * jnp.uint32(out_dim) + j
    h = idx * jnp.uint32(0x9E3779B1) + seed.astype(jnp.uint32)
    # lowbias32 finalizer: a handful of int VALU ops per element.
    h = h ^ (h >> 16)
    h = h * jnp.uint32(0x7FEB352D)
    h = h ^ (h >> 15)
    h = h * jnp.uint32(0x846CA68B)
    h = h ^ (h >> 16)
    # top 24 bits -> uniform strictly inside (0, 1)
    return ((h >> 8).astype(jnp.int32).astype(jnp.float32) + 0.5) * (1.0 / 16777216.0)


def _mixture_linear_kernel(seed_ref,                          # scalar prefetch (SMEM)
                           x_ref, wm_ref, wv_ref, wc_ref,     # inputs
                           bm_ref, bve_ref, eps_ref,
                           o_ref,                             # output
                           acc_m, acc_v,                      # VMEM scratch (f32)
                           *, tau, in_dim, out_dim):
    k = pl.program_id(2)                                      # In-reduction step

    @pl.when(k == 0)
    def _():
        acc_m[...] = jnp.zeros(acc_m.shape, jnp.float32)
        acc_v[...] = jnp.zeros(acc_v.shape, jnp.float32)

    # ---- mixture params stream as bf16; gate math kept in f32 ----
    # (on v6e/v7x the elementwise gate math could also run in bf16; kept f32 here
    #  for v5e compatibility and fidelity)
    wc = wc_ref[...].astype(jnp.float32)                      # (G, TI, TO)
    G, TI, TO = wc.shape

    # ---- in-kernel Gumbel noise for this (In-tile, Out-tile) weight block ----
    u = _uniform_block((G, TI, TO), seed_ref[0],
                       pl.program_id(2) * TI, pl.program_id(1) * TO,
                       in_dim, out_dim)
    neg_log_u = -jnp.log(u)                                   # Exp(1); gumbel = -log(neg_log_u)

    # ---- Gumbel-softmax over the mixture axis (axis 0) ----
    if tau == 1.0:
        # exp(c + g) = exp(c - max_c) / (-log u): one fewer EUP log per (g, elem),
        # max-subtraction on c retained for stability.
        c_max = jnp.max(wc, axis=0, keepdims=True)
        e = jnp.exp(wc - c_max) / neg_log_u
    else:
        logits = (wc - jnp.log(neg_log_u)) * (1.0 / tau)
        e = jnp.exp(logits - jnp.max(logits, axis=0, keepdims=True))
    w_soft = e * (1.0 / jnp.sum(e, axis=0, keepdims=True))    # exact normalization

    w_mean = jnp.sum(wm_ref[...].astype(jnp.float32) * w_soft, axis=0)          # (TI, TO)
    w_varexp = jnp.exp(jnp.sum(wv_ref[...].astype(jnp.float32) * w_soft, axis=0))

    # ---- accumulate mean / variance matmuls over In (bf16 MXU, f32 accumulate) ----
    x = x_ref[...]                                            # (TB, TI) f32
    acc_m[...] += jnp.dot(x.astype(jnp.bfloat16), w_mean.astype(jnp.bfloat16),
                          preferred_element_type=jnp.float32)
    acc_v[...] += jnp.dot((x * x).astype(jnp.bfloat16), w_varexp.astype(jnp.bfloat16),
                          preferred_element_type=jnp.float32)

    # ---- finalize: add pre-collapsed bias, local reparameterization ----
    @pl.when(k == pl.num_programs(2) - 1)
    def _():
        out_mean = acc_m[...] + bm_ref[...]
        out_var = acc_v[...] + bve_ref[...]
        o_ref[...] = (out_mean + jnp.sqrt(out_var) * eps_ref[...]).astype(o_ref.dtype)


def _default_vmem_limit_bytes():
    # ~75% of physical VMEM: ~96 MiB on v5e/v6e (128 MiB), 48 MiB on v7x (64 MiB).
    try:
        return min((int(pltpu.get_tpu_info().vmem_capacity_bytes) * 3) // 4, 100 << 20)
    except Exception:   # non-TPU / interpret / older jax: conservative default
        return 48 << 20


def mixture_linear_forward(x, W_mean, W_var, W_coff, b_mean, b_var, b_coff,
                           gumbel_b, eps, seed, *, tau=1.0,
                           block_batch=256, block_out=512, block_in=512,
                           vmem_limit_bytes=None):
    """MixtureLayer forward (Linear variant).

    x:                 (B, In)       f32
    W_mean/var/coff:   (G, In, Out)  stored bf16, lane-dense layout chosen at init
    b_mean/var/coff:   (G, Out)      f32
    gumbel_b:          (G, Out)      bias-side gumbel noise (tiny, JAX-sampled)
    eps:               (B, Out)      reparameterization noise
    seed:              int           per-forward seed for the in-kernel weight gumbel noise
    """
    B, In = x.shape
    G, In2, Out = W_mean.shape
    assert In == In2
    TB = min(block_batch, B)
    TO = min(block_out, Out)
    TI = min(block_in, In)
    assert B % TB == 0 and Out % TO == 0 and In % TI == 0, \
        "use divisible / padded layer sizes"

    # Mixture weights stream as bf16 (no-op if already stored in bf16).
    W_mean = W_mean.astype(jnp.bfloat16)
    W_var = W_var.astype(jnp.bfloat16)
    W_coff = W_coff.astype(jnp.bfloat16)

    # Bias collapse is only (G, Out)-sized: do it once per forward in f32 JAX and
    # feed the kernel two (1, Out) vectors (hoisted out of the In-reduction loop).
    b_soft = jax.nn.softmax((b_coff.astype(jnp.float32)
                             + gumbel_b.astype(jnp.float32)) / tau, axis=0)
    b_mean_c = jnp.sum(b_mean.astype(jnp.float32) * b_soft, axis=0)[None, :]
    b_varexp_c = jnp.exp(jnp.sum(b_var.astype(jnp.float32) * b_soft, axis=0))[None, :]

    seed_arr = jnp.asarray([seed], dtype=jnp.int32)
    if vmem_limit_bytes is None:
        vmem_limit_bytes = _default_vmem_limit_bytes()

    # If profiling shows exposed weight DMA, add pipeline_mode=pl.Buffered(3) here
    # (cheap now that the weight blocks are bf16).  On v5e, int8-quantized weight
    # storage would cut HBM traffic another 2x.
    w_spec = pl.BlockSpec((G, TI, TO), lambda b, i, k, s: (0, k, i))
    grid_spec = pltpu.PrefetchScalarGridSpec(
        num_scalar_prefetch=1,
        grid=(B // TB, Out // TO, In // TI),                   # reduction axis last
        in_specs=[
            pl.BlockSpec((TB, TI), lambda b, i, k, s: (b, k)),     # x
            w_spec, w_spec, w_spec,                                # W_mean, W_var, W_coff
            pl.BlockSpec((1, TO), lambda b, i, k, s: (0, i)),      # collapsed bias mean
            pl.BlockSpec((1, TO), lambda b, i, k, s: (0, i)),      # collapsed exp(bias var)
            pl.BlockSpec((TB, TO), lambda b, i, k, s: (b, i)),     # eps
        ],
        out_specs=pl.BlockSpec((TB, TO), lambda b, i, k, s: (b, i)),
        scratch_shapes=[pltpu.VMEM((TB, TO), jnp.float32),
                        pltpu.VMEM((TB, TO), jnp.float32)],
    )
    return pl.pallas_call(
        partial(_mixture_linear_kernel, tau=float(tau), in_dim=In, out_dim=Out),
        out_shape=jax.ShapeDtypeStruct((B, Out), jnp.float32),
        grid_spec=grid_spec,
        compiler_params=pltpu.CompilerParams(
            dimension_semantics=("parallel", "parallel", "arbitrary"),
            vmem_limit_bytes=vmem_limit_bytes,
        ),
    )(seed_arr, x, W_mean, W_var, W_coff, b_mean_c, b_varexp_c, eps)


if __name__ == "__main__":
    key = jax.random.PRNGKey(0)
    B, In, Out, G = 8, 512, 256, 2
    tau = 1.0
    init_var = -7.0   # value set by add_new_task(); construct() uses prior_vars[0]

    k_wm, k_bm, k_gb, k_eps, k_x = jax.random.split(key, 5)

    # PyTorch init: W_mean[g] ~ kaiming_uniform(a=sqrt(5)) == U(+-1/sqrt(fan_in)),
    # b_mean[g] ~ U(+-1/sqrt(fan_in)); W_var=b_var=init_var; W_coff=b_coff=1.
    # One-time storage choices at init: (G, In, Out) layout, bf16 for the three
    # weight-sized mixture tensors (biases stay f32; they are tiny).
    bound = 1.0 / math.sqrt(In)
    W_mean = jax.random.uniform(k_wm, (G, In, Out), jnp.float32,
                                -bound, bound).astype(jnp.bfloat16)
    b_mean = jax.random.uniform(k_bm, (G, Out), jnp.float32, -bound, bound)
    W_var = jnp.full((G, In, Out), init_var, jnp.bfloat16)
    b_var = jnp.full((G, Out), init_var, jnp.float32)
    W_coff = jnp.ones((G, In, Out), jnp.bfloat16)
    b_coff = jnp.ones((G, Out), jnp.float32)

    # Bias-side gumbel noise + reparameterization noise (tiny; sampled in JAX).
    u_b = jax.random.uniform(k_gb, (G, Out), jnp.float32, 1e-10, 1.0)
    gumbel_b = -jnp.log(-jnp.log(u_b))
    eps = jax.random.normal(k_eps, (B, Out), jnp.float32)
    x = jax.random.normal(k_x, (B, In), jnp.float32)

    # --- Check 1: tied mixture components => output is independent of the
    #     (in-kernel) weight gumbel noise, so it must match a pure-JAX reference.
    #     Use small blocks so a real (Out x In) grid / accumulation is exercised. ---
    W_mean_t = jnp.concatenate([W_mean[:1]] * G, axis=0)
    b_mean_t = jnp.concatenate([b_mean[:1]] * G, axis=0)

    out_t = mixture_linear_forward(x, W_mean_t, W_var, W_coff,
                                   b_mean_t, b_var, b_coff,
                                   gumbel_b, eps, seed=1234, tau=tau,
                                   block_out=128, block_in=256)
    jax.block_until_ready(out_t)

    # Reference mirrors the kernel's bf16 rounding of the matmul operands.
    xb = x.astype(jnp.bfloat16).astype(jnp.float32)
    x2b = (x * x).astype(jnp.bfloat16).astype(jnp.float32)
    Wm0 = W_mean_t[0].astype(jnp.float32)
    Wve0 = jnp.exp(W_var[0].astype(jnp.float32)).astype(jnp.bfloat16).astype(jnp.float32)
    b_soft = jax.nn.softmax((b_coff + gumbel_b) / tau, axis=0)
    ref_mean = xb @ Wm0 + jnp.sum(b_mean_t * b_soft, axis=0)
    ref_var = x2b @ Wve0 + jnp.exp(jnp.sum(b_var * b_soft, axis=0))
    ref = ref_mean + jnp.sqrt(ref_var) * eps
    assert out_t.shape == (B, Out)
    assert jnp.allclose(out_t, ref, atol=1e-2, rtol=1e-2), "mismatch vs reference"

    # --- Check 2: distinct components => stochastic mixture gate; verify shape,
    #     finiteness, and per-seed determinism of the in-kernel hash noise
    #     (default large-tile path). ---
    out1 = mixture_linear_forward(x, W_mean, W_var, W_coff,
                                  b_mean, b_var, b_coff,
                                  gumbel_b, eps, seed=42, tau=tau)
    out2 = mixture_linear_forward(x, W_mean, W_var, W_coff,
                                  b_mean, b_var, b_coff,
                                  gumbel_b, eps, seed=42, tau=tau)
    jax.block_until_ready((out1, out2))
    assert out1.shape == (B, Out)
    assert bool(jnp.all(jnp.isfinite(out1)))
    assert bool(jnp.all(out1 == out2)), "in-kernel noise not deterministic per seed"

    print("KERNEL_OK")
</pallas_src>

<mosaic_0001>
module attributes {stable_mosaic.version = 11 : i64} {
  func.func @_mixture_linear_kernel(%arg0: i32, %arg1: i32, %arg2: i32, %arg3: memref<1xi32, #tpu.memory_space<smem>>, %arg4: memref<8x256xf32, #tpu.memory_space<vmem>>, %arg5: memref<2x256x128xbf16, #tpu.memory_space<vmem>>, %arg6: memref<2x256x128xbf16, #tpu.memory_space<vmem>>, %arg7: memref<2x256x128xbf16, #tpu.memory_space<vmem>>, %arg8: memref<1x128xf32, #tpu.memory_space<vmem>>, %arg9: memref<1x128xf32, #tpu.memory_space<vmem>>, %arg10: memref<8x128xf32, #tpu.memory_space<vmem>>, %arg11: memref<8x128xf32, #tpu.memory_space<vmem>>, %arg12: memref<8x128xf32, #tpu.memory_space<vmem>>, %arg13: memref<8x128xf32, #tpu.memory_space<vmem>>) attributes {dimension_semantics = [#tpu.dimension_semantics<parallel>, #tpu.dimension_semantics<parallel>, #tpu.dimension_semantics<arbitrary>], iteration_bounds = array<i64: 1, 2, 2>, scalar_prefetch = 1 : i64, scratch_operands = 2 : i64, tpu.core_type = #tpu.core_type<tc>, window_params = [{transform_indices = @transform_0, window_bounds = array<i64: 8, 256>}, {transform_indices = @transform_1, window_bounds = array<i64: 2, 256, 128>}, {transform_indices = @transform_2, window_bounds = array<i64: 2, 256, 128>}, {transform_indices = @transform_3, window_bounds = array<i64: 2, 256, 128>}, {transform_indices = @transform_4, window_bounds = array<i64: 1, 128>}, {transform_indices = @transform_5, window_bounds = array<i64: 1, 128>}, {transform_indices = @transform_6, window_bounds = array<i64: 8, 128>}, {transform_indices = @transform_7, window_bounds = array<i64: 8, 128>}]} {
    %c0_i32 = arith.constant 0 : i32
    %0 = arith.cmpi eq, %arg2, %c0_i32 : i32
    %1 = arith.extui %0 : i1 to i32
    %c0_i32_0 = arith.constant 0 : i32
    %2 = arith.cmpi ne, %1, %c0_i32_0 : i32
    scf.if %2 {
      %cst_32 = arith.constant 0.000000e+00 : f32
      %86 = vector.broadcast %cst_32 : f32 to vector<8x128xf32>
      %c0_33 = arith.constant 0 : index
      %c0_34 = arith.constant 0 : index
      %87 = vector.load %arg12[%c0_33, %c0_34] : memref<8x128xf32, #tpu.memory_space<vmem>>, vector<8x128xf32>
      tpu.vector_store %arg12[%c0_33, %c0_34], %86 {strides = array<i32>} : memref<8x128xf32, #tpu.memory_space<vmem>>, vector<8x128xf32>,
      %cst_35 = arith.constant 0.000000e+00 : f32
      %88 = vector.broadcast %cst_35 : f32 to vector<8x128xf32>
      %c0_36 = arith.constant 0 : index
      %c0_37 = arith.constant 0 : index
      %89 = vector.load %arg13[%c0_36, %c0_37] : memref<8x128xf32, #tpu.memory_space<vmem>>, vector<8x128xf32>
      tpu.vector_store %arg13[%c0_36, %c0_37], %88 {strides = array<i32>} : memref<8x128xf32, #tpu.memory_space<vmem>>, vector<8x128xf32>,
    } else {
    }
    %c0 = arith.constant 0 : index
    %c0_1 = arith.constant 0 : index
    %c0_2 = arith.constant 0 : index
    %3 = vector.load %arg7[%c0, %c0_1, %c0_2] : memref<2x256x128xbf16, #tpu.memory_space<vmem>>, vector<2x256x128xbf16>
    %4 = arith.extf %3 : vector<2x256x128xbf16> to vector<2x256x128xf32>
    %c0_3 = arith.constant 0 : index
    %5 = memref.load %arg3[%c0_3] : memref<1xi32, #tpu.memory_space<smem>>
    %c256_i32 = arith.constant 256 : i32
    %6 = arith.muli %arg2, %c256_i32 : i32
    %c128_i32 = arith.constant 128 : i32
    %7 = arith.muli %arg1, %c128_i32 : i32
    %8 = tpu.iota {dimensions = array<i32: 0>} : vector<2x256x128xi32>
    %9 = tpu.iota {dimensions = array<i32: 1>} : vector<2x256x128xi32>
    %10 = vector.broadcast %6 : i32 to vector<2x256x128xi32>
    %11 = arith.addi %9, %10 : vector<2x256x128xi32>
    %12 = tpu.iota {dimensions = array<i32: 2>} : vector<2x256x128xi32>
    %13 = vector.broadcast %7 : i32 to vector<2x256x128xi32>
    %14 = arith.addi %12, %13 : vector<2x256x128xi32>
    %c512_i32 = arith.constant 512 : i32
    %15 = vector.broadcast %c512_i32 : i32 to vector<2x256x128xi32>
    %16 = arith.muli %8, %15 : vector<2x256x128xi32>
    %17 = arith.addi %16, %11 : vector<2x256x128xi32>
    %c256_i32_4 = arith.constant 256 : i32
    %18 = vector.broadcast %c256_i32_4 : i32 to vector<2x256x128xi32>
    %19 = arith.muli %17, %18 : vector<2x256x128xi32>
    %20 = arith.addi %19, %14 : vector<2x256x128xi32>
    %c-1640531535_i32 = arith.constant -1640531535 : i32
    %21 = vector.broadcast %c-1640531535_i32 : i32 to vector<2x256x128xi32>
    %22 = arith.muli %20, %21 : vector<2x256x128xi32>
    %23 = vector.broadcast %5 : i32 to vector<2x256x128xi32>
    %24 = arith.addi %22, %23 : vector<2x256x128xi32>
    %c16_i32 = arith.constant 16 : i32
    %25 = vector.broadcast %c16_i32 : i32 to vector<2x256x128xi32>
    %26 = arith.shrui %24, %25 : vector<2x256x128xi32>
    %27 = arith.xori %24, %26 : vector<2x256x128xi32>
    %c2146121005_i32 = arith.constant 2146121005 : i32
    %28 = vector.broadcast %c2146121005_i32 : i32 to vector<2x256x128xi32>
    %29 = arith.muli %27, %28 : vector<2x256x128xi32>
    %c15_i32 = arith.constant 15 : i32
    %30 = vector.broadcast %c15_i32 : i32 to vector<2x256x128xi32>
    %31 = arith.shrui %29, %30 : vector<2x256x128xi32>
    %32 = arith.xori %29, %31 : vector<2x256x128xi32>
    %c-2073254261_i32 = arith.constant -2073254261 : i32
    %33 = vector.broadcast %c-2073254261_i32 : i32 to vector<2x256x128xi32>
    %34 = arith.muli %32, %33 : vector<2x256x128xi32>
    %c16_i32_5 = arith.constant 16 : i32
    %35 = vector.broadcast %c16_i32_5 : i32 to vector<2x256x128xi32>
    %36 = arith.shrui %34, %35 : vector<2x256x128xi32>
    %37 = arith.xori %34, %36 : vector<2x256x128xi32>
    %c8_i32 = arith.constant 8 : i32
    %38 = vector.broadcast %c8_i32 : i32 to vector<2x256x128xi32>
    %39 = arith.shrui %37, %38 : vector<2x256x128xi32>
    %40 = arith.sitofp %39 : vector<2x256x128xi32> to vector<2x256x128xf32>
    %cst = arith.constant 5.000000e-01 : f32
    %41 = vector.broadcast %cst : f32 to vector<2x256x128xf32>
    %42 = arith.addf %40, %41 : vector<2x256x128xf32>
    %cst_6 = arith.constant 5.96046448E-8 : f32
    %43 = vector.broadcast %cst_6 : f32 to vector<2x256x128xf32>
    %44 = arith.mulf %42, %43 : vector<2x256x128xf32>
    %45 = math.log %44 : vector<2x256x128xf32>
    %cst_7 = arith.constant 0.000000e+00 : f32
    %46 = vector.broadcast %cst_7 : f32 to vector<2x256x128xf32>
    %47 = arith.subf %46, %45 : vector<2x256x128xf32>
    %cst_8 = arith.constant dense<0xFF800000> : vector<256x128xf32>
    %48 = vector.multi_reduction <maximumf>, %4, %cst_8 [0] : vector<2x256x128xf32> to vector<256x128xf32>
    %49 = vector.shape_cast %48 : vector<256x128xf32> to vector<1x256x128xf32>
    %50 = vector.broadcast %49 : vector<1x256x128xf32> to vector<2x256x128xf32>
    %51 = arith.subf %4, %50 : vector<2x256x128xf32>
    %52 = math.exp %51 : vector<2x256x128xf32>
    %53 = arith.divf %52, %47 : vector<2x256x128xf32>
    %cst_9 = arith.constant dense<0.000000e+00> : vector<256x128xf32>
    %54 = vector.multi_reduction <add>, %53, %cst_9 [0] : vector<2x256x128xf32> to vector<256x128xf32>
    %55 = vector.shape_cast %54 : vector<256x128xf32> to vector<1x256x128xf32>
    %cst_10 = arith.constant 1.000000e+00 : f32
    %56 = vector.broadcast %cst_10 : f32 to vector<1x256x128xf32>
    %57 = arith.divf %56, %55 : vector<1x256x128xf32>
    %58 = vector.broadcast %57 : vector<1x256x128xf32> to vector<2x256x128xf32>
    %59 = arith.mulf %53, %58 : vector<2x256x128xf32>
    %c0_11 = arith.constant 0 : index
    %c0_12 = arith.constant 0 : index
    %c0_13 = arith.constant 0 : index
    %60 = vector.load %arg5[%c0_11, %c0_12, %c0_13] : memref<2x256x128xbf16, #tpu.memory_space<vmem>>, vector<2x256x128xbf16>
    %61 = arith.extf %60 : vector<2x256x128xbf16> to vector<2x256x128xf32>
    %62 = arith.mulf %61, %59 : vector<2x256x128xf32>
    %cst_14 = arith.constant dense<0.000000e+00> : vector<256x128xf32>
    %63 = vector.multi_reduction <add>, %62, %cst_14 [0] : vector<2x256x128xf32> to vector<256x128xf32>
    %c0_15 = arith.constant 0 : index
    %c0_16 = arith.constant 0 : index
    %c0_17 = arith.constant 0 : index
    %64 = vector.load %arg6[%c0_15, %c0_16, %c0_17] : memref<2x256x128xbf16, #tpu.memory_space<vmem>>, vector<2x256x128xbf16>
    %65 = arith.extf %64 : vector<2x256x128xbf16> to vector<2x256x128xf32>
    %66 = arith.mulf %65, %59 : vector<2x256x128xf32>
    %cst_18 = arith.constant dense<0.000000e+00> : vector<256x128xf32>
    %67 = vector.multi_reduction <add>, %66, %cst_18 [0] : vector<2x256x128xf32> to vector<256x128xf32>
    %68 = math.exp %67 : vector<256x128xf32>
    %c0_19 = arith.constant 0 : index
    %c0_20 = arith.constant 0 : index
    %69 = vector.load %arg4[%c0_19, %c0_20] : memref<8x256xf32, #tpu.memory_space<vmem>>, vector<8x256xf32>
    %c0_21 = arith.constant 0 : index
    %c0_22 = arith.constant 0 : index
    %70 = vector.load %arg12[%c0_21, %c0_22] : memref<8x128xf32, #tpu.memory_space<vmem>>, vector<8x128xf32>
    %71 = arith.truncf %69 : vector<8x256xf32> to vector<8x256xbf16>
    %72 = arith.truncf %63 : vector<256x128xf32> to vector<256x128xbf16>
    %cst_23 = arith.constant dense<0.000000e+00> : vector<8x128xf32>
    %73 = tpu.matmul %71, %72, %cst_23 {dimension_numbers = #tpu.dot_dimension_numbers<[1], [0], [0], [1], [0, 0, 1, 1], [], []>} : vector<8x256xbf16>, vector<256x128xbf16>, vector<8x128xf32> -> vector<8x128xf32>
    %74 = arith.addf %70, %73 : vector<8x128xf32>
    %c0_24 = arith.constant 0 : index
    %c0_25 = arith.constant 0 : index
    %75 = vector.load %arg12[%c0_24, %c0_25] : memref<8x128xf32, #tpu.memory_space<vmem>>, vector<8x128xf32>
    tpu.vector_store %arg12[%c0_24, %c0_25], %74 {strides = array<i32>} : memref<8x128xf32, #tpu.memory_space<vmem>>, vector<8x128xf32>,
    %c0_26 = arith.constant 0 : index
    %c0_27 = arith.constant 0 : index
    %76 = vector.load %arg13[%c0_26, %c0_27] : memref<8x128xf32, #tpu.memory_space<vmem>>, vector<8x128xf32>
    %77 = arith.mulf %69, %69 : vector<8x256xf32>
    %78 = arith.truncf %77 : vector<8x256xf32> to vector<8x256xbf16>
    %79 = arith.truncf %68 : vector<256x128xf32> to vector<256x128xbf16>
    %cst_28 = arith.constant dense<0.000000e+00> : vector<8x128xf32>
    %80 = tpu.matmul %78, %79, %cst_28 {dimension_numbers = #tpu.dot_dimension_numbers<[1], [0], [0], [1], [0, 0, 1, 1], [], []>} : vector<8x256xbf16>, vector<256x128xbf16>, vector<8x128xf32> -> vector<8x128xf32>
    %81 = arith.addf %76, %80 : vector<8x128xf32>
    %c0_29 = arith.constant 0 : index
    %c0_30 = arith.constant 0 : index
    %82 = vector.load %arg13[%c0_29, %c0_30] : memref<8x128xf32, #tpu.memory_space<vmem>>, vector<8x128xf32>
    tpu.vector_store %arg13[%c0_29, %c0_30], %81 {strides = array<i32>} : memref<8x128xf32, #tpu.memory_space<vmem>>, vector<8x128xf32>,
    %c1_i32 = arith.constant 1 : i32
    %83 = arith.cmpi eq, %arg2, %c1_i32 : i32
    %84 = arith.extui %83 : i1 to i32
    %c0_i32_31 = arith.constant 0 : i32
    %85 = arith.cmpi ne, %84, %c0_i32_31 : i32
    scf.if %85 {
      %c0_32 = arith.constant 0 : index
      %c0_33 = arith.constant 0 : index
      %86 = vector.load %arg12[%c0_32, %c0_33] : memref<8x128xf32, #tpu.memory_space<vmem>>, vector<8x128xf32>
      %c0_34 = arith.constant 0 : index
      %c0_35 = arith.constant 0 : index
      %87 = vector.load %arg8[%c0_34, %c0_35] : memref<1x128xf32, #tpu.memory_space<vmem>>, vector<1x128xf32>
      %88 = vector.broadcast %87 : vector<1x128xf32> to vector<8x128xf32>
      %89 = arith.addf %86, %88 : vector<8x128xf32>
      %c0_36 = arith.constant 0 : index
      %c0_37 = arith.constant 0 : index
      %90 = vector.load %arg13[%c0_36, %c0_37] : memref<8x128xf32, #tpu.memory_space<vmem>>, vector<8x128xf32>
      %c0_38 = arith.constant 0 : index
      %c0_39 = arith.constant 0 : index
      %91 = vector.load %arg9[%c0_38, %c0_39] : memref<1x128xf32, #tpu.memory_space<vmem>>, vector<1x128xf32>
      %92 = vector.broadcast %91 : vector<1x128xf32> to vector<8x128xf32>
      %93 = arith.addf %90, %92 : vector<8x128xf32>
      %94 = math.sqrt %93 : vector<8x128xf32>
      %c0_40 = arith.constant 0 : index
      %c0_41 = arith.constant 0 : index
      %95 = vector.load %arg10[%c0_40, %c0_41] : memref<8x128xf32, #tpu.memory_space<vmem>>, vector<8x128xf32>
      %96 = arith.mulf %94, %95 : vector<8x128xf32>
      %97 = arith.addf %89, %96 : vector<8x128xf32>
      %c0_42 = arith.constant 0 : index
      %c0_43 = arith.constant 0 : index
      %98 = vector.load %arg11[%c0_42, %c0_43] : memref<8x128xf32, #tpu.memory_space<vmem>>, vector<8x128xf32>
      tpu.vector_store %arg11[%c0_42, %c0_43], %97 {strides = array<i32>} : memref<8x128xf32, #tpu.memory_space<vmem>>, vector<8x128xf32>,
    } else {
    }
    return
  }
  func.func @transform_0(%arg0: i32, %arg1: i32, %arg2: i32, %arg3: memref<1xi32, #tpu.memory_space<smem>>) -> (i32, i32) {
    %c0_i32 = arith.constant 0 : i32
    return %arg0, %arg2 : i32, i32
  }
  func.func @transform_1(%arg0: i32, %arg1: i32, %arg2: i32, %arg3: memref<1xi32, #tpu.memory_space<smem>>) -> (i32, i32, i32) {
    %c0_i32 = arith.constant 0 : i32
    %c0_i32_0 = arith.constant 0 : i32
    return %c0_i32, %arg2, %arg1 : i32, i32, i32
  }
  func.func @transform_2(%arg0: i32, %arg1: i32, %arg2: i32, %arg3: memref<1xi32, #tpu.memory_space<smem>>) -> (i32, i32, i32) {
    %c0_i32 = arith.constant 0 : i32
    %c0_i32_0 = arith.constant 0 : i32
    return %c0_i32, %arg2, %arg1 : i32, i32, i32
  }
  func.func @transform_3(%arg0: i32, %arg1: i32, %arg2: i32, %arg3: memref<1xi32, #tpu.memory_space<smem>>) -> (i32, i32, i32) {
    %c0_i32 = arith.constant 0 : i32
    %c0_i32_0 = arith.constant 0 : i32
    return %c0_i32, %arg2, %arg1 : i32, i32, i32
  }
  func.func @transform_4(%arg0: i32, %arg1: i32, %arg2: i32, %arg3: memref<1xi32, #tpu.memory_space<smem>>) -> (i32, i32) {
    %c0_i32 = arith.constant 0 : i32
    %c0_i32_0 = arith.constant 0 : i32
    return %c0_i32, %arg1 : i32, i32
  }
  func.func @transform_5(%arg0: i32, %arg1: i32, %arg2: i32, %arg3: memref<1xi32, #tpu.memory_space<smem>>) -> (i32, i32) {
    %c0_i32 = arith.constant 0 : i32
    %c0_i32_0 = arith.constant 0 : i32
    return %c0_i32, %arg1 : i32, i32
  }
  func.func @transform_6(%arg0: i32, %arg1: i32, %arg2: i32, %arg3: memref<1xi32, #tpu.memory_space<smem>>) -> (i32, i32) {
    %c0_i32 = arith.constant 0 : i32
    return %arg0, %arg1 : i32, i32
  }
  func.func @transform_7(%arg0: i32, %arg1: i32, %arg2: i32, %arg3: memref<1xi32, #tpu.memory_space<smem>>) -> (i32, i32) {
    %c0_i32 = arith.constant 0 : i32
    return %arg0, %arg1 : i32, i32
  }
}

</mosaic_0001>

<llo_original>
// kernel: tpu_custom_call.1
$region0: #{tpu_custom_call.1}
  #allocation0 [shape = 'u32[]', space=smem, size = 0x4, offset = 0x4, fixed_abs, tag = 'smem constant byte address 0x4 - core index']
  #allocation1 [shape = 'u32[144,128]{1,0:T(1,128)}', space=vmem, size = 0x12000, scoped, tag = 'internal scratch']
  #allocation2 [shape = 'f32[8,128]{1,0:T(8,128)}', space=vmem, size = 0x1000, scoped, tag = 'scratch operand']
  #allocation3 [shape = 'f32[8,128]{1,0:T(8,128)}', space=vmem, size = 0x1000, scoped, tag = 'scratch operand']
  #allocation4 [shape = 's32[1]{0}', space=sflag, size = 0x4, scoped, tag = 'scoped memory for tpu_custom_call.1']
  #allocation5 [shape = 's32[1]{0:T(128)S(6)}', space=smem, size = 0x200, scoped, tag = 'prefetched SMEM operand 0']
  #allocation15 [shape = 's32[]', space=sflag, size = 0x4, offset = 0, fixed_abs, tag = 'sflag constant byte address 0x0 - dummy sync flag']
  #allocation17 [shape = 's32[]', space=sflag, size = 0x4, offset = 0, fixed_abs, tag = 'sflag constant byte address 0x0 - dummy sync flag']
  #allocation19 [shape = 's32[]', space=sflag, size = 0x4, offset = 0, fixed_abs, tag = 'sflag constant byte address 0x0 - dummy sync flag']
  %s0 = inlined_call_operand.<no memory space> [shape: s32[1], index: 0, kind: input, shape index: {}]
  %s1 = inlined_call_operand.hbm [shape: f32[8,512], index: 1, kind: input, shape index: {}]
  %s2 = inlined_call_operand.hbm [shape: bf16[2,512,256], index: 2, kind: input, shape index: {}]
  %s3 = inlined_call_operand.hbm [shape: bf16[2,512,256], index: 3, kind: input, shape index: {}]
  %s4 = inlined_call_operand.hbm [shape: bf16[2,512,256], index: 4, kind: input, shape index: {}]
  %s5 = inlined_call_operand.vmem [shape: f32[1,256], index: 5, kind: input, shape index: {}]
  %s6 = inlined_call_operand.vmem [shape: f32[1,256], index: 6, kind: input, shape index: {}]
  %s7 = inlined_call_operand.vmem [shape: f32[8,256], index: 7, kind: input, shape index: {}]
  %s8 = inlined_call_operand.hbm [shape: f32[8,256], index: 8, kind: output, shape index: {}]
  %s9 = sld [smem:[#allocation0]]
  $region85: #{tpu_custom_call.1} parent=0
    _
  %s11 = ssub.s32 1, %s9
  %s12 = scalar_select 0, %s11, %s9
  %13 = sst [smem:[#allocation5]] %s0
  $region1: #{tpu_custom_call.1} parent=0
    #allocation6 [shape = 'u8[16384]{0}', space=vmem, size = 0x4000, scoped, tag = 'input window, operand 1']
    #allocation7 [shape = 's32[2]{0}', space=sflag, size = 0x8, scoped, tag = 'scoped memory for tpu_custom_call.1']
    #allocation8 [shape = 's32[2]{0}', space=sflag, size = 0x8, scoped, tag = 'scoped memory for tpu_custom_call.1']
    #allocation9 [shape = 'u8[262144]{0}', space=vmem, size = 0x40000, scoped, tag = 'input window, operand 2']
    #allocation10 [shape = 's32[2]{0}', space=sflag, size = 0x8, scoped, tag = 'scoped memory for tpu_custom_call.1']
    #allocation11 [shape = 'u8[262144]{0}', space=vmem, size = 0x40000, scoped, tag = 'input window, operand 3']
    #allocation12 [shape = 'u8[262144]{0}', space=vmem, size = 0x40000, scoped, tag = 'input window, operand 4']
    #allocation13 [shape = 's32[2]{0}', space=sflag, size = 0x8, scoped, tag = 'scoped memory for tpu_custom_call.1']
    #allocation14 [shape = 'u8[8192]{0}', space=vmem, size = 0x2000, scoped, tag = 'output window, operand 0']
    %14 = vsyncpa [#allocation7], 0
    %s15 = scalar_lea.sflag [#allocation7], 1
    %16 = vsyncpa %s15, 0
    %17 = vsyncpa [#allocation10], 0
    %s18 = scalar_lea.sflag [#allocation10], 1
    %19 = vsyncpa %s18, 0
    %20 = vsyncpa [#allocation13], 0
    %s21 = scalar_lea.sflag [#allocation13], 1
    %22 = vsyncpa %s21, 0
    %23 = vsyncpa [#allocation8], 0
    %s24 = scalar_lea.sflag [#allocation8], 1
    %25 = vsyncpa %s24, 0
    loop: start=0, step=1, limit=6
    $region2: #{tpu_custom_call.1} parent=1 // loop_pre_header
      _
    $region3: #{tpu_custom_call.1} parent=1 // loop_header
      %s27 = sphi 0, %s31
      %p28 = scmp.ge.s32.totalorder %s27, 6
      %s34 = sphi 0, %s53
      %s35 = sphi 0, %s49
      %s36 = sphi 0, %s45
      %s37 = sphi 0, %s34
      %s38 = sphi 0, %s35
      %s39 = sphi 0, %s36
      %s40 = sphi 0, %s37
      %s41 = sphi 0, %s38
      %s42 = sphi 0, %s39
      %s58 = sphi 0, %s60
      %s61 = sphi 0, %s58
      %s62 = sphi 0, %s61
      %s78 = sphi 0, %s62
      %s86 = sphi 0, %s88
      %s89 = sphi 0, %s86
      %s90 = sphi 0, %s89
      %s106 = sphi 0, %s90
      %s114 = sphi 0, %s116
      %s117 = sphi 0, %s114
      %s118 = sphi 0, %s117
      %s134 = sphi 0, %s118
      %s142 = sphi 0, %s144
      %s145 = sphi 0, %s142
      %s146 = sphi 0, %s145
      %s162 = sphi 0, %s146
      %s168 = sphi 0, %s170
      %s171 = sphi 0, %s168
      %s172 = sphi 0, %s171
      %s188 = sphi 0, %s172
      %s194 = sphi 0, %s196
      %s197 = sphi 0, %s194
      %s198 = sphi 0, %s197
      %s214 = sphi 0, %s198
      %s222 = sphi 0, %s224
      %s225 = sphi 0, %s222
      %s226 = sphi 0, %s225
      %s242 = sphi 0, %s226
      %s250 = sphi 0, %s252
      %s253 = sphi 0, %s250
      %s254 = sphi 0, %s253
      %s270 = sphi 0, %s254
    $region4: #{tpu_custom_call.1} parent=1 // loop_header_branch
      %30 = sbr.rel (%p28) target = $region8
    $region5: #{tpu_custom_call.1} parent=1 // loop_body
      %s32 = ssub.s32 %s27, 1
      %s33 = ssub.s32 %s27, 2
      %s43 = sadd.s32 1, %s36
      %p44 = scmp.ge.s32.totalorder %s43, 2
      %s45 = scalar_select %p44, 0, %s43
      %s46 = sadd.s32 1, %s35
      %s47 = scalar_select %p44, %s46, %s35
      %p48 = scmp.ge.s32.totalorder %s47, 2
      %s49 = scalar_select %p48, 0, %s47
      %s50 = sadd.s32 1, %s34
      %s51 = scalar_select %p48, %s50, %s34
      %p52 = scmp.ge.s32.totalorder %s51, 1
      %s53 = scalar_select %p52, 0, %s51
      %s54 = ssub.s32 %s34, %s53
      %s55 = ssub.s32 %s36, %s45
      %s56 = sor.u32 %s54, %s55
      %p57 = scmp.eq.s32.totalorder %s56, 0
      %s59 = sadd.s32 %s58, 1
      %s60 = scalar_select %p57, %s58, %s59
      %p63 = pneg %p57
      %p64 = scmp.eq.s32.totalorder %s27, 3
      %p65 = por %p63, %p64
      %p66 = scmp.ne.s32.totalorder %s58, %s61
      %p67 = scmp.eq.s32.totalorder %s27, 0
      %p68 = por %p66, %p67
      %p69 = scmp.ne.s32.totalorder %s58, %s61
      %p70 = scmp.eq.s32.totalorder %s32, 3
      %p71 = por %p69, %p70
      %p72 = scmp.ne.s32.totalorder %s61, %s62
      %p73 = scmp.eq.s32.totalorder %s32, 0
      %p74 = por %p72, %p73
      %p75 = scmp.ne.s32.totalorder %s61, %s62
      %p76 = scmp.eq.s32.totalorder %s33, 3
      %p77 = por %p75, %p76
      %p79 = scmp.ne.s32.totalorder %s62, %s78
      %p80 = scmp.eq.s32.totalorder %s33, 0
      %p81 = por %p79, %p80
      %s82 = ssub.s32 %s36, %s45
      %s83 = ssub.s32 %s35, %s49
      %s84 = sor.u32 %s82, %s83
      %p85 = scmp.eq.s32.totalorder %s84, 0
      %s87 = sadd.s32 %s86, 1
      %s88 = scalar_select %p85, %s86, %s87
      %p91 = pneg %p85
      %p92 = scmp.eq.s32.totalorder %s27, 3
      %p93 = por %p91, %p92
      %p94 = scmp.ne.s32.totalorder %s86, %s89
      %p95 = scmp.eq.s32.totalorder %s27, 0
      %p96 = por %p94, %p95
      %p97 = scmp.ne.s32.totalorder %s86, %s89
      %p98 = scmp.eq.s32.totalorder %s32, 3
      %p99 = por %p97, %p98
      %p100 = scmp.ne.s32.totalorder %s89, %s90
      %p101 = scmp.eq.s32.totalorder %s32, 0
      %p102 = por %p100, %p101
      %p103 = scmp.ne.s32.totalorder %s89, %s90
      %p104 = scmp.eq.s32.totalorder %s33, 3
      %p105 = por %p103, %p104
      %p107 = scmp.ne.s32.totalorder %s90, %s106
      %p108 = scmp.eq.s32.totalorder %s33, 0
      %p109 = por %p107, %p108
      %s110 = ssub.s32 %s36, %s45
      %s111 = ssub.s32 %s35, %s49
      %s112 = sor.u32 %s110, %s111
      %p113 = scmp.eq.s32.totalorder %s112, 0
      %s115 = sadd.s32 %s114, 1
      %s116 = scalar_select %p113, %s114, %s115
      %p119 = pneg %p113
      %p120 = scmp.eq.s32.totalorder %s27, 3
      %p121 = por %p119, %p120
      %p122 = scmp.ne.s32.totalorder %s114, %s117
      %p123 = scmp.eq.s32.totalorder %s27, 0
      %p124 = por %p122, %p123
      %p125 = scmp.ne.s32.totalorder %s114, %s117
      %p126 = scmp.eq.s32.totalorder %s32, 3
      %p127 = por %p125, %p126
      %p128 = scmp.ne.s32.totalorder %s117, %s118
      %p129 = scmp.eq.s32.totalorder %s32, 0
      %p130 = por %p128, %p129
      %p131 = scmp.ne.s32.totalorder %s117, %s118
      %p132 = scmp.eq.s32.totalorder %s33, 3
      %p133 = por %p131, %p132
      %p135 = scmp.ne.s32.totalorder %s118, %s134
      %p136 = scmp.eq.s32.totalorder %s33, 0
      %p137 = por %p135, %p136
      %s138 = ssub.s32 %s36, %s45
      %s139 = ssub.s32 %s35, %s49
      %s140 = sor.u32 %s138, %s139
      %p141 = scmp.eq.s32.totalorder %s140, 0
      %s143 = sadd.s32 %s142, 1
      %s144 = scalar_select %p141, %s142, %s143
      %p147 = pneg %p141
      %p148 = scmp.eq.s32.totalorder %s27, 3
      %p149 = por %p147, %p148
      %p150 = scmp.ne.s32.totalorder %s142, %s145
      %p151 = scmp.eq.s32.totalorder %s27, 0
      %p152 = por %p150, %p151
      %p153 = scmp.ne.s32.totalorder %s142, %s145
      %p154 = scmp.eq.s32.totalorder %s32, 3
      %p155 = por %p153, %p154
      %p156 = scmp.ne.s32.totalorder %s145, %s146
      %p157 = scmp.eq.s32.totalorder %s32, 0
      %p158 = por %p156, %p157
      %p159 = scmp.ne.s32.totalorder %s145, %s146
      %p160 = scmp.eq.s32.totalorder %s33, 3
      %p161 = por %p159, %p160
      %p163 = scmp.ne.s32.totalorder %s146, %s162
      %p164 = scmp.eq.s32.totalorder %s33, 0
      %p165 = por %p163, %p164
      %s166 = ssub.s32 %s35, %s49
      %p167 = scmp.eq.s32.totalorder %s166, 0
      %s169 = sadd.s32 %s168, 1
      %s170 = scalar_select %p167, %s168, %s169
      %p173 = pneg %p167
      %p174 = scmp.eq.s32.totalorder %s27, 3
      %p175 = por %p173, %p174
      %p176 = scmp.ne.s32.totalorder %s168, %s171
      %p177 = scmp.eq.s32.totalorder %s27, 0
      %p178 = por %p176, %p177
      %p179 = scmp.ne.s32.totalorder %s168, %s171
      %p180 = scmp.eq.s32.totalorder %s32, 3
      %p181 = por %p179, %p180
      %p182 = scmp.ne.s32.totalorder %s171, %s172
      %p183 = scmp.eq.s32.totalorder %s32, 0
      %p184 = por %p182, %p183
      %p185 = scmp.ne.s32.totalorder %s171, %s172
      %p186 = scmp.eq.s32.totalorder %s33, 3
      %p187 = por %p185, %p186
      %p189 = scmp.ne.s32.totalorder %s172, %s188
      %p190 = scmp.eq.s32.totalorder %s33, 0
      %p191 = por %p189, %p190
      %s192 = ssub.s32 %s35, %s49
      %p193 = scmp.eq.s32.totalorder %s192, 0
      %s195 = sadd.s32 %s194, 1
      %s196 = scalar_select %p193, %s194, %s195
      %p199 = pneg %p193
      %p200 = scmp.eq.s32.totalorder %s27, 3
      %p201 = por %p199, %p200
      %p202 = scmp.ne.s32.totalorder %s194, %s197
      %p203 = scmp.eq.s32.totalorder %s27, 0
      %p204 = por %p202, %p203
      %p205 = scmp.ne.s32.totalorder %s194, %s197
      %p206 = scmp.eq.s32.totalorder %s32, 3
      %p207 = por %p205, %p206
      %p208 = scmp.ne.s32.totalorder %s197, %s198
      %p209 = scmp.eq.s32.totalorder %s32, 0
      %p210 = por %p208, %p209
      %p211 = scmp.ne.s32.totalorder %s197, %s198
      %p212 = scmp.eq.s32.totalorder %s33, 3
      %p213 = por %p211, %p212
      %p215 = scmp.ne.s32.totalorder %s198, %s214
      %p216 = scmp.eq.s32.totalorder %s33, 0
      %p217 = por %p215, %p216
      %s218 = ssub.s32 %s34, %s53
      %s219 = ssub.s32 %s35, %s49
      %s220 = sor.u32 %s218, %s219
      %p221 = scmp.eq.s32.totalorder %s220, 0
      %s223 = sadd.s32 %s222, 1
      %s224 = scalar_select %p221, %s222, %s223
      %p227 = pneg %p221
      %p228 = scmp.eq.s32.totalorder %s27, 3
      %p229 = por %p227, %p228
      %p230 = scmp.ne.s32.totalorder %s222, %s225
      %p231 = scmp.eq.s32.totalorder %s27, 0
      %p232 = por %p230, %p231
      %p233 = scmp.ne.s32.totalorder %s222, %s225
      %p234 = scmp.eq.s32.totalorder %s32, 3
      %p235 = por %p233, %p234
      %p236 = scmp.ne.s32.totalorder %s225, %s226
      %p237 = scmp.eq.s32.totalorder %s32, 0
      %p238 = por %p236, %p237
      %p239 = scmp.ne.s32.totalorder %s225, %s226
      %p240 = scmp.eq.s32.totalorder %s33, 3
      %p241 = por %p239, %p240
      %p243 = scmp.ne.s32.totalorder %s226, %s242
      %p244 = scmp.eq.s32.totalorder %s33, 0
      %p245 = por %p243, %p244
      %s246 = ssub.s32 %s34, %s53
      %s247 = ssub.s32 %s35, %s49
      %s248 = sor.u32 %s246, %s247
      %p249 = scmp.eq.s32.totalorder %s248, 0
      %s251 = sadd.s32 %s250, 1
      %s252 = scalar_select %p249, %s250, %s251
      %p255 = pneg %p249
      %p256 = scmp.eq.s32.totalorder %s27, 3
      %p257 = por %p255, %p256
      %p258 = scmp.ne.s32.totalorder %s250, %s253
      %p259 = scmp.eq.s32.totalorder %s27, 0
      %p260 = por %p258, %p259
      %p261 = scmp.ne.s32.totalorder %s250, %s253
      %p262 = scmp.eq.s32.totalorder %s32, 3
      %p263 = por %p261, %p262
      %p264 = scmp.ne.s32.totalorder %s253, %s254
      %p265 = scmp.eq.s32.totalorder %s32, 0
      %p266 = por %p264, %p265
      %p267 = scmp.ne.s32.totalorder %s253, %s254
      %p268 = scmp.eq.s32.totalorder %s33, 3
      %p269 = por %p267, %p268
      %p271 = scmp.ne.s32.totalorder %s254, %s270
      %p272 = scmp.eq.s32.totalorder %s33, 0
      %p273 = por %p271, %p272
      %p274 = scmp.le.s32.totalorder 1, %s27
      %p275 = scmp.lt.s32.totalorder %s27, 5
      %p276 = pnand %p274, %p275
      %p277 = pneg %p276
      // Predicated region
      $region9: #{tpu_custom_call.1} parent=5 // pred_check
        _
      $region10: #{tpu_custom_call.1} parent=5 // pred_check_branch
        %279 = sbr.rel (%p276) target = $region12
      $region11: #{tpu_custom_call.1} parent=5 // pred_region
        %s280 = ssub.s32 %s27, 1
      $region12: #{tpu_custom_call.1} parent=5 // pred_fallthru
        _
      %p281 = scmp.lt.s32.totalorder %s27, 4
      // Predicated region
      $region13: #{tpu_custom_call.1} parent=5 // pred_check
        %p282 = pneg %p281
      $region14: #{tpu_custom_call.1} parent=5 // pred_check_branch
        %284 = sbr.rel (%p282) target = $region16
      $region15: #{tpu_custom_call.1} parent=5 // pred_region
        // Predicated region
        $region17: #{tpu_custom_call.1} parent=15 // pred_check
          %p285 = pneg %p68
        $region18: #{tpu_custom_call.1} parent=15 // pred_check_branch
          %287 = sbr.rel (%p285) target = $region20
        $region19: #{tpu_custom_call.1} parent=15 // pred_region
          %s288 = sand.u32 %s58, 1
          %s289 = scalar_lea.sflag [#allocation7], %s288
          %s290 = sand.u32 %s58, 1
          %s291 = smul.addr %s290, 16
          %s292 = scalar_lea.vmem [#allocation6], %s291
          %s293 = smul.u32 2, %s36
          %s295 = ssub.s32 256, 256
          %296 = vsyncadd %s289, %s295
          %s297 = smul.addr %s34, 4
          %s298 = sadd.s32 %s293, %s297
          %s299 = smul.addr %s298, 128
          %s300 = scalar_lea.hbm %s1, %s299
          %s302 = sshll.u32 %s292, 4
          %s303 = int_to_ptr.vmem [resolvable:$true] %s302
          %305 = dma.hbm_to_vmem [thread:$0]  %s300, 256, %s303, %s289
        $region20: #{tpu_custom_call.1} parent=15 // pred_fallthru
          _
        // Predicated region
        $region21: #{tpu_custom_call.1} parent=15 // pred_check
          %p306 = pneg %p96
        $region22: #{tpu_custom_call.1} parent=15 // pred_check_branch
          %308 = sbr.rel (%p306) target = $region24
        $region23: #{tpu_custom_call.1} parent=15 // pred_region
          #allocation16 [shape = 'u32[6]{0}', space=smem, size = 0x18, scoped, tag = 'DMA stride descriptor']
          %s309 = sand.u32 %s27, 1
          %s310 = scalar_lea.sflag [#allocation10], %s309
          %s311 = sand.u32 %s86, 1
          %s312 = smul.addr %s311, 256
          %s313 = scalar_lea.vmem [#allocation9], %s312
          %s314 = smul.u32 32, %s36
          %s316 = ssub.s32 4096, 4096
          %317 = vsyncadd %s310, %s316
          %s318 = smul.addr %s314, 2
          %s319 = sadd.s32 %s35, %s318
          %s320 = smul.addr %s319, 64
          %s321 = scalar_lea.hbm %s2, %s320
          %s323 = sshll.u32 1, 14
          %s324 = sxor.u32 4294967295, %s323
          %s326 = sld [smem:[#allocation0]]
          %s327 = sadd.s32 2, %s326
          %s329 = sshll.u32 7, 26
          %s330 = sxor.u32 4294967295, %s329
          %s331 = sand.u32 0, %s330
          %s332 = sshll.u32 %s327, 26
          %s333 = sor.u32 %s331, %s332
          %s334 = sshll.u32 %s313, 4
          %s335 = int_to_ptr.vmem [resolvable:$true] %s334
          %341 = sst [smem:[#allocation16]] 8192
          %s342 = scalar_lea.smem [#allocation16], 1
          %343 = sst [smem:[%s342]] 2048
          %s344 = scalar_lea.smem [#allocation16], 2
          %345 = sst [smem:[%s344]] 32
          %s346 = scalar_lea.smem [#allocation16], 3
          %347 = sst [smem:[%s346]] 128
          %s348 = scalar_lea.smem [#allocation16], 4
          %349 = sst [smem:[%s348]] 64
          %s350 = scalar_lea.smem [#allocation16], 5
          %351 = sst [smem:[%s350]] 4
          %353 = dma.general %s321, 4096, %s335, %s310, [#allocation15], [#allocation16], %s333, 0
        $region24: #{tpu_custom_call.1} parent=15 // pred_fallthru
          _
        // Predicated region
        $region25: #{tpu_custom_call.1} parent=15 // pred_check
          %p354 = pneg %p124
        $region26: #{tpu_custom_call.1} parent=15 // pred_check_branch
          %356 = sbr.rel (%p354) target = $region28
        $region27: #{tpu_custom_call.1} parent=15 // pred_region
          #allocation18 [shape = 'u32[6]{0}', space=smem, size = 0x18, scoped, tag = 'DMA stride descriptor']
          %s357 = sand.u32 %s27, 1
          %s358 = scalar_lea.sflag [#allocation10], %s357
          %s359 = sand.u32 %s114, 1
          %s360 = smul.addr %s359, 256
          %s361 = scalar_lea.vmem [#allocation11], %s360
          %s362 = smul.u32 32, %s36
          %s364 = ssub.s32 4096, 4096
          %365 = vsyncadd %s358, %s364
          %s366 = smul.addr %s362, 2
          %s367 = sadd.s32 %s35, %s366
          %s368 = smul.addr %s367, 64
          %s369 = scalar_lea.hbm %s3, %s368
          %s371 = sshll.u32 1, 14
          %s372 = sxor.u32 4294967295, %s371
          %s374 = sld [smem:[#allocation0]]
          %s375 = sadd.s32 2, %s374
          %s377 = sshll.u32 7, 26
          %s378 = sxor.u32 4294967295, %s377
          %s379 = sand.u32 0, %s378
          %s380 = sshll.u32 %s375, 26
          %s381 = sor.u32 %s379, %s380
          %s382 = sshll.u32 %s361, 4
          %s383 = int_to_ptr.vmem [resolvable:$true] %s382
          %389 = sst [smem:[#allocation18]] 8192
          %s390 = scalar_lea.smem [#allocation18], 1
          %391 = sst [smem:[%s390]] 2048
          %s392 = scalar_lea.smem [#allocation18], 2
          %393 = sst [smem:[%s392]] 32
          %s394 = scalar_lea.smem [#allocation18], 3
          %395 = sst [smem:[%s394]] 128
          %s396 = scalar_lea.smem [#allocation18], 4
          %397 = sst [smem:[%s396]] 64
          %s398 = scalar_lea.smem [#allocation18], 5
          %399 = sst [smem:[%s398]] 4
          %401 = dma.general %s369, 4096, %s383, %s358, [#allocation17], [#allocation18], %s381, 0
        $region28: #{tpu_custom_call.1} parent=15 // pred_fallthru
          _
        // Predicated region
        $region29: #{tpu_custom_call.1} parent=15 // pred_check
          %p402 = pneg %p152
        $region30: #{tpu_custom_call.1} parent=15 // pred_check_branch
          %404 = sbr.rel (%p402) target = $region32
        $region31: #{tpu_custom_call.1} parent=15 // pred_region
          #allocation20 [shape = 'u32[6]{0}', space=smem, size = 0x18, scoped, tag = 'DMA stride descriptor']
          %s405 = sand.u32 %s142, 1
          %s406 = scalar_lea.sflag [#allocation13], %s405
          %s407 = sand.u32 %s142, 1
          %s408 = smul.addr %s407, 256
          %s409 = scalar_lea.vmem [#allocation12], %s408
          %s410 = smul.u32 32, %s36
          %s412 = ssub.s32 4096, 4096
          %413 = vsyncadd %s406, %s412
          %s414 = smul.addr %s410, 2
          %s415 = sadd.s32 %s35, %s414
          %s416 = smul.addr %s415, 64
          %s417 = scalar_lea.hbm %s4, %s416
          %s419 = sshll.u32 1, 14
          %s420 = sxor.u32 4294967295, %s419
          %s422 = sld [smem:[#allocation0]]
          %s423 = sadd.s32 2, %s422
          %s425 = sshll.u32 7, 26
          %s426 = sxor.u32 4294967295, %s425
          %s427 = sand.u32 0, %s426
          %s428 = sshll.u32 %s423, 26
          %s429 = sor.u32 %s427, %s428
          %s430 = sshll.u32 %s409, 4
          %s431 = int_to_ptr.vmem [resolvable:$true] %s430
          %437 = sst [smem:[#allocation20]] 8192
          %s438 = scalar_lea.smem [#allocation20], 1
          %439 = sst [smem:[%s438]] 2048
          %s440 = scalar_lea.smem [#allocation20], 2
          %441 = sst [smem:[%s440]] 32
          %s442 = scalar_lea.smem [#allocation20], 3
          %443 = sst [smem:[%s442]] 128
          %s444 = scalar_lea.smem [#allocation20], 4
          %445 = sst [smem:[%s444]] 64
          %s446 = scalar_lea.smem [#allocation20], 5
          %447 = sst [smem:[%s446]] 4
          %449 = dma.general %s417, 4096, %s431, %s406, [#allocation19], [#allocation20], %s429, 0
        $region32: #{tpu_custom_call.1} parent=15 // pred_fallthru
          _
        // Predicated region
        $region33: #{tpu_custom_call.1} parent=15 // pred_check
          %p450 = pneg %p178
        $region34: #{tpu_custom_call.1} parent=15 // pred_check_branch
          %452 = sbr.rel (%p450) target = $region36
        $region35: #{tpu_custom_call.1} parent=15 // pred_region
          %p453 = scmp.lt.s32.totalorder %s35, 1
          %s454 = scalar_select %p453, %s35, 1
          %s455 = scalar_lea.vmem %s5, %s454
        $region36: #{tpu_custom_call.1} parent=15 // pred_fallthru
          _
        // Predicated region
        $region37: #{tpu_custom_call.1} parent=15 // pred_check
          %p456 = pneg %p204
        $region38: #{tpu_custom_call.1} parent=15 // pred_check_branch
          %458 = sbr.rel (%p456) target = $region40
        $region39: #{tpu_custom_call.1} parent=15 // pred_region
          %p459 = scmp.lt.s32.totalorder %s35, 1
          %s460 = scalar_select %p459, %s35, 1
          %s461 = scalar_lea.vmem %s6, %s460
        $region40: #{tpu_custom_call.1} parent=15 // pred_fallthru
          _
        // Predicated region
        $region41: #{tpu_custom_call.1} parent=15 // pred_check
          %p462 = pneg %p232
        $region42: #{tpu_custom_call.1} parent=15 // pred_check_branch
          %464 = sbr.rel (%p462) target = $region44
        $region43: #{tpu_custom_call.1} parent=15 // pred_region
          %p465 = scmp.lt.s32.totalorder %s34, 0
          %s466 = scalar_select %p465, %s34, 0
          %p467 = scmp.lt.s32.totalorder %s35, 1
          %s468 = scalar_select %p467, %s35, 1
          %s469 = smul.addr %s466, 2
          %s470 = sadd.s32 %s468, %s469
          %s471 = smul.addr %s470, 8
          %s472 = scalar_lea.vmem %s7, %s471
        $region44: #{tpu_custom_call.1} parent=15 // pred_fallthru
          _
      $region16: #{tpu_custom_call.1} parent=5 // pred_fallthru
        _
      %p473 = scmp.le.s32.totalorder 1, %s27
      %p474 = scmp.lt.s32.totalorder %s27, 5
      %p475 = pnand %p473, %p474
      %p476 = pneg %p475
      // Predicated region
      $region45: #{tpu_custom_call.1} parent=5 // pred_check
        _
      $region46: #{tpu_custom_call.1} parent=5 // pred_check_branch
        %478 = sbr.rel (%p475) target = $region48
      $region47: #{tpu_custom_call.1} parent=5 // pred_region
        %s479 = ssub.s32 %s27, 1
        %s480 = sand.u32 %s61, 1
        %s481 = scalar_lea.sflag [#allocation7], %s480
        %s482 = sand.u32 %s61, 1
        %s483 = smul.addr %s482, 16
        %s484 = scalar_lea.vmem [#allocation6], %s483
        // Predicated region
        $region49: #{tpu_custom_call.1} parent=47 // pred_check
          %p485 = pneg %p74
        $region50: #{tpu_custom_call.1} parent=47 // pred_check_branch
          %487 = sbr.rel (%p485) target = $region52
        $region51: #{tpu_custom_call.1} parent=47 // pred_region
          %488 = dma.done %s481, 256
        $region52: #{tpu_custom_call.1} parent=47 // pred_fallthru
          _
        %s489 = sand.u32 %s32, 1
        %s490 = scalar_lea.sflag [#allocation10], %s489
        %s491 = sand.u32 %s89, 1
        %s492 = smul.addr %s491, 256
        %s493 = scalar_lea.vmem [#allocation9], %s492
        // Predicated region
        $region53: #{tpu_custom_call.1} parent=47 // pred_check
          %p494 = pneg %p102
        $region54: #{tpu_custom_call.1} parent=47 // pred_check_branch
          %496 = sbr.rel (%p494) target = $region56
        $region55: #{tpu_custom_call.1} parent=47 // pred_region
          %497 = dma.done %s490, 4096
        $region56: #{tpu_custom_call.1} parent=47 // pred_fallthru
          _
        %s498 = sand.u32 %s32, 1
        %s499 = scalar_lea.sflag [#allocation10], %s498
        %s500 = sand.u32 %s117, 1
        %s501 = smul.addr %s500, 256
        %s502 = scalar_lea.vmem [#allocation11], %s501
        // Predicated region
        $region57: #{tpu_custom_call.1} parent=47 // pred_check
          %p503 = pneg %p130
        $region58: #{tpu_custom_call.1} parent=47 // pred_check_branch
          %505 = sbr.rel (%p503) target = $region60
        $region59: #{tpu_custom_call.1} parent=47 // pred_region
          %506 = dma.done %s499, 4096
        $region60: #{tpu_custom_call.1} parent=47 // pred_fallthru
          _
        %s507 = sand.u32 %s145, 1
        %s508 = scalar_lea.sflag [#allocation13], %s507
        %s509 = sand.u32 %s145, 1
        %s510 = smul.addr %s509, 256
        %s511 = scalar_lea.vmem [#allocation12], %s510
        // Predicated region
        $region61: #{tpu_custom_call.1} parent=47 // pred_check
          %p512 = pneg %p158
        $region62: #{tpu_custom_call.1} parent=47 // pred_check_branch
          %514 = sbr.rel (%p512) target = $region64
        $region63: #{tpu_custom_call.1} parent=47 // pred_region
          %515 = dma.done %s508, 4096
        $region64: #{tpu_custom_call.1} parent=47 // pred_fallthru
          _
        %s516 = sand.u32 %s61, 1
        %s517 = scalar_lea.sflag [#allocation7], %s516
        %s518 = sand.u32 %s61, 1
        %s519 = smul.addr %s518, 16
        %s520 = scalar_lea.vmem [#allocation6], %s519
        %p521 = pneg %p74
        %p522 = pneg %p71
        %s523 = sand.u32 %s32, 1
        %s524 = scalar_lea.sflag [#allocation10], %s523
        %s525 = sand.u32 %s89, 1
        %s526 = smul.addr %s525, 256
        %s527 = scalar_lea.vmem [#allocation9], %s526
        %p528 = pneg %p102
        %p529 = pneg %p99
        %s530 = sand.u32 %s32, 1
        %s531 = scalar_lea.sflag [#allocation10], %s530
        %s532 = sand.u32 %s117, 1
        %s533 = smul.addr %s532, 256
        %s534 = scalar_lea.vmem [#allocation11], %s533
        %p535 = pneg %p130
        %p536 = pneg %p127
        %s537 = sand.u32 %s145, 1
        %s538 = scalar_lea.sflag [#allocation13], %s537
        %s539 = sand.u32 %s145, 1
        %s540 = smul.addr %s539, 256
        %s541 = scalar_lea.vmem [#allocation12], %s540
        %p542 = pneg %p158
        %p543 = pneg %p155
        %p544 = scmp.lt.s32.totalorder %s38, 1
        %s545 = scalar_select %p544, %s38, 1
        %s546 = scalar_lea.vmem %s5, %s545
        %p547 = pneg %p184
        %p548 = pneg %p181
        %p549 = scmp.lt.s32.totalorder %s38, 1
        %s550 = scalar_select %p549, %s38, 1
        %s551 = scalar_lea.vmem %s6, %s550
        %p552 = pneg %p210
        %p553 = pneg %p207
        %p554 = scmp.lt.s32.totalorder %s37, 0
        %s555 = scalar_select %p554, %s37, 0
        %p556 = scmp.lt.s32.totalorder %s38, 1
        %s557 = scalar_select %p556, %s38, 1
        %s558 = smul.addr %s555, 2
        %s559 = sadd.s32 %s557, %s558
        %s560 = smul.addr %s559, 8
        %s561 = scalar_lea.vmem %s7, %s560
        %p562 = pneg %p238
        %p563 = pneg %p235
        %p564 = pneg %p266
        %p565 = pneg %p263
        %s566 = sand.u32 %s253, 1
        %s567 = scalar_lea.sflag [#allocation8], %s566
        %s568 = sand.u32 %s253, 1
        %s569 = smul.addr %s568, 8
        %s570 = scalar_lea.vmem [#allocation14], %s569
        %s571 = smul.u32 2, %s39
        %s572 = smul.u32 32, %s39
        %s573 = smul.u32 32, %s39
        %s574 = smul.u32 32, %s39
        %p575 = scmp.lt.s32.totalorder %s38, 1
        %s576 = scalar_select %p575, %s38, 1
        %s577 = scalar_lea.vmem %s5, %s576
        %p578 = scmp.lt.s32.totalorder %s38, 1
        %s579 = scalar_select %p578, %s38, 1
        %s580 = scalar_lea.vmem %s6, %s579
        %p581 = scmp.lt.s32.totalorder %s37, 0
        %s582 = scalar_select %p581, %s37, 0
        %p583 = scmp.lt.s32.totalorder %s38, 1
        %s584 = scalar_select %p583, %s38, 1
        %s585 = smul.addr %s582, 2
        %s586 = sadd.s32 %s584, %s585
        %s587 = smul.addr %s586, 8
        %s588 = scalar_lea.vmem %s7, %s587
        %p590 = scmp.eq.s32.totalorder %s39, 0
        // Predicated region
        $region65: #{tpu_custom_call.1} parent=47 // pred_check
          %p591 = pneg %p590
        $region66: #{tpu_custom_call.1} parent=47 // pred_check_branch
          %593 = sbr.rel (%p591) target = $region68
        $region67: #{tpu_custom_call.1} parent=47 // pred_region
          %594 = vst [vmem:[#allocation2] sm:$0xff] 0.0
          %595 = vst [vmem:[#allocation3] sm:$0xff] 0.0
        $region68: #{tpu_custom_call.1} parent=47 // pred_fallthru
          _
        %v596 = vld [vmem:[%s511] sm:$0xf]
        %v597 = vld [vmem:[%s511 + $0x4] sm:$0xf]
        %v598 = vld [vmem:[%s511 + $0x8] sm:$0xf]
        %v599 = vld [vmem:[%s511 + $0xc] sm:$0xf]
        %v600 = vld [vmem:[%s511 + $0x10] sm:$0xf]
        %v601 = vld [vmem:[%s511 + $0x14] sm:$0xf]
        %v602 = vld [vmem:[%s511 + $0x18] sm:$0xf]
        %v603 = vld [vmem:[%s511 + $0x1c] sm:$0xf]
        %v604 = vld [vmem:[%s511 + $0x20] sm:$0xf]
        %v605 = vld [vmem:[%s511 + $0x24] sm:$0xf]
        %v606 = vld [vmem:[%s511 + $0x28] sm:$0xf]
        %v607 = vld [vmem:[%s511 + $0x2c] sm:$0xf]
        %v608 = vld [vmem:[%s511 + $0x30] sm:$0xf]
        %v609 = vld [vmem:[%s511 + $0x34] sm:$0xf]
        %v610 = vld [vmem:[%s511 + $0x38] sm:$0xf]
        %v611 = vld [vmem:[%s511 + $0x3c] sm:$0xf]
        %v612 = vld [vmem:[%s511 + $0x40] sm:$0xf]
        %v613 = vld [vmem:[%s511 + $0x44] sm:$0xf]
        %v614 = vld [vmem:[%s511 + $0x48] sm:$0xf]
        %v615 = vld [vmem:[%s511 + $0x4c] sm:$0xf]
        %v616 = vld [vmem:[%s511 + $0x50] sm:$0xf]
        %v617 = vld [vmem:[%s511 + $0x54] sm:$0xf]
        %v618 = vld [vmem:[%s511 + $0x58] sm:$0xf]
        %v619 = vld [vmem:[%s511 + $0x5c] sm:$0xf]
        %v620 = vld [vmem:[%s511 + $0x60] sm:$0xf]
        %v621 = vld [vmem:[%s511 + $0x64] sm:$0xf]
        %v622 = vld [vmem:[%s511 + $0x68] sm:$0xf]
        %v623 = vld [vmem:[%s511 + $0x6c] sm:$0xf]
        %v624 = vld [vmem:[%s511 + $0x70] sm:$0xf]
        %v625 = vld [vmem:[%s511 + $0x74] sm:$0xf]
        %v626 = vld [vmem:[%s511 + $0x78] sm:$0xf]
        %v627 = vld [vmem:[%s511 + $0x7c] sm:$0xf]
        %v628 = vld [vmem:[%s511 + $0x80] sm:$0xf]
        %v629 = vld [vmem:[%s511 + $0x84] sm:$0xf]
        %v630 = vld [vmem:[%s511 + $0x88] sm:$0xf]
        %v631 = vld [vmem:[%s511 + $0x8c] sm:$0xf]
        %v632 = vld [vmem:[%s511 + $0x90] sm:$0xf]
        %v633 = vld [vmem:[%s511 + $0x94] sm:$0xf]
        %v634 = vld [vmem:[%s511 + $0x98] sm:$0xf]
        %v635 = vld [vmem:[%s511 + $0x9c] sm:$0xf]
        %v636 = vld [vmem:[%s511 + $0xa0] sm:$0xf]
        %v637 = vld [vmem:[%s511 + $0xa4] sm:$0xf]
        %v638 = vld [vmem:[%s511 + $0xa8] sm:$0xf]
        %v639 = vld [vmem:[%s511 + $0xac] sm:$0xf]
        %v640 = vld [vmem:[%s511 + $0xb0] sm:$0xf]
        %v641 = vld [vmem:[%s511 + $0xb4] sm:$0xf]
        %v642 = vld [vmem:[%s511 + $0xb8] sm:$0xf]
        %v643 = vld [vmem:[%s511 + $0xbc] sm:$0xf]
        %v644 = vld [vmem:[%s511 + $0xc0] sm:$0xf]
        %v645 = vld [vmem:[%s511 + $0xc4] sm:$0xf]
        %v646 = vld [vmem:[%s511 + $0xc8] sm:$0xf]
        %v647 = vld [vmem:[%s511 + $0xcc] sm:$0xf]
        %v648 = vld [vmem:[%s511 + $0xd0] sm:$0xf]
        %v649 = vld [vmem:[%s511 + $0xd4] sm:$0xf]
        %v650 = vld [vmem:[%s511 + $0xd8] sm:$0xf]
        %v651 = vld [vmem:[%s511 + $0xdc] sm:$0xf]
        %v652 = vld [vmem:[%s511 + $0xe0] sm:$0xf]
        %v653 = vld [vmem:[%s511 + $0xe4] sm:$0xf]
        %v654 = vld [vmem:[%s511 + $0xe8] sm:$0xf]
        %v655 = vld [vmem:[%s511 + $0xec] sm:$0xf]
        %v656 = vld [vmem:[%s511 + $0xf0] sm:$0xf]
        %v657 = vld [vmem:[%s511 + $0xf4] sm:$0xf]
        %v658 = vld [vmem:[%s511 + $0xf8] sm:$0xf]
        %v659 = vld [vmem:[%s511 + $0xfc] sm:$0xf]
        %v660 = vunpack.c.l.bf16 %v596
        %v661 = vunpack.c.l.bf16 %v597
        %v662 = vunpack.c.l.bf16 %v598
        %v663 = vunpack.c.l.bf16 %v599
        %v664 = vunpack.c.l.bf16 %v600
        %v665 = vunpack.c.l.bf16 %v601
        %v666 = vunpack.c.l.bf16 %v602
        %v667 = vunpack.c.l.bf16 %v603
        %v668 = vunpack.c.l.bf16 %v604
        %v669 = vunpack.c.l.bf16 %v605
        %v670 = vunpack.c.l.bf16 %v606
        %v671 = vunpack.c.l.bf16 %v607
        %v672 = vunpack.c.l.bf16 %v608
        %v673 = vunpack.c.l.bf16 %v609
        %v674 = vunpack.c.l.bf16 %v610
        %v675 = vunpack.c.l.bf16 %v611
        %v676 = vunpack.c.l.bf16 %v612
        %v677 = vunpack.c.l.bf16 %v613
        %v678 = vunpack.c.l.bf16 %v614
        %v679 = vunpack.c.l.bf16 %v615
        %v680 = vunpack.c.l.bf16 %v616
        %v681 = vunpack.c.l.bf16 %v617
        %v682 = vunpack.c.l.bf16 %v618
        %v683 = vunpack.c.l.bf16 %v619
        %v684 = vunpack.c.l.bf16 %v620
        %v685 = vunpack.c.l.bf16 %v621
        %v686 = vunpack.c.l.bf16 %v622
        %v687 = vunpack.c.l.bf16 %v623
        %v688 = vunpack.c.l.bf16 %v624
        %v689 = vunpack.c.l.bf16 %v625
        %v690 = vunpack.c.l.bf16 %v626
        %v691 = vunpack.c.l.bf16 %v627
        %v692 = vunpack.c.l.bf16 %v628
        %v693 = vunpack.c.l.bf16 %v629
        %v694 = vunpack.c.l.bf16 %v630
        %v695 = vunpack.c.l.bf16 %v631
        %v696 = vunpack.c.l.bf16 %v632
        %v697 = vunpack.c.l.bf16 %v633
        %v698 = vunpack.c.l.bf16 %v634
        %v699 = vunpack.c.l.bf16 %v635
        %v700 = vunpack.c.l.bf16 %v636
        %v701 = vunpack.c.l.bf16 %v637
        %v702 = vunpack.c.l.bf16 %v638
        %v703 = vunpack.c.l.bf16 %v639
        %v704 = vunpack.c.l.bf16 %v640
        %v705 = vunpack.c.l.bf16 %v641
        %v706 = vunpack.c.l.bf16 %v642
        %v707 = vunpack.c.l.bf16 %v643
        %v708 = vunpack.c.l.bf16 %v644
        %v709 = vunpack.c.l.bf16 %v645
        %v710 = vunpack.c.l.bf16 %v646
        %v711 = vunpack.c.l.bf16 %v647
        %v712 = vunpack.c.l.bf16 %v648
        %v713 = vunpack.c.l.bf16 %v649
        %v714 = vunpack.c.l.bf16 %v650
        %v715 = vunpack.c.l.bf16 %v651
        %v716 = vunpack.c.l.bf16 %v652
        %v717 = vunpack.c.l.bf16 %v653
        %v718 = vunpack.c.l.bf16 %v654
        %v719 = vunpack.c.l.bf16 %v655
        %v720 = vunpack.c.l.bf16 %v656
        %v721 = vunpack.c.l.bf16 %v657
        %v722 = vunpack.c.l.bf16 %v658
        %v723 = vunpack.c.l.bf16 %v659
        %s724 = sld [smem:[#allocation5]]
        %s725 = smul.u32 %s39, 256
        %s726 = smul.u32 %s38, 128
        %v727 = vlaneseq
        %v728 = vshrl.u32 %v727, 7
        %v729 = vadd.s32 %v728, 8
        %v730 = vadd.s32 %v728, 16
        %v731 = vadd.s32 %v728, 24
        %v732 = vadd.s32 %v728, 32
        %v733 = vadd.s32 %v728, 40
        %v734 = vadd.s32 %v728, 48
        %v735 = vadd.s32 %v728, 56
        %v736 = vadd.s32 %v728, 64
        %v737 = vadd.s32 %v728, 72
        %v738 = vadd.s32 %v728, 80
        %v739 = vadd.s32 %v728, 88
        %v740 = vadd.s32 %v728, 96
        %v741 = vadd.s32 %v728, 104
        %v742 = vadd.s32 %v728, 112
        %v743 = vadd.s32 %v728, 120
        %v744 = vadd.s32 %v728, 128
        %v745 = vadd.s32 %v728, 136
        %v746 = vadd.s32 %v728, 144
        %v747 = vadd.s32 %v728, 152
        %v748 = vadd.s32 %v728, 160
        %v749 = vadd.s32 %v728, 168
        %v750 = vadd.s32 %v728, 176
        %v751 = vadd.s32 %v728, 184
        %v752 = vadd.s32 %v728, 192
        %v753 = vadd.s32 %v728, 200
        %v754 = vadd.s32 %v728, 208
        %v755 = vadd.s32 %v728, 216
        %v756 = vadd.s32 %v728, 224
        %v757 = vadd.s32 %v728, 232
        %v758 = vadd.s32 %v728, 240
        %v759 = vadd.s32 %v728, 248
        %v760 = vstv %s725
        %v761 = vadd.s32 %v728, %v760
        %v762 = vadd.s32 %v729, %v760
        %v763 = vadd.s32 %v730, %v760
        %v764 = vadd.s32 %v731, %v760
        %v765 = vadd.s32 %v732, %v760
        %v766 = vadd.s32 %v733, %v760
        %v767 = vadd.s32 %v734, %v760
        %v768 = vadd.s32 %v735, %v760
        %v769 = vadd.s32 %v736, %v760
        %v770 = vadd.s32 %v737, %v760
        %v771 = vadd.s32 %v738, %v760
        %v772 = vadd.s32 %v739, %v760
        %v773 = vadd.s32 %v740, %v760
        %v774 = vadd.s32 %v741, %v760
        %v775 = vadd.s32 %v742, %v760
        %v776 = vadd.s32 %v743, %v760
        %v777 = vadd.s32 %v744, %v760
        %v778 = vadd.s32 %v745, %v760
        %v779 = vadd.s32 %v746, %v760
        %v780 = vadd.s32 %v747, %v760
        %v781 = vadd.s32 %v748, %v760
        %v782 = vadd.s32 %v749, %v760
        %v783 = vadd.s32 %v750, %v760
        %v784 = vadd.s32 %v751, %v760
        %v785 = vadd.s32 %v752, %v760
        %v786 = vadd.s32 %v753, %v760
        %v787 = vadd.s32 %v754, %v760
        %v788 = vadd.s32 %v755, %v760
        %v789 = vadd.s32 %v756, %v760
        %v790 = vadd.s32 %v757, %v760
        %v791 = vadd.s32 %v758, %v760
        %v792 = vadd.s32 %v759, %v760
        %v793 = vlaneseq
        %v794 = vand.u32 %v793, 127
        %v795 = vstv %s726
        %v796 = vadd.s32 %v794, %v795
        %v797 = vadd.s32 %v761, 512
        %v798 = vadd.s32 %v762, 512
        %v799 = vadd.s32 %v763, 512
        %v800 = vadd.s32 %v764, 512
        %v801 = vadd.s32 %v765, 512
        %v802 = vadd.s32 %v766, 512
        %v803 = vadd.s32 %v767, 512
        %v804 = vadd.s32 %v768, 512
        %v805 = vadd.s32 %v769, 512
        %v806 = vadd.s32 %v770, 512
        %v807 = vadd.s32 %v771, 512
        %v808 = vadd.s32 %v772, 512
        %v809 = vadd.s32 %v773, 512
        %v810 = vadd.s32 %v774, 512
        %v811 = vadd.s32 %v775, 512
        %v812 = vadd.s32 %v776, 512
        %v813 = vadd.s32 %v777, 512
        %v814 = vadd.s32 %v778, 512
        %v815 = vadd.s32 %v779, 512
        %v816 = vadd.s32 %v780, 512
        %v817 = vadd.s32 %v781, 512
        %v818 = vadd.s32 %v782, 512
        %v819 = vadd.s32 %v783, 512
        %v820 = vadd.s32 %v784, 512
        %v821 = vadd.s32 %v785, 512
        %v822 = vadd.s32 %v786, 512
        %v823 = vadd.s32 %v787, 512
        %v824 = vadd.s32 %v788, 512
        %v825 = vadd.s32 %v789, 512
        %v826 = vadd.s32 %v790, 512
        %v827 = vadd.s32 %v791, 512
        %v828 = vadd.s32 %v792, 512
        %v829 = vmul.u32 %v761, 256
        %v830 = vmul.u32 %v762, 256
        %v831 = vmul.u32 %v763, 256
        %v832 = vmul.u32 %v764, 256
        %v833 = vmul.u32 %v765, 256
        %v834 = vmul.u32 %v766, 256
        %v835 = vmul.u32 %v767, 256
        %v836 = vmul.u32 %v768, 256
        %v837 = vmul.u32 %v769, 256
        %v838 = vmul.u32 %v770, 256
        %v839 = vmul.u32 %v771, 256
        %v840 = vmul.u32 %v772, 256
        %v841 = vmul.u32 %v773, 256
        %v842 = vmul.u32 %v774, 256
        %v843 = vmul.u32 %v775, 256
        %v844 = vmul.u32 %v776, 256
        %v845 = vmul.u32 %v777, 256
        %v846 = vmul.u32 %v778, 256
        %v847 = vmul.u32 %v779, 256
        %v848 = vmul.u32 %v780, 256
        %v849 = vmul.u32 %v781, 256
        %v850 = vmul.u32 %v782, 256
        %v851 = vmul.u32 %v783, 256
        %v852 = vmul.u32 %v784, 256
        %v853 = vmul.u32 %v785, 256
        %v854 = vmul.u32 %v786, 256
        %v855 = vmul.u32 %v787, 256
        %v856 = vmul.u32 %v788, 256
        %v857 = vmul.u32 %v789, 256
        %v858 = vmul.u32 %v790, 256
        %v859 = vmul.u32 %v791, 256
        %v860 = vmul.u32 %v792, 256
        %v861 = vmul.u32 %v797, 256
        %v862 = vmul.u32 %v798, 256
        %v863 = vmul.u32 %v799, 256
        %v864 = vmul.u32 %v800, 256
        %v865 = vmul.u32 %v801, 256
        %v866 = vmul.u32 %v802, 256
        %v867 = vmul.u32 %v803, 256
        %v868 = vmul.u32 %v804, 256
        %v869 = vmul.u32 %v805, 256
        %v870 = vmul.u32 %v806, 256
        %v871 = vmul.u32 %v807, 256
        %v872 = vmul.u32 %v808, 256
        %v873 = vmul.u32 %v809, 256
        %v874 = vmul.u32 %v810, 256
        %v875 = vmul.u32 %v811, 256
        %v876 = vmul.u32 %v812, 256
        %v877 = vmul.u32 %v813, 256
        %v878 = vmul.u32 %v814, 256
        %v879 = vmul.u32 %v815, 256
        %v880 = vmul.u32 %v816, 256
        %v881 = vmul.u32 %v817, 256
        %v882 = vmul.u32 %v818, 256
        %v883 = vmul.u32 %v819, 256
        %v884 = vmul.u32 %v820, 256
        %v885 = vmul.u32 %v821, 256
        %v886 = vmul.u32 %v822, 256
        %v887 = vmul.u32 %v823, 256
        %v888 = vmul.u32 %v824, 256
        %v889 = vmul.u32 %v825, 256
        %v890 = vmul.u32 %v826, 256
        %v891 = vmul.u32 %v827, 256
        %v892 = vmul.u32 %v828, 256
        %v893 = vadd.s32 %v829, %v796
        %v894 = vadd.s32 %v830, %v796
        %v895 = vadd.s32 %v831, %v796
        %v896 = vadd.s32 %v832, %v796
        %v897 = vadd.s32 %v833, %v796
        %v898 = vadd.s32 %v834, %v796
        %v899 = vadd.s32 %v835, %v796
        %v900 = vadd.s32 %v836, %v796
        %v901 = vadd.s32 %v837, %v796
        %v902 = vadd.s32 %v838, %v796
        %v903 = vadd.s32 %v839, %v796
        %v904 = vadd.s32 %v840, %v796
        %v905 = vadd.s32 %v841, %v796
        %v906 = vadd.s32 %v842, %v796
        %v907 = vadd.s32 %v843, %v796
        %v908 = vadd.s32 %v844, %v796
        %v909 = vadd.s32 %v845, %v796
        %v910 = vadd.s32 %v846, %v796
        %v911 = vadd.s32 %v847, %v796
        %v912 = vadd.s32 %v848, %v796
        %v913 = vadd.s32 %v849, %v796
        %v914 = vadd.s32 %v850, %v796
        %v915 = vadd.s32 %v851, %v796
        %v916 = vadd.s32 %v852, %v796
        %v917 = vadd.s32 %v853, %v796
        %v918 = vadd.s32 %v854, %v796
        %v919 = vadd.s32 %v855, %v796
        %v920 = vadd.s32 %v856, %v796
        %v921 = vadd.s32 %v857, %v796
        %v922 = vadd.s32 %v858, %v796
        %v923 = vadd.s32 %v859, %v796
        %v924 = vadd.s32 %v860, %v796
        %v925 = vadd.s32 %v861, %v796
        %v926 = vadd.s32 %v862, %v796
        %v927 = vadd.s32 %v863, %v796
        %v928 = vadd.s32 %v864, %v796
        %v929 = vadd.s32 %v865, %v796
        %v930 = vadd.s32 %v866, %v796
        %v931 = vadd.s32 %v867, %v796
        %v932 = vadd.s32 %v868, %v796
        %v933 = vadd.s32 %v869, %v796
        %v934 = vadd.s32 %v870, %v796
        %v935 = vadd.s32 %v871, %v796
        %v936 = vadd.s32 %v872, %v796
        %v937 = vadd.s32 %v873, %v796
        %v938 = vadd.s32 %v874, %v796
        %v939 = vadd.s32 %v875, %v796
        %v940 = vadd.s32 %v876, %v796
        %v941 = vadd.s32 %v877, %v796
        %v942 = vadd.s32 %v878, %v796
        %v943 = vadd.s32 %v879, %v796
        %v944 = vadd.s32 %v880, %v796
        %v945 = vadd.s32 %v881, %v796
        %v946 = vadd.s32 %v882, %v796
        %v947 = vadd.s32 %v883, %v796
        %v948 = vadd.s32 %v884, %v796
        %v949 = vadd.s32 %v885, %v796
        %v950 = vadd.s32 %v886, %v796
        %v951 = vadd.s32 %v887, %v796
        %v952 = vadd.s32 %v888, %v796
        %v953 = vadd.s32 %v889, %v796
        %v954 = vadd.s32 %v890, %v796
        %v955 = vadd.s32 %v891, %v796
        %v956 = vadd.s32 %v892, %v796
        %v957 = vmul.u32 %v893, 2654435761
        %v958 = vmul.u32 %v894, 2654435761
        %v959 = vmul.u32 %v895, 2654435761
        %v960 = vmul.u32 %v896, 2654435761
        %v961 = vmul.u32 %v897, 2654435761
        %v962 = vmul.u32 %v898, 2654435761
        %v963 = vmul.u32 %v899, 2654435761
        %v964 = vmul.u32 %v900, 2654435761
        %v965 = vmul.u32 %v901, 2654435761
        %v966 = vmul.u32 %v902, 2654435761
        %v967 = vmul.u32 %v903, 2654435761
        %v968 = vmul.u32 %v904, 2654435761
        %v969 = vmul.u32 %v905, 2654435761
        %v970 = vmul.u32 %v906, 2654435761
        %v971 = vmul.u32 %v907, 2654435761
        %v972 = vmul.u32 %v908, 2654435761
        %v973 = vmul.u32 %v909, 2654435761
        %v974 = vmul.u32 %v910, 2654435761
        %v975 = vmul.u32 %v911, 2654435761
        %v976 = vmul.u32 %v912, 2654435761
        %v977 = vmul.u32 %v913, 2654435761
        %v978 = vmul.u32 %v914, 2654435761
        %v979 = vmul.u32 %v915, 2654435761
        %v980 = vmul.u32 %v916, 2654435761
        %v981 = vmul.u32 %v917, 2654435761
        %v982 = vmul.u32 %v918, 2654435761
        %v983 = vmul.u32 %v919, 2654435761
        %v984 = vmul.u32 %v920, 2654435761
        %v985 = vmul.u32 %v921, 2654435761
        %v986 = vmul.u32 %v922, 2654435761
        %v987 = vmul.u32 %v923, 2654435761
        %v988 = vmul.u32 %v924, 2654435761
        %v989 = vmul.u32 %v925, 2654435761
        %v990 = vmul.u32 %v926, 2654435761
        %v991 = vmul.u32 %v927, 2654435761
        %v992 = vmul.u32 %v928, 2654435761
        %v993 = vmul.u32 %v929, 2654435761
        %v994 = vmul.u32 %v930, 2654435761
        %v995 = vmul.u32 %v931, 2654435761
        %v996 = vmul.u32 %v932, 2654435761
        %v997 = vmul.u32 %v933, 2654435761
        %v998 = vmul.u32 %v934, 2654435761
        %v999 = vmul.u32 %v935, 2654435761
        %v1000 = vmul.u32 %v936, 2654435761
        %v1001 = vmul.u32 %v937, 2654435761
        %v1002 = vmul.u32 %v938, 2654435761
        %v1003 = vmul.u32 %v939, 2654435761
        %v1004 = vmul.u32 %v940, 2654435761
        %v1005 = vmul.u32 %v941, 2654435761
        %v1006 = vmul.u32 %v942, 2654435761
        %v1007 = vmul.u32 %v943, 2654435761
        %v1008 = vmul.u32 %v944, 2654435761
        %v1009 = vmul.u32 %v945, 2654435761
        %v1010 = vmul.u32 %v946, 2654435761
        %v1011 = vmul.u32 %v947, 2654435761
        %v1012 = vmul.u32 %v948, 2654435761
        %v1013 = vmul.u32 %v949, 2654435761
        %v1014 = vmul.u32 %v950, 2654435761
        %v1015 = vmul.u32 %v951, 2654435761
        %v1016 = vmul.u32 %v952, 2654435761
        %v1017 = vmul.u32 %v953, 2654435761
        %v1018 = vmul.u32 %v954, 2654435761
        %v1019 = vmul.u32 %v955, 2654435761
        %v1020 = vmul.u32 %v956, 2654435761
        %v1021 = vstv %s724
        %v1022 = vadd.s32 %v957, %v1021
        %v1023 = vadd.s32 %v958, %v1021
        %v1024 = vadd.s32 %v959, %v1021
        %v1025 = vadd.s32 %v960, %v1021
        %v1026 = vadd.s32 %v961, %v1021
        %v1027 = vadd.s32 %v962, %v1021
        %v1028 = vadd.s32 %v963, %v1021
        %v1029 = vadd.s32 %v964, %v1021
        %v1030 = vadd.s32 %v965, %v1021
        %v1031 = vadd.s32 %v966, %v1021
        %v1032 = vadd.s32 %v967, %v1021
        %v1033 = vadd.s32 %v968, %v1021
        %v1034 = vadd.s32 %v969, %v1021
        %v1035 = vadd.s32 %v970, %v1021
        %v1036 = vadd.s32 %v971, %v1021
        %v1037 = vadd.s32 %v972, %v1021
        %v1038 = vadd.s32 %v973, %v1021
        %v1039 = vadd.s32 %v974, %v1021
        %v1040 = vadd.s32 %v975, %v1021
        %v1041 = vadd.s32 %v976, %v1021
        %v1042 = vadd.s32 %v977, %v1021
        %v1043 = vadd.s32 %v978, %v1021
        %v1044 = vadd.s32 %v979, %v1021
        %v1045 = vadd.s32 %v980, %v1021
        %v1046 = vadd.s32 %v981, %v1021
        %v1047 = vadd.s32 %v982, %v1021
        %v1048 = vadd.s32 %v983, %v1021
        %v1049 = vadd.s32 %v984, %v1021
        %v1050 = vadd.s32 %v985, %v1021
        %v1051 = vadd.s32 %v986, %v1021
        %v1052 = vadd.s32 %v987, %v1021
        %v1053 = vadd.s32 %v988, %v1021
        %v1054 = vadd.s32 %v989, %v1021
        %v1055 = vadd.s32 %v990, %v1021
        %v1056 = vadd.s32 %v991, %v1021
        %v1057 = vadd.s32 %v992, %v1021
        %v1058 = vadd.s32 %v993, %v1021
        %v1059 = vadd.s32 %v994, %v1021
        %v1060 = vadd.s32 %v995, %v1021
        %v1061 = vadd.s32 %v996, %v1021
        %v1062 = vadd.s32 %v997, %v1021
        %v1063 = vadd.s32 %v998, %v1021
        %v1064 = vadd.s32 %v999, %v1021
        %v1065 = vadd.s32 %v1000, %v1021
        %v1066 = vadd.s32 %v1001, %v1021
        %v1067 = vadd.s32 %v1002, %v1021
        %v1068 = vadd.s32 %v1003, %v1021
        %v1069 = vadd.s32 %v1004, %v1021
        %v1070 = vadd.s32 %v1005, %v1021
        %v1071 = vadd.s32 %v1006, %v1021
        %v1072 = vadd.s32 %v1007, %v1021
        %v1073 = vadd.s32 %v1008, %v1021
        %v1074 = vadd.s32 %v1009, %v1021
        %v1075 = vadd.s32 %v1010, %v1021
        %v1076 = vadd.s32 %v1011, %v1021
        %v1077 = vadd.s32 %v1012, %v1021
        %v1078 = vadd.s32 %v1013, %v1021
        %v1079 = vadd.s32 %v1014, %v1021
        %v1080 = vadd.s32 %v1015, %v1021
        %v1081 = vadd.s32 %v1016, %v1021
        %v1082 = vadd.s32 %v1017, %v1021
        %v1083 = vadd.s32 %v1018, %v1021
        %v1084 = vadd.s32 %v1019, %v1021
        %v1085 = vadd.s32 %v1020, %v1021
        %v1086 = vshrl.u32 %v1022, 16
        %v1087 = vshrl.u32 %v1023, 16
        %v1088 = vshrl.u32 %v1024, 16
        %v1089 = vshrl.u32 %v1025, 16
        %v1090 = vshrl.u32 %v1026, 16
        %v1091 = vshrl.u32 %v1027, 16
        %v1092 = vshrl.u32 %v1028, 16
        %v1093 = vshrl.u32 %v1029, 16
        %v1094 = vshrl.u32 %v1030, 16
        %v1095 = vshrl.u32 %v1031, 16
        %v1096 = vshrl.u32 %v1032, 16
        %v1097 = vshrl.u32 %v1033, 16
        %v1098 = vshrl.u32 %v1034, 16
        %v1099 = vshrl.u32 %v1035, 16
        %v1100 = vshrl.u32 %v1036, 16
        %v1101 = vshrl.u32 %v1037, 16
        %v1102 = vshrl.u32 %v1038, 16
        %v1103 = vshrl.u32 %v1039, 16
        %v1104 = vshrl.u32 %v1040, 16
        %v1105 = vshrl.u32 %v1041, 16
        %v1106 = vshrl.u32 %v1042, 16
        %v1107 = vshrl.u32 %v1043, 16
        %v1108 = vshrl.u32 %v1044, 16
        %v1109 = vshrl.u32 %v1045, 16
        %v1110 = vshrl.u32 %v1046, 16
        %v1111 = vshrl.u32 %v1047, 16
        %v1112 = vshrl.u32 %v1048, 16
        %v1113 = vshrl.u32 %v1049, 16
        %v1114 = vshrl.u32 %v1050, 16
        %v1115 = vshrl.u32 %v1051, 16
        %v1116 = vshrl.u32 %v1052, 16
        %v1117 = vshrl.u32 %v1053, 16
        %v1118 = vshrl.u32 %v1054, 16
        %v1119 = vshrl.u32 %v1055, 16
        %v1120 = vshrl.u32 %v1056, 16
        %v1121 = vshrl.u32 %v1057, 16
        %v1122 = vshrl.u32 %v1058, 16
        %v1123 = vshrl.u32 %v1059, 16
        %v1124 = vshrl.u32 %v1060, 16
        %v1125 = vshrl.u32 %v1061, 16
        %v1126 = vshrl.u32 %v1062, 16
        %v1127 = vshrl.u32 %v1063, 16
        %v1128 = vshrl.u32 %v1064, 16
        %v1129 = vshrl.u32 %v1065, 16
        %v1130 = vshrl.u32 %v1066, 16
        %v1131 = vshrl.u32 %v1067, 16
        %v1132 = vshrl.u32 %v1068, 16
        %v1133 = vshrl.u32 %v1069, 16
        %v1134 = vshrl.u32 %v1070, 16
        %v1135 = vshrl.u32 %v1071, 16
        %v1136 = vshrl.u32 %v1072, 16
        %v1137 = vshrl.u32 %v1073, 16
        %v1138 = vshrl.u32 %v1074, 16
        %v1139 = vshrl.u32 %v1075, 16
        %v1140 = vshrl.u32 %v1076, 16
        %v1141 = vshrl.u32 %v1077, 16
        %v1142 = vshrl.u32 %v1078, 16
        %v1143 = vshrl.u32 %v1079, 16
        %v1144 = vshrl.u32 %v1080, 16
        %v1145 = vshrl.u32 %v1081, 16
        %v1146 = vshrl.u32 %v1082, 16
        %v1147 = vshrl.u32 %v1083, 16
        %v1148 = vshrl.u32 %v1084, 16
        %v1149 = vshrl.u32 %v1085, 16
        %v1150 = vxor.u32 %v1022, %v1086
        %v1151 = vxor.u32 %v1023, %v1087
        %v1152 = vxor.u32 %v1024, %v1088
        %v1153 = vxor.u32 %v1025, %v1089
        %v1154 = vxor.u32 %v1026, %v1090
        %v1155 = vxor.u32 %v1027, %v1091
        %v1156 = vxor.u32 %v1028, %v1092
        %v1157 = vxor.u32 %v1029, %v1093
        %v1158 = vxor.u32 %v1030, %v1094
        %v1159 = vxor.u32 %v1031, %v1095
        %v1160 = vxor.u32 %v1032, %v1096
        %v1161 = vxor.u32 %v1033, %v1097
        %v1162 = vxor.u32 %v1034, %v1098
        %v1163 = vxor.u32 %v1035, %v1099
        %v1164 = vxor.u32 %v1036, %v1100
        %v1165 = vxor.u32 %v1037, %v1101
        %v1166 = vxor.u32 %v1038, %v1102
        %v1167 = vxor.u32 %v1039, %v1103
        %v1168 = vxor.u32 %v1040, %v1104
        %v1169 = vxor.u32 %v1041, %v1105
        %v1170 = vxor.u32 %v1042, %v1106
        %v1171 = vxor.u32 %v1043, %v1107
        %v1172 = vxor.u32 %v1044, %v1108
        %v1173 = vxor.u32 %v1045, %v1109
        %v1174 = vxor.u32 %v1046, %v1110
        %v1175 = vxor.u32 %v1047, %v1111
        %v1176 = vxor.u32 %v1048, %v1112
        %v1177 = vxor.u32 %v1049, %v1113
        %v1178 = vxor.u32 %v1050, %v1114
        %v1179 = vxor.u32 %v1051, %v1115
        %v1180 = vxor.u32 %v1052, %v1116
        %v1181 = vxor.u32 %v1053, %v1117
        %v1182 = vxor.u32 %v1054, %v1118
        %v1183 = vxor.u32 %v1055, %v1119
        %v1184 = vxor.u32 %v1056, %v1120
        %v1185 = vxor.u32 %v1057, %v1121
        %v1186 = vxor.u32 %v1058, %v1122
        %v1187 = vxor.u32 %v1059, %v1123
        %v1188 = vxor.u32 %v1060, %v1124
        %v1189 = vxor.u32 %v1061, %v1125
        %v1190 = vxor.u32 %v1062, %v1126
        %v1191 = vxor.u32 %v1063, %v1127
        %v1192 = vxor.u32 %v1064, %v1128
        %v1193 = vxor.u32 %v1065, %v1129
        %v1194 = vxor.u32 %v1066, %v1130
        %v1195 = vxor.u32 %v1067, %v1131
        %v1196 = vxor.u32 %v1068, %v1132
        %v1197 = vxor.u32 %v1069, %v1133
        %v1198 = vxor.u32 %v1070, %v1134
        %v1199 = vxor.u32 %v1071, %v1135
        %v1200 = vxor.u32 %v1072, %v1136
        %v1201 = vxor.u32 %v1073, %v1137
        %v1202 = vxor.u32 %v1074, %v1138
        %v1203 = vxor.u32 %v1075, %v1139
        %v1204 = vxor.u32 %v1076, %v1140
        %v1205 = vxor.u32 %v1077, %v1141
        %v1206 = vxor.u32 %v1078, %v1142
        %v1207 = vxor.u32 %v1079, %v1143
        %v1208 = vxor.u32 %v1080, %v1144
        %v1209 = vxor.u32 %v1081, %v1145
        %v1210 = vxor.u32 %v1082, %v1146
        %v1211 = vxor.u32 %v1083, %v1147
        %v1212 = vxor.u32 %v1084, %v1148
        %v1213 = vxor.u32 %v1085, %v1149
        %v1214 = vmul.u32 %v1150, 2146121005
        %v1215 = vmul.u32 %v1151, 2146121005
        %v1216 = vmul.u32 %v1152, 2146121005
        %v1217 = vmul.u32 %v1153, 2146121005
        %v1218 = vmul.u32 %v1154, 2146121005
        %v1219 = vmul.u32 %v1155, 2146121005
        %v1220 = vmul.u32 %v1156, 2146121005
        %v1221 = vmul.u32 %v1157, 2146121005
        %v1222 = vmul.u32 %v1158, 2146121005
        %v1223 = vmul.u32 %v1159, 2146121005
        %v1224 = vmul.u32 %v1160, 2146121005
        %v1225 = vmul.u32 %v1161, 2146121005
        %v1226 = vmul.u32 %v1162, 2146121005
        %v1227 = vmul.u32 %v1163, 2146121005
        %v1228 = vmul.u32 %v1164, 2146121005
        %v1229 = vmul.u32 %v1165, 2146121005
        %v1230 = vmul.u32 %v1166, 2146121005
        %v1231 = vmul.u32 %v1167, 2146121005
        %v1232 = vmul.u32 %v1168, 2146121005
        %v1233 = vmul.u32 %v1169, 2146121005
        %v1234 = vmul.u32 %v1170, 2146121005
        %v1235 = vmul.u32 %v1171, 2146121005
        %v1236 = vmul.u32 %v1172, 2146121005
        %v1237 = vmul.u32 %v1173, 2146121005
        %v1238 = vmul.u32 %v1174, 2146121005
        %v1239 = vmul.u32 %v1175, 2146121005
        %v1240 = vmul.u32 %v1176, 2146121005
        %v1241 = vmul.u32 %v1177, 2146121005
        %v1242 = vmul.u32 %v1178, 2146121005
        %v1243 = vmul.u32 %v1179, 2146121005
        %v1244 = vmul.u32 %v1180, 2146121005
        %v1245 = vmul.u32 %v1181, 2146121005
        %v1246 = vmul.u32 %v1182, 2146121005
        %v1247 = vmul.u32 %v1183, 2146121005
        %v1248 = vmul.u32 %v1184, 2146121005
        %v1249 = vmul.u32 %v1185, 2146121005
        %v1250 = vmul.u32 %v1186, 2146121005
        %v1251 = vmul.u32 %v1187, 2146121005
        %v1252 = vmul.u32 %v1188, 2146121005
        %v1253 = vmul.u32 %v1189, 2146121005
        %v1254 = vmul.u32 %v1190, 2146121005
        %v1255 = vmul.u32 %v1191, 2146121005
        %v1256 = vmul.u32 %v1192, 2146121005
        %v1257 = vmul.u32 %v1193, 2146121005
        %v1258 = vmul.u32 %v1194, 2146121005
        %v1259 = vmul.u32 %v1195, 2146121005
        %v1260 = vmul.u32 %v1196, 2146121005
        %v1261 = vmul.u32 %v1197, 2146121005
        %v1262 = vmul.u32 %v1198, 2146121005
        %v1263 = vmul.u32 %v1199, 2146121005
        %v1264 = vmul.u32 %v1200, 2146121005
        %v1265 = vmul.u32 %v1201, 2146121005
        %v1266 = vmul.u32 %v1202, 2146121005
        %v1267 = vmul.u32 %v1203, 2146121005
        %v1268 = vmul.u32 %v1204, 2146121005
        %v1269 = vmul.u32 %v1205, 2146121005
        %v1270 = vmul.u32 %v1206, 2146121005
        %v1271 = vmul.u32 %v1207, 2146121005
        %v1272 = vmul.u32 %v1208, 2146121005
        %v1273 = vmul.u32 %v1209, 2146121005
        %v1274 = vmul.u32 %v1210, 2146121005
        %v1275 = vmul.u32 %v1211, 2146121005
        %v1276 = vmul.u32 %v1212, 2146121005
        %v1277 = vmul.u32 %v1213, 2146121005
        %v1278 = vshrl.u32 %v1214, 15
        %v1279 = vshrl.u32 %v1215, 15
        %v1280 = vshrl.u32 %v1216, 15
        %v1281 = vshrl.u32 %v1217, 15
        %v1282 = vshrl.u32 %v1218, 15
        %v1283 = vshrl.u32 %v1219, 15
        %v1284 = vshrl.u32 %v1220, 15
        %v1285 = vshrl.u32 %v1221, 15
        %v1286 = vshrl.u32 %v1222, 15
        %v1287 = vshrl.u32 %v1223, 15
        %v1288 = vshrl.u32 %v1224, 15
        %v1289 = vshrl.u32 %v1225, 15
        %v1290 = vshrl.u32 %v1226, 15
        %v1291 = vshrl.u32 %v1227, 15
        %v1292 = vshrl.u32 %v1228, 15
        %v1293 = vshrl.u32 %v1229, 15
        %v1294 = vshrl.u32 %v1230, 15
        %v1295 = vshrl.u32 %v1231, 15
        %v1296 = vshrl.u32 %v1232, 15
        %v1297 = vshrl.u32 %v1233, 15
        %v1298 = vshrl.u32 %v1234, 15
        %v1299 = vshrl.u32 %v1235, 15
        %v1300 = vshrl.u32 %v1236, 15
        %v1301 = vshrl.u32 %v1237, 15
        %v1302 = vshrl.u32 %v1238, 15
        %v1303 = vshrl.u32 %v1239, 15
        %v1304 = vshrl.u32 %v1240, 15
        %v1305 = vshrl.u32 %v1241, 15
        %v1306 = vshrl.u32 %v1242, 15
        %v1307 = vshrl.u32 %v1243, 15
        %v1308 = vshrl.u32 %v1244, 15
        %v1309 = vshrl.u32 %v1245, 15
        %v1310 = vshrl.u32 %v1246, 15
        %v1311 = vshrl.u32 %v1247, 15
        %v1312 = vshrl.u32 %v1248, 15
        %v1313 = vshrl.u32 %v1249, 15
        %v1314 = vshrl.u32 %v1250, 15
        %v1315 = vshrl.u32 %v1251, 15
        %v1316 = vshrl.u32 %v1252, 15
        %v1317 = vshrl.u32 %v1253, 15
        %v1318 = vshrl.u32 %v1254, 15
        %v1319 = vshrl.u32 %v1255, 15
        %v1320 = vshrl.u32 %v1256, 15
        %v1321 = vshrl.u32 %v1257, 15
        %v1322 = vshrl.u32 %v1258, 15
        %v1323 = vshrl.u32 %v1259, 15
        %v1324 = vshrl.u32 %v1260, 15
        %v1325 = vshrl.u32 %v1261, 15
        %v1326 = vshrl.u32 %v1262, 15
        %v1327 = vshrl.u32 %v1263, 15
        %v1328 = vshrl.u32 %v1264, 15
        %v1329 = vshrl.u32 %v1265, 15
        %v1330 = vshrl.u32 %v1266, 15
        %v1331 = vshrl.u32 %v1267, 15
        %v1332 = vshrl.u32 %v1268, 15
        %v1333 = vshrl.u32 %v1269, 15
        %v1334 = vshrl.u32 %v1270, 15
        %v1335 = vshrl.u32 %v1271, 15
        %v1336 = vshrl.u32 %v1272, 15
        %v1337 = vshrl.u32 %v1273, 15
        %v1338 = vshrl.u32 %v1274, 15
        %v1339 = vshrl.u32 %v1275, 15
        %v1340 = vshrl.u32 %v1276, 15
        %v1341 = vshrl.u32 %v1277, 15
        %v1342 = vxor.u32 %v1214, %v1278
        %v1343 = vxor.u32 %v1215, %v1279
        %v1344 = vxor.u32 %v1216, %v1280
        %v1345 = vxor.u32 %v1217, %v1281
        %v1346 = vxor.u32 %v1218, %v1282
        %v1347 = vxor.u32 %v1219, %v1283
        %v1348 = vxor.u32 %v1220, %v1284
        %v1349 = vxor.u32 %v1221, %v1285
        %v1350 = vxor.u32 %v1222, %v1286
        %v1351 = vxor.u32 %v1223, %v1287
        %v1352 = vxor.u32 %v1224, %v1288
        %v1353 = vxor.u32 %v1225, %v1289
        %v1354 = vxor.u32 %v1226, %v1290
        %v1355 = vxor.u32 %v1227, %v1291
        %v1356 = vxor.u32 %v1228, %v1292
        %v1357 = vxor.u32 %v1229, %v1293
        %v1358 = vxor.u32 %v1230, %v1294
        %v1359 = vxor.u32 %v1231, %v1295
        %v1360 = vxor.u32 %v1232, %v1296
        %v1361 = vxor.u32 %v1233, %v1297
        %v1362 = vxor.u32 %v1234, %v1298
        %v1363 = vxor.u32 %v1235, %v1299
        %v1364 = vxor.u32 %v1236, %v1300
        %v1365 = vxor.u32 %v1237, %v1301
        %v1366 = vxor.u32 %v1238, %v1302
        %v1367 = vxor.u32 %v1239, %v1303
        %v1368 = vxor.u32 %v1240, %v1304
        %v1369 = vxor.u32 %v1241, %v1305
        %v1370 = vxor.u32 %v1242, %v1306
        %v1371 = vxor.u32 %v1243, %v1307
        %v1372 = vxor.u32 %v1244, %v1308
        %v1373 = vxor.u32 %v1245, %v1309
        %v1374 = vxor.u32 %v1246, %v1310
        %v1375 = vxor.u32 %v1247, %v1311
        %v1376 = vxor.u32 %v1248, %v1312
        %v1377 = vxor.u32 %v1249, %v1313
        %v1378 = vxor.u32 %v1250, %v1314
        %v1379 = vxor.u32 %v1251, %v1315
        %v1380 = vxor.u32 %v1252, %v1316
        %v1381 = vxor.u32 %v1253, %v1317
        %v1382 = vxor.u32 %v1254, %v1318
        %v1383 = vxor.u32 %v1255, %v1319
        %v1384 = vxor.u32 %v1256, %v1320
        %v1385 = vxor.u32 %v1257, %v1321
        %v1386 = vxor.u32 %v1258, %v1322
        %v1387 = vxor.u32 %v1259, %v1323
        %v1388 = vxor.u32 %v1260, %v1324
        %v1389 = vxor.u32 %v1261, %v1325
        %v1390 = vxor.u32 %v1262, %v1326
        %v1391 = vxor.u32 %v1263, %v1327
        %v1392 = vxor.u32 %v1264, %v1328
        %v1393 = vxor.u32 %v1265, %v1329
        %v1394 = vxor.u32 %v1266, %v1330
        %v1395 = vxor.u32 %v1267, %v1331
        %v1396 = vxor.u32 %v1268, %v1332
        %v1397 = vxor.u32 %v1269, %v1333
        %v1398 = vxor.u32 %v1270, %v1334
        %v1399 = vxor.u32 %v1271, %v1335
        %v1400 = vxor.u32 %v1272, %v1336
        %v1401 = vxor.u32 %v1273, %v1337
        %v1402 = vxor.u32 %v1274, %v1338
        %v1403 = vxor.u32 %v1275, %v1339
        %v1404 = vxor.u32 %v1276, %v1340
        %v1405 = vxor.u32 %v1277, %v1341
        %v1406 = vmul.u32 %v1342, 2221713035
        %v1407 = vmul.u32 %v1343, 2221713035
        %v1408 = vmul.u32 %v1344, 2221713035
        %v1409 = vmul.u32 %v1345, 2221713035
        %v1410 = vmul.u32 %v1346, 2221713035
        %v1411 = vmul.u32 %v1347, 2221713035
        %v1412 = vmul.u32 %v1348, 2221713035
        %v1413 = vmul.u32 %v1349, 2221713035
        %v1414 = vmul.u32 %v1350, 2221713035
        %v1415 = vmul.u32 %v1351, 2221713035
        %v1416 = vmul.u32 %v1352, 2221713035
        %v1417 = vmul.u32 %v1353, 2221713035
        %v1418 = vmul.u32 %v1354, 2221713035
        %v1419 = vmul.u32 %v1355, 2221713035
        %v1420 = vmul.u32 %v1356, 2221713035
        %v1421 = vmul.u32 %v1357, 2221713035
        %v1422 = vmul.u32 %v1358, 2221713035
        %v1423 = vmul.u32 %v1359, 2221713035
        %v1424 = vmul.u32 %v1360, 2221713035
        %v1425 = vmul.u32 %v1361, 2221713035
        %v1426 = vmul.u32 %v1362, 2221713035
        %v1427 = vmul.u32 %v1363, 2221713035
        %v1428 = vmul.u32 %v1364, 2221713035
        %v1429 = vmul.u32 %v1365, 2221713035
        %v1430 = vmul.u32 %v1366, 2221713035
        %v1431 = vmul.u32 %v1367, 2221713035
        %v1432 = vmul.u32 %v1368, 2221713035
        %v1433 = vmul.u32 %v1369, 2221713035
        %v1434 = vmul.u32 %v1370, 2221713035
        %v1435 = vmul.u32 %v1371, 2221713035
        %v1436 = vmul.u32 %v1372, 2221713035
        %v1437 = vmul.u32 %v1373, 2221713035
        %v1438 = vmul.u32 %v1374, 2221713035
        %v1439 = vmul.u32 %v1375, 2221713035
        %v1440 = vmul.u32 %v1376, 2221713035
        %v1441 = vmul.u32 %v1377, 2221713035
        %v1442 = vmul.u32 %v1378, 2221713035
        %v1443 = vmul.u32 %v1379, 2221713035
        %v1444 = vmul.u32 %v1380, 2221713035
        %v1445 = vmul.u32 %v1381, 2221713035
        %v1446 = vmul.u32 %v1382, 2221713035
        %v1447 = vmul.u32 %v1383, 2221713035
        %v1448 = vmul.u32 %v1384, 2221713035
        %v1449 = vmul.u32 %v1385, 2221713035
        %v1450 = vmul.u32 %v1386, 2221713035
        %v1451 = vmul.u32 %v1387, 2221713035
        %v1452 = vmul.u32 %v1388, 2221713035
        %v1453 = vmul.u32 %v1389, 2221713035
        %v1454 = vmul.u32 %v1390, 2221713035
        %v1455 = vmul.u32 %v1391, 2221713035
        %v1456 = vmul.u32 %v1392, 2221713035
        %v1457 = vmul.u32 %v1393, 2221713035
        %v1458 = vmul.u32 %v1394, 2221713035
        %v1459 = vmul.u32 %v1395, 2221713035
        %v1460 = vmul.u32 %v1396, 2221713035
        %v1461 = vmul.u32 %v1397, 2221713035
        %v1462 = vmul.u32 %v1398, 2221713035
        %v1463 = vmul.u32 %v1399, 2221713035
        %v1464 = vmul.u32 %v1400, 2221713035
        %v1465 = vmul.u32 %v1401, 2221713035
        %v1466 = vmul.u32 %v1402, 2221713035
        %v1467 = vmul.u32 %v1403, 2221713035
        %v1468 = vmul.u32 %v1404, 2221713035
        %v1469 = vmul.u32 %v1405, 2221713035
        %v1470 = vshrl.u32 %v1406, 16
        %v1471 = vshrl.u32 %v1407, 16
        %v1472 = vshrl.u32 %v1408, 16
        %v1473 = vshrl.u32 %v1409, 16
        %v1474 = vshrl.u32 %v1410, 16
        %v1475 = vshrl.u32 %v1411, 16
        %v1476 = vshrl.u32 %v1412, 16
        %v1477 = vshrl.u32 %v1413, 16
        %v1478 = vshrl.u32 %v1414, 16
        %v1479 = vshrl.u32 %v1415, 16
        %v1480 = vshrl.u32 %v1416, 16
        %v1481 = vshrl.u32 %v1417, 16
        %v1482 = vshrl.u32 %v1418, 16
        %v1483 = vshrl.u32 %v1419, 16
        %v1484 = vshrl.u32 %v1420, 16
        %v1485 = vshrl.u32 %v1421, 16
        %v1486 = vshrl.u32 %v1422, 16
        %v1487 = vshrl.u32 %v1423, 16
        %v1488 = vshrl.u32 %v1424, 16
        %v1489 = vshrl.u32 %v1425, 16
        %v1490 = vshrl.u32 %v1426, 16
        %v1491 = vshrl.u32 %v1427, 16
        %v1492 = vshrl.u32 %v1428, 16
        %v1493 = vshrl.u32 %v1429, 16
        %v1494 = vshrl.u32 %v1430, 16
        %v1495 = vshrl.u32 %v1431, 16
        %v1496 = vshrl.u32 %v1432, 16
        %v1497 = vshrl.u32 %v1433, 16
        %v1498 = vshrl.u32 %v1434, 16
        %v1499 = vshrl.u32 %v1435, 16
        %v1500 = vshrl.u32 %v1436, 16
        %v1501 = vshrl.u32 %v1437, 16
        %v1502 = vshrl.u32 %v1438, 16
        %v1503 = vshrl.u32 %v1439, 16
        %v1504 = vshrl.u32 %v1440, 16
        %v1505 = vshrl.u32 %v1441, 16
        %v1506 = vshrl.u32 %v1442, 16
        %v1507 = vshrl.u32 %v1443, 16
        %v1508 = vshrl.u32 %v1444, 16
        %v1509 = vshrl.u32 %v1445, 16
        %v1510 = vshrl.u32 %v1446, 16
        %v1511 = vshrl.u32 %v1447, 16
        %v1512 = vshrl.u32 %v1448, 16
        %v1513 = vshrl.u32 %v1449, 16
        %v1514 = vshrl.u32 %v1450, 16
        %v1515 = vshrl.u32 %v1451, 16
        %v1516 = vshrl.u32 %v1452, 16
        %v1517 = vshrl.u32 %v1453, 16
        %v1518 = vshrl.u32 %v1454, 16
        %v1519 = vshrl.u32 %v1455, 16
        %v1520 = vshrl.u32 %v1456, 16
        %v1521 = vshrl.u32 %v1457, 16
        %v1522 = vshrl.u32 %v1458, 16
        %v1523 = vshrl.u32 %v1459, 16
        %v1524 = vshrl.u32 %v1460, 16
        %v1525 = vshrl.u32 %v1461, 16
        %v1526 = vshrl.u32 %v1462, 16
        %v1527 = vshrl.u32 %v1463, 16
        %v1528 = vshrl.u32 %v1464, 16
        %v1529 = vshrl.u32 %v1465, 16
        %v1530 = vshrl.u32 %v1466, 16
        %v1531 = vshrl.u32 %v1467, 16
        %v1532 = vshrl.u32 %v1468, 16
        %v1533 = vshrl.u32 %v1469, 16
        %v1534 = vxor.u32 %v1406, %v1470
        %v1535 = vxor.u32 %v1407, %v1471
        %v1536 = vxor.u32 %v1408, %v1472
        %v1537 = vxor.u32 %v1409, %v1473
        %v1538 = vxor.u32 %v1410, %v1474
        %v1539 = vxor.u32 %v1411, %v1475
        %v1540 = vxor.u32 %v1412, %v1476
        %v1541 = vxor.u32 %v1413, %v1477
        %v1542 = vxor.u32 %v1414, %v1478
        %v1543 = vxor.u32 %v1415, %v1479
        %v1544 = vxor.u32 %v1416, %v1480
        %v1545 = vxor.u32 %v1417, %v1481
        %v1546 = vxor.u32 %v1418, %v1482
        %v1547 = vxor.u32 %v1419, %v1483
        %v1548 = vxor.u32 %v1420, %v1484
        %v1549 = vxor.u32 %v1421, %v1485
        %v1550 = vxor.u32 %v1422, %v1486
        %v1551 = vxor.u32 %v1423, %v1487
        %v1552 = vxor.u32 %v1424, %v1488
        %v1553 = vxor.u32 %v1425, %v1489
        %v1554 = vxor.u32 %v1426, %v1490
        %v1555 = vxor.u32 %v1427, %v1491
        %v1556 = vxor.u32 %v1428, %v1492
        %v1557 = vxor.u32 %v1429, %v1493
        %v1558 = vxor.u32 %v1430, %v1494
        %v1559 = vxor.u32 %v1431, %v1495
        %v1560 = vxor.u32 %v1432, %v1496
        %v1561 = vxor.u32 %v1433, %v1497
        %v1562 = vxor.u32 %v1434, %v1498
        %v1563 = vxor.u32 %v1435, %v1499
        %v1564 = vxor.u32 %v1436, %v1500
        %v1565 = vxor.u32 %v1437, %v1501
        %v1566 = vxor.u32 %v1438, %v1502
        %v1567 = vxor.u32 %v1439, %v1503
        %v1568 = vxor.u32 %v1440, %v1504
        %v1569 = vxor.u32 %v1441, %v1505
        %v1570 = vxor.u32 %v1442, %v1506
        %v1571 = vxor.u32 %v1443, %v1507
        %v1572 = vxor.u32 %v1444, %v1508
        %v1573 = vxor.u32 %v1445, %v1509
        %v1574 = vxor.u32 %v1446, %v1510
        %v1575 = vxor.u32 %v1447, %v1511
        %v1576 = vxor.u32 %v1448, %v1512
        %v1577 = vxor.u32 %v1449, %v1513
        %v1578 = vxor.u32 %v1450, %v1514
        %v1579 = vxor.u32 %v1451, %v1515
        %v1580 = vxor.u32 %v1452, %v1516
        %v1581 = vxor.u32 %v1453, %v1517
        %v1582 = vxor.u32 %v1454, %v1518
        %v1583 = vxor.u32 %v1455, %v1519
        %v1584 = vxor.u32 %v1456, %v1520
        %v1585 = vxor.u32 %v1457, %v1521
        %v1586 = vxor.u32 %v1458, %v1522
        %v1587 = vxor.u32 %v1459, %v1523
        %v1588 = vxor.u32 %v1460, %v1524
        %v1589 = vxor.u32 %v1461, %v1525
        %v1590 = vxor.u32 %v1462, %v1526
        %v1591 = vxor.u32 %v1463, %v1527
        %v1592 = vxor.u32 %v1464, %v1528
        %v1593 = vxor.u32 %v1465, %v1529
        %v1594 = vxor.u32 %v1466, %v1530
        %v1595 = vxor.u32 %v1467, %v1531
        %v1596 = vxor.u32 %v1468, %v1532
        %v1597 = vxor.u32 %v1469, %v1533
        %v1598 = vshrl.u32 %v1534, 8
        %v1599 = vshrl.u32 %v1535, 8
        %v1600 = vshrl.u32 %v1536, 8
        %v1601 = vshrl.u32 %v1537, 8
        %v1602 = vshrl.u32 %v1538, 8
        %v1603 = vshrl.u32 %v1539, 8
        %v1604 = vshrl.u32 %v1540, 8
        %v1605 = vshrl.u32 %v1541, 8
        %v1606 = vshrl.u32 %v1542, 8
        %v1607 = vshrl.u32 %v1543, 8
        %v1608 = vshrl.u32 %v1544, 8
        %v1609 = vshrl.u32 %v1545, 8
        %v1610 = vshrl.u32 %v1546, 8
        %v1611 = vshrl.u32 %v1547, 8
        %v1612 = vshrl.u32 %v1548, 8
        %v1613 = vshrl.u32 %v1549, 8
        %v1614 = vshrl.u32 %v1550, 8
        %v1615 = vshrl.u32 %v1551, 8
        %v1616 = vshrl.u32 %v1552, 8
        %v1617 = vshrl.u32 %v1553, 8
        %v1618 = vshrl.u32 %v1554, 8
        %v1619 = vshrl.u32 %v1555, 8
        %v1620 = vshrl.u32 %v1556, 8
        %v1621 = vshrl.u32 %v1557, 8
        %v1622 = vshrl.u32 %v1558, 8
        %v1623 = vshrl.u32 %v1559, 8
        %v1624 = vshrl.u32 %v1560, 8
        %v1625 = vshrl.u32 %v1561, 8
        %v1626 = vshrl.u32 %v1562, 8
        %v1627 = vshrl.u32 %v1563, 8
        %v1628 = vshrl.u32 %v1564, 8
        %v1629 = vshrl.u32 %v1565, 8
        %v1630 = vshrl.u32 %v1566, 8
        %v1631 = vshrl.u32 %v1567, 8
        %v1632 = vshrl.u32 %v1568, 8
        %v1633 = vshrl.u32 %v1569, 8
        %v1634 = vshrl.u32 %v1570, 8
        %v1635 = vshrl.u32 %v1571, 8
        %v1636 = vshrl.u32 %v1572, 8
        %v1637 = vshrl.u32 %v1573, 8
        %v1638 = vshrl.u32 %v1574, 8
        %v1639 = vshrl.u32 %v1575, 8
        %v1640 = vshrl.u32 %v1576, 8
        %v1641 = vshrl.u32 %v1577, 8
        %v1642 = vshrl.u32 %v1578, 8
        %v1643 = vshrl.u32 %v1579, 8
        %v1644 = vshrl.u32 %v1580, 8
        %v1645 = vshrl.u32 %v1581, 8
        %v1646 = vshrl.u32 %v1582, 8
        %v1647 = vshrl.u32 %v1583, 8
        %v1648 = vshrl.u32 %v1584, 8
        %v1649 = vshrl.u32 %v1585, 8
        %v1650 = vshrl.u32 %v1586, 8
        %v1651 = vshrl.u32 %v1587, 8
        %v1652 = vshrl.u32 %v1588, 8
        %v1653 = vshrl.u32 %v1589, 8
        %v1654 = vshrl.u32 %v1590, 8
        %v1655 = vshrl.u32 %v1591, 8
        %v1656 = vshrl.u32 %v1592, 8
        %v1657 = vshrl.u32 %v1593, 8
        %v1658 = vshrl.u32 %v1594, 8
        %v1659 = vshrl.u32 %v1595, 8
        %v1660 = vshrl.u32 %v1596, 8
        %v1661 = vshrl.u32 %v1597, 8
        %v1662 = vcvt.s32.f32 %v1598
        %v1663 = vcvt.s32.f32 %v1599
        %v1664 = vcvt.s32.f32 %v1600
        %v1665 = vcvt.s32.f32 %v1601
        %v1666 = vcvt.s32.f32 %v1602
        %v1667 = vcvt.s32.f32 %v1603
        %v1668 = vcvt.s32.f32 %v1604
        %v1669 = vcvt.s32.f32 %v1605
        %v1670 = vcvt.s32.f32 %v1606
        %v1671 = vcvt.s32.f32 %v1607
        %v1672 = vcvt.s32.f32 %v1608
        %v1673 = vcvt.s32.f32 %v1609
        %v1674 = vcvt.s32.f32 %v1610
        %v1675 = vcvt.s32.f32 %v1611
        %v1676 = vcvt.s32.f32 %v1612
        %v1677 = vcvt.s32.f32 %v1613
        %v1678 = vcvt.s32.f32 %v1614
        %v1679 = vcvt.s32.f32 %v1615
        %v1680 = vcvt.s32.f32 %v1616
        %v1681 = vcvt.s32.f32 %v1617
        %v1682 = vcvt.s32.f32 %v1618
        %v1683 = vcvt.s32.f32 %v1619
        %v1684 = vcvt.s32.f32 %v1620
        %v1685 = vcvt.s32.f32 %v1621
        %v1686 = vcvt.s32.f32 %v1622
        %v1687 = vcvt.s32.f32 %v1623
        %v1688 = vcvt.s32.f32 %v1624
        %v1689 = vcvt.s32.f32 %v1625
        %v1690 = vcvt.s32.f32 %v1626
        %v1691 = vcvt.s32.f32 %v1627
        %v1692 = vcvt.s32.f32 %v1628
        %v1693 = vcvt.s32.f32 %v1629
        %v1694 = vcvt.s32.f32 %v1630
        %v1695 = vcvt.s32.f32 %v1631
        %v1696 = vcvt.s32.f32 %v1632
        %v1697 = vcvt.s32.f32 %v1633
        %v1698 = vcvt.s32.f32 %v1634
        %v1699 = vcvt.s32.f32 %v1635
        %v1700 = vcvt.s32.f32 %v1636
        %v1701 = vcvt.s32.f32 %v1637
        %v1702 = vcvt.s32.f32 %v1638
        %v1703 = vcvt.s32.f32 %v1639
        %v1704 = vcvt.s32.f32 %v1640
        %v1705 = vcvt.s32.f32 %v1641
        %v1706 = vcvt.s32.f32 %v1642
        %v1707 = vcvt.s32.f32 %v1643
        %v1708 = vcvt.s32.f32 %v1644
        %v1709 = vcvt.s32.f32 %v1645
        %v1710 = vcvt.s32.f32 %v1646
        %v1711 = vcvt.s32.f32 %v1647
        %v1712 = vcvt.s32.f32 %v1648
        %v1713 = vcvt.s32.f32 %v1649
        %v1714 = vcvt.s32.f32 %v1650
        %v1715 = vcvt.s32.f32 %v1651
        %v1716 = vcvt.s32.f32 %v1652
        %v1717 = vcvt.s32.f32 %v1653
        %v1718 = vcvt.s32.f32 %v1654
        %v1719 = vcvt.s32.f32 %v1655
        %v1720 = vcvt.s32.f32 %v1656
        %v1721 = vcvt.s32.f32 %v1657
        %v1722 = vcvt.s32.f32 %v1658
        %v1723 = vcvt.s32.f32 %v1659
        %v1724 = vcvt.s32.f32 %v1660
        %v1725 = vcvt.s32.f32 %v1661
        %v1726 = vadd.f32 %v1662, 0.5
        %v1727 = vadd.f32 %v1663, 0.5
        %v1728 = vadd.f32 %v1664, 0.5
        %v1729 = vadd.f32 %v1665, 0.5
        %v1730 = vadd.f32 %v1666, 0.5
        %v1731 = vadd.f32 %v1667, 0.5
        %v1732 = vadd.f32 %v1668, 0.5
        %v1733 = vadd.f32 %v1669, 0.5
        %v1734 = vadd.f32 %v1670, 0.5
        %v1735 = vadd.f32 %v1671, 0.5
        %v1736 = vadd.f32 %v1672, 0.5
        %v1737 = vadd.f32 %v1673, 0.5
        %v1738 = vadd.f32 %v1674, 0.5
        %v1739 = vadd.f32 %v1675, 0.5
        %v1740 = vadd.f32 %v1676, 0.5
        %v1741 = vadd.f32 %v1677, 0.5
        %v1742 = vadd.f32 %v1678, 0.5
        %v1743 = vadd.f32 %v1679, 0.5
        %v1744 = vadd.f32 %v1680, 0.5
        %v1745 = vadd.f32 %v1681, 0.5
        %v1746 = vadd.f32 %v1682, 0.5
        %v1747 = vadd.f32 %v1683, 0.5
        %v1748 = vadd.f32 %v1684, 0.5
        %v1749 = vadd.f32 %v1685, 0.5
        %v1750 = vadd.f32 %v1686, 0.5
        %v1751 = vadd.f32 %v1687, 0.5
        %v1752 = vadd.f32 %v1688, 0.5
        %v1753 = vadd.f32 %v1689, 0.5
        %v1754 = vadd.f32 %v1690, 0.5
        %v1755 = vadd.f32 %v1691, 0.5
        %v1756 = vadd.f32 %v1692, 0.5
        %v1757 = vadd.f32 %v1693, 0.5
        %v1758 = vadd.f32 %v1694, 0.5
        %v1759 = vadd.f32 %v1695, 0.5
        %v1760 = vadd.f32 %v1696, 0.5
        %v1761 = vadd.f32 %v1697, 0.5
        %v1762 = vadd.f32 %v1698, 0.5
        %v1763 = vadd.f32 %v1699, 0.5
        %v1764 = vadd.f32 %v1700, 0.5
        %v1765 = vadd.f32 %v1701, 0.5
        %v1766 = vadd.f32 %v1702, 0.5
        %v1767 = vadd.f32 %v1703, 0.5
        %v1768 = vadd.f32 %v1704, 0.5
        %v1769 = vadd.f32 %v1705, 0.5
        %v1770 = vadd.f32 %v1706, 0.5
        %v1771 = vadd.f32 %v1707, 0.5
        %v1772 = vadd.f32 %v1708, 0.5
        %v1773 = vadd.f32 %v1709, 0.5
        %v1774 = vadd.f32 %v1710, 0.5
        %v1775 = vadd.f32 %v1711, 0.5
        %v1776 = vadd.f32 %v1712, 0.5
        %v1777 = vadd.f32 %v1713, 0.5
        %v1778 = vadd.f32 %v1714, 0.5
        %v1779 = vadd.f32 %v1715, 0.5
        %v1780 = vadd.f32 %v1716, 0.5
        %v1781 = vadd.f32 %v1717, 0.5
        %v1782 = vadd.f32 %v1718, 0.5
        %v1783 = vadd.f32 %v1719, 0.5
        %v1784 = vadd.f32 %v1720, 0.5
        %v1785 = vadd.f32 %v1721, 0.5
        %v1786 = vadd.f32 %v1722, 0.5
        %v1787 = vadd.f32 %v1723, 0.5
        %v1788 = vadd.f32 %v1724, 0.5
        %v1789 = vadd.f32 %v1725, 0.5
        %v1790 = vmul.f32 %v1726, 5.9604645e-08
        %v1791 = vmul.f32 %v1727, 5.9604645e-08
        %v1792 = vmul.f32 %v1728, 5.9604645e-08
        %v1793 = vmul.f32 %v1729, 5.9604645e-08
        %v1794 = vmul.f32 %v1730, 5.9604645e-08
        %v1795 = vmul.f32 %v1731, 5.9604645e-08
        %v1796 = vmul.f32 %v1732, 5.9604645e-08
        %v1797 = vmul.f32 %v1733, 5.9604645e-08
        %v1798 = vmul.f32 %v1734, 5.9604645e-08
        %v1799 = vmul.f32 %v1735, 5.9604645e-08
        %v1800 = vmul.f32 %v1736, 5.9604645e-08
        %v1801 = vmul.f32 %v1737, 5.9604645e-08
        %v1802 = vmul.f32 %v1738, 5.9604645e-08
        %v1803 = vmul.f32 %v1739, 5.9604645e-08
        %v1804 = vmul.f32 %v1740, 5.9604645e-08
        %v1805 = vmul.f32 %v1741, 5.9604645e-08
        %v1806 = vmul.f32 %v1742, 5.9604645e-08
        %v1807 = vmul.f32 %v1743, 5.9604645e-08
        %v1808 = vmul.f32 %v1744, 5.9604645e-08
        %v1809 = vmul.f32 %v1745, 5.9604645e-08
        %v1810 = vmul.f32 %v1746, 5.9604645e-08
        %v1811 = vmul.f32 %v1747, 5.9604645e-08
        %v1812 = vmul.f32 %v1748, 5.9604645e-08
        %v1813 = vmul.f32 %v1749, 5.9604645e-08
        %v1814 = vmul.f32 %v1750, 5.9604645e-08
        %v1815 = vmul.f32 %v1751, 5.9604645e-08
        %v1816 = vmul.f32 %v1752, 5.9604645e-08
        %v1817 = vmul.f32 %v1753, 5.9604645e-08
        %v1818 = vmul.f32 %v1754, 5.9604645e-08
        %v1819 = vmul.f32 %v1755, 5.9604645e-08
        %v1820 = vmul.f32 %v1756, 5.9604645e-08
        %v1821 = vmul.f32 %v1757, 5.9604645e-08
        %v1822 = vmul.f32 %v1758, 5.9604645e-08
        %v1823 = vmul.f32 %v1759, 5.9604645e-08
        %v1824 = vmul.f32 %v1760, 5.9604645e-08
        %v1825 = vmul.f32 %v1761, 5.9604645e-08
        %v1826 = vmul.f32 %v1762, 5.9604645e-08
        %v1827 = vmul.f32 %v1763, 5.9604645e-08
        %v1828 = vmul.f32 %v1764, 5.9604645e-08
        %v1829 = vmul.f32 %v1765, 5.9604645e-08
        %v1830 = vmul.f32 %v1766, 5.9604645e-08
        %v1831 = vmul.f32 %v1767, 5.9604645e-08
        %v1832 = vmul.f32 %v1768, 5.9604645e-08
        %v1833 = vmul.f32 %v1769, 5.9604645e-08
        %v1834 = vmul.f32 %v1770, 5.9604645e-08
        %v1835 = vmul.f32 %v1771, 5.9604645e-08
        %v1836 = vmul.f32 %v1772, 5.9604645e-08
        %v1837 = vmul.f32 %v1773, 5.9604645e-08
        %v1838 = vmul.f32 %v1774, 5.9604645e-08
        %v1839 = vmul.f32 %v1775, 5.9604645e-08
        %v1840 = vmul.f32 %v1776, 5.9604645e-08
        %v1841 = vmul.f32 %v1777, 5.9604645e-08
        %v1842 = vmul.f32 %v1778, 5.9604645e-08
        %v1843 = vmul.f32 %v1779, 5.9604645e-08
        %v1844 = vmul.f32 %v1780, 5.9604645e-08
        %v1845 = vmul.f32 %v1781, 5.9604645e-08
        %v1846 = vmul.f32 %v1782, 5.9604645e-08
        %v1847 = vmul.f32 %v1783, 5.9604645e-08
        %v1848 = vmul.f32 %v1784, 5.9604645e-08
        %v1849 = vmul.f32 %v1785, 5.9604645e-08
        %v1850 = vmul.f32 %v1786, 5.9604645e-08
        %v1851 = vmul.f32 %v1787, 5.9604645e-08
        %v1852 = vmul.f32 %v1788, 5.9604645e-08
        %v1853 = vmul.f32 %v1789, 5.9604645e-08
        %v1854 = vlog2.pop %v1790
        %v1855 = vmul.f32 %v1854, 0.6931472
        %v1856 = vlog2.pop %v1791
        %v1857 = vmul.f32 %v1856, 0.6931472
        %v1858 = vlog2.pop %v1792
        %v1859 = vmul.f32 %v1858, 0.6931472
        %v1860 = vlog2.pop %v1793
        %v1861 = vmul.f32 %v1860, 0.6931472
        %v1862 = vlog2.pop %v1794
        %v1863 = vmul.f32 %v1862, 0.6931472
        %v1864 = vlog2.pop %v1795
        %v1865 = vmul.f32 %v1864, 0.6931472
        %v1866 = vlog2.pop %v1796
        %v1867 = vmul.f32 %v1866, 0.6931472
        %v1868 = vlog2.pop %v1797
        %v1869 = vmul.f32 %v1868, 0.6931472
        %v1870 = vlog2.pop %v1798
        %v1871 = vmul.f32 %v1870, 0.6931472
        %v1872 = vlog2.pop %v1799
        %v1873 = vmul.f32 %v1872, 0.6931472
        %v1874 = vlog2.pop %v1800
        %v1875 = vmul.f32 %v1874, 0.6931472
        %v1876 = vlog2.pop %v1801
        %v1877 = vmul.f32 %v1876, 0.6931472
        %v1878 = vlog2.pop %v1802
        %v1879 = vmul.f32 %v1878, 0.6931472
        %v1880 = vlog2.pop %v1803
        %v1881 = vmul.f32 %v1880, 0.6931472
        %v1882 = vlog2.pop %v1804
        %v1883 = vmul.f32 %v1882, 0.6931472
        %v1884 = vlog2.pop %v1805
        %v1885 = vmul.f32 %v1884, 0.6931472
        %v1886 = vlog2.pop %v1806
        %v1887 = vmul.f32 %v1886, 0.6931472
        %v1888 = vlog2.pop %v1807
        %v1889 = vmul.f32 %v1888, 0.6931472
        %v1890 = vlog2.pop %v1808
        %v1891 = vmul.f32 %v1890, 0.6931472
        %v1892 = vlog2.pop %v1809
        %v1893 = vmul.f32 %v1892, 0.6931472
        %v1894 = vlog2.pop %v1810
        %v1895 = vmul.f32 %v1894, 0.6931472
        %v1896 = vlog2.pop %v1811
        %v1897 = vmul.f32 %v1896, 0.6931472
        %v1898 = vlog2.pop %v1812
        %v1899 = vmul.f32 %v1898, 0.6931472
        %v1900 = vlog2.pop %v1813
        %v1901 = vmul.f32 %v1900, 0.6931472
        %v1902 = vlog2.pop %v1814
        %v1903 = vmul.f32 %v1902, 0.6931472
        %v1904 = vlog2.pop %v1815
        %v1905 = vmul.f32 %v1904, 0.6931472
        %v1906 = vlog2.pop %v1816
        %v1907 = vmul.f32 %v1906, 0.6931472
        %v1908 = vlog2.pop %v1817
        %v1909 = vmul.f32 %v1908, 0.6931472
        %v1910 = vlog2.pop %v1818
        %v1911 = vmul.f32 %v1910, 0.6931472
        %v1912 = vlog2.pop %v1819
        %v1913 = vmul.f32 %v1912, 0.6931472
        %v1914 = vlog2.pop %v1820
        %v1915 = vmul.f32 %v1914, 0.6931472
        %v1916 = vlog2.pop %v1821
        %v1917 = vmul.f32 %v1916, 0.6931472
        %v1918 = vlog2.pop %v1822
        %v1919 = vmul.f32 %v1918, 0.6931472
        %v1920 = vlog2.pop %v1823
        %v1921 = vmul.f32 %v1920, 0.6931472
        %v1922 = vlog2.pop %v1824
        %v1923 = vmul.f32 %v1922, 0.6931472
        %v1924 = vlog2.pop %v1825
        %v1925 = vmul.f32 %v1924, 0.6931472
        %v1926 = vlog2.pop %v1826
        %v1927 = vmul.f32 %v1926, 0.6931472
        %v1928 = vlog2.pop %v1827
        %v1929 = vmul.f32 %v1928, 0.6931472
        %v1930 = vlog2.pop %v1828
        %v1931 = vmul.f32 %v1930, 0.6931472
        %v1932 = vlog2.pop %v1829
        %v1933 = vmul.f32 %v1932, 0.6931472
        %v1934 = vlog2.pop %v1830
        %v1935 = vmul.f32 %v1934, 0.6931472
        %v1936 = vlog2.pop %v1831
        %v1937 = vmul.f32 %v1936, 0.6931472
        %v1938 = vlog2.pop %v1832
        %v1939 = vmul.f32 %v1938, 0.6931472
        %v1940 = vlog2.pop %v1833
        %v1941 = vmul.f32 %v1940, 0.6931472
        %v1942 = vlog2.pop %v1834
        %v1943 = vmul.f32 %v1942, 0.6931472
        %v1944 = vlog2.pop %v1835
        %v1945 = vmul.f32 %v1944, 0.6931472
        %v1946 = vlog2.pop %v1836
        %v1947 = vmul.f32 %v1946, 0.6931472
        %v1948 = vlog2.pop %v1837
        %v1949 = vmul.f32 %v1948, 0.6931472
        %v1950 = vlog2.pop %v1838
        %v1951 = vmul.f32 %v1950, 0.6931472
        %v1952 = vlog2.pop %v1839
        %v1953 = vmul.f32 %v1952, 0.6931472
        %v1954 = vlog2.pop %v1840
        %v1955 = vmul.f32 %v1954, 0.6931472
        %v1956 = vlog2.pop %v1841
        %v1957 = vmul.f32 %v1956, 0.6931472
        %v1958 = vlog2.pop %v1842
        %v1959 = vmul.f32 %v1958, 0.6931472
        %v1960 = vlog2.pop %v1843
        %v1961 = vmul.f32 %v1960, 0.6931472
        %v1962 = vlog2.pop %v1844
        %v1963 = vmul.f32 %v1962, 0.6931472
        %v1964 = vlog2.pop %v1845
        %v1965 = vmul.f32 %v1964, 0.6931472
        %v1966 = vlog2.pop %v1846
        %v1967 = vmul.f32 %v1966, 0.6931472
        %v1968 = vlog2.pop %v1847
        %v1969 = vmul.f32 %v1968, 0.6931472
        %v1970 = vlog2.pop %v1848
        %v1971 = vmul.f32 %v1970, 0.6931472
        %v1972 = vlog2.pop %v1849
        %v1973 = vmul.f32 %v1972, 0.6931472
        %v1974 = vlog2.pop %v1850
        %v1975 = vmul.f32 %v1974, 0.6931472
        %v1976 = vlog2.pop %v1851
        %v1977 = vmul.f32 %v1976, 0.6931472
        %v1978 = vlog2.pop %v1852
        %v1979 = vmul.f32 %v1978, 0.6931472
        %v1980 = vlog2.pop %v1853
        %v1981 = vmul.f32 %v1980, 0.6931472
        %v1982 = vsub.f32 0.0, %v1855
        %v1983 = vsub.f32 0.0, %v1857
        %v1984 = vsub.f32 0.0, %v1859
        %v1985 = vsub.f32 0.0, %v1861
        %v1986 = vsub.f32 0.0, %v1863
        %v1987 = vsub.f32 0.0, %v1865
        %v1988 = vsub.f32 0.0, %v1867
        %v1989 = vsub.f32 0.0, %v1869
        %v1990 = vsub.f32 0.0, %v1871
        %v1991 = vsub.f32 0.0, %v1873
        %v1992 = vsub.f32 0.0, %v1875
        %v1993 = vsub.f32 0.0, %v1877
        %v1994 = vsub.f32 0.0, %v1879
        %v1995 = vsub.f32 0.0, %v1881
        %v1996 = vsub.f32 0.0, %v1883
        %v1997 = vsub.f32 0.0, %v1885
        %v1998 = vsub.f32 0.0, %v1887
        %v1999 = vsub.f32 0.0, %v1889
        %v2000 = vsub.f32 0.0, %v1891
        %v2001 = vsub.f32 0.0, %v1893
        %v2002 = vsub.f32 0.0, %v1895
        %v2003 = vsub.f32 0.0, %v1897
        %v2004 = vsub.f32 0.0, %v1899
        %v2005 = vsub.f32 0.0, %v1901
        %v2006 = vsub.f32 0.0, %v1903
        %v2007 = vsub.f32 0.0, %v1905
        %v2008 = vsub.f32 0.0, %v1907
        %v2009 = vsub.f32 0.0, %v1909
        %v2010 = vsub.f32 0.0, %v1911
        %v2011 = vsub.f32 0.0, %v1913
        %v2012 = vsub.f32 0.0, %v1915
        %v2013 = vsub.f32 0.0, %v1917
        %v2014 = vsub.f32 0.0, %v1919
        %v2015 = vsub.f32 0.0, %v1921
        %v2016 = vsub.f32 0.0, %v1923
        %v2017 = vsub.f32 0.0, %v1925
        %v2018 = vsub.f32 0.0, %v1927
        %v2019 = vsub.f32 0.0, %v1929
        %v2020 = vsub.f32 0.0, %v1931
        %v2021 = vsub.f32 0.0, %v1933
        %v2022 = vsub.f32 0.0, %v1935
        %v2023 = vsub.f32 0.0, %v1937
        %v2024 = vsub.f32 0.0, %v1939
        %v2025 = vsub.f32 0.0, %v1941
        %v2026 = vsub.f32 0.0, %v1943
        %v2027 = vsub.f32 0.0, %v1945
        %v2028 = vsub.f32 0.0, %v1947
        %v2029 = vsub.f32 0.0, %v1949
        %v2030 = vsub.f32 0.0, %v1951
        %v2031 = vsub.f32 0.0, %v1953
        %v2032 = vsub.f32 0.0, %v1955
        %v2033 = vsub.f32 0.0, %v1957
        %v2034 = vsub.f32 0.0, %v1959
        %v2035 = vsub.f32 0.0, %v1961
        %v2036 = vsub.f32 0.0, %v1963
        %v2037 = vsub.f32 0.0, %v1965
        %v2038 = vsub.f32 0.0, %v1967
        %v2039 = vsub.f32 0.0, %v1969
        %v2040 = vsub.f32 0.0, %v1971
        %v2041 = vsub.f32 0.0, %v1973
        %v2042 = vsub.f32 0.0, %v1975
        %v2043 = vsub.f32 0.0, %v1977
        %v2044 = vsub.f32 0.0, %v1979
        %v2045 = vsub.f32 0.0, %v1981
        %v2046 = vmax.f32 %v660, %v692
        %v2047 = vmax.f32 %v661, %v693
        %v2048 = vmax.f32 %v662, %v694
        %v2049 = vmax.f32 %v663, %v695
        %v2050 = vmax.f32 %v664, %v696
        %v2051 = vmax.f32 %v665, %v697
        %v2052 = vmax.f32 %v666, %v698
        %v2053 = vmax.f32 %v667, %v699
        %v2054 = vmax.f32 %v668, %v700
        %v2055 = vmax.f32 %v669, %v701
        %v2056 = vmax.f32 %v670, %v702
        %v2057 = vmax.f32 %v671, %v703
        %v2058 = vmax.f32 %v672, %v704
        %v2059 = vmax.f32 %v673, %v705
        %v2060 = vmax.f32 %v674, %v706
        %v2061 = vmax.f32 %v675, %v707
        %v2062 = vmax.f32 %v676, %v708
        %v2063 = vmax.f32 %v677, %v709
        %v2064 = vmax.f32 %v678, %v710
        %v2065 = vmax.f32 %v679, %v711
        %v2066 = vmax.f32 %v680, %v712
        %v2067 = vmax.f32 %v681, %v713
        %v2068 = vmax.f32 %v682, %v714
        %v2069 = vmax.f32 %v683, %v715
        %v2070 = vmax.f32 %v684, %v716
        %v2071 = vmax.f32 %v685, %v717
        %v2072 = vmax.f32 %v686, %v718
        %v2073 = vmax.f32 %v687, %v719
        %v2074 = vmax.f32 %v688, %v720
        %v2075 = vmax.f32 %v689, %v721
        %v2076 = vmax.f32 %v690, %v722
        %v2077 = vmax.f32 %v691, %v723
        %v2078 = vsub.f32 %v660, %v2046
        %v2079 = vsub.f32 %v661, %v2047
        %v2080 = vsub.f32 %v662, %v2048
        %v2081 = vsub.f32 %v663, %v2049
        %v2082 = vsub.f32 %v664, %v2050
        %v2083 = vsub.f32 %v665, %v2051
        %v2084 = vsub.f32 %v666, %v2052
        %v2085 = vsub.f32 %v667, %v2053
        %v2086 = vsub.f32 %v668, %v2054
        %v2087 = vsub.f32 %v669, %v2055
        %v2088 = vsub.f32 %v670, %v2056
        %v2089 = vsub.f32 %v671, %v2057
        %v2090 = vsub.f32 %v672, %v2058
        %v2091 = vsub.f32 %v673, %v2059
        %v2092 = vsub.f32 %v674, %v2060
        %v2093 = vsub.f32 %v675, %v2061
        %v2094 = vsub.f32 %v676, %v2062
        %v2095 = vsub.f32 %v677, %v2063
        %v2096 = vsub.f32 %v678, %v2064
        %v2097 = vsub.f32 %v679, %v2065
        %v2098 = vsub.f32 %v680, %v2066
        %v2099 = vsub.f32 %v681, %v2067
        %v2100 = vsub.f32 %v682, %v2068
        %v2101 = vsub.f32 %v683, %v2069
        %v2102 = vsub.f32 %v684, %v2070
        %v2103 = vsub.f32 %v685, %v2071
        %v2104 = vsub.f32 %v686, %v2072
        %v2105 = vsub.f32 %v687, %v2073
        %v2106 = vsub.f32 %v688, %v2074
        %v2107 = vsub.f32 %v689, %v2075
        %v2108 = vsub.f32 %v690, %v2076
        %v2109 = vsub.f32 %v691, %v2077
        %v2110 = vsub.f32 %v692, %v2046
        %v2111 = vsub.f32 %v693, %v2047
        %v2112 = vsub.f32 %v694, %v2048
        %v2113 = vsub.f32 %v695, %v2049
        %v2114 = vsub.f32 %v696, %v2050
        %v2115 = vsub.f32 %v697, %v2051
        %v2116 = vsub.f32 %v698, %v2052
        %v2117 = vsub.f32 %v699, %v2053
        %v2118 = vsub.f32 %v700, %v2054
        %v2119 = vsub.f32 %v701, %v2055
        %v2120 = vsub.f32 %v702, %v2056
        %v2121 = vsub.f32 %v703, %v2057
        %v2122 = vsub.f32 %v704, %v2058
        %v2123 = vsub.f32 %v705, %v2059
        %v2124 = vsub.f32 %v706, %v2060
        %v2125 = vsub.f32 %v707, %v2061
        %v2126 = vsub.f32 %v708, %v2062
        %v2127 = vsub.f32 %v709, %v2063
        %v2128 = vsub.f32 %v710, %v2064
        %v2129 = vsub.f32 %v711, %v2065
        %v2130 = vsub.f32 %v712, %v2066
        %v2131 = vsub.f32 %v713, %v2067
        %v2132 = vsub.f32 %v714, %v2068
        %v2133 = vsub.f32 %v715, %v2069
        %v2134 = vsub.f32 %v716, %v2070
        %v2135 = vsub.f32 %v717, %v2071
        %v2136 = vsub.f32 %v718, %v2072
        %v2137 = vsub.f32 %v719, %v2073
        %v2138 = vsub.f32 %v720, %v2074
        %v2139 = vsub.f32 %v721, %v2075
        %v2140 = vsub.f32 %v722, %v2076
        %v2141 = vsub.f32 %v723, %v2077
        %v2142 = vmul.f32 %v2078, 1.442695
        %v2143 = vpow.pop %v2142
        %v2144 = vmul.f32 %v2079, 1.442695
        %v2145 = vpow.pop %v2144
        %v2146 = vmul.f32 %v2080, 1.442695
        %v2147 = vpow.pop %v2146
        %v2148 = vmul.f32 %v2081, 1.442695
        %v2149 = vpow.pop %v2148
        %v2150 = vmul.f32 %v2082, 1.442695
        %v2151 = vpow.pop %v2150
        %v2152 = vmul.f32 %v2083, 1.442695
        %v2153 = vpow.pop %v2152
        %v2154 = vmul.f32 %v2084, 1.442695
        %v2155 = vpow.pop %v2154
        %v2156 = vmul.f32 %v2085, 1.442695
        %v2157 = vpow.pop %v2156
        %v2158 = vmul.f32 %v2086, 1.442695
        %v2159 = vpow.pop %v2158
        %v2160 = vmul.f32 %v2087, 1.442695
        %v2161 = vpow.pop %v2160
        %v2162 = vmul.f32 %v2088, 1.442695
        %v2163 = vpow.pop %v2162
        %v2164 = vmul.f32 %v2089, 1.442695
        %v2165 = vpow.pop %v2164
        %v2166 = vmul.f32 %v2090, 1.442695
        %v2167 = vpow.pop %v2166
        %v2168 = vmul.f32 %v2091, 1.442695
        %v2169 = vpow.pop %v2168
        %v2170 = vmul.f32 %v2092, 1.442695
        %v2171 = vpow.pop %v2170
        %v2172 = vmul.f32 %v2093, 1.442695
        %v2173 = vpow.pop %v2172
        %v2174 = vmul.f32 %v2094, 1.442695
        %v2175 = vpow.pop %v2174
        %v2176 = vmul.f32 %v2095, 1.442695
        %v2177 = vpow.pop %v2176
        %v2178 = vmul.f32 %v2096, 1.442695
        %v2179 = vpow.pop %v2178
        %v2180 = vmul.f32 %v2097, 1.442695
        %v2181 = vpow.pop %v2180
        %v2182 = vmul.f32 %v2098, 1.442695
        %v2183 = vpow.pop %v2182
        %v2184 = vmul.f32 %v2099, 1.442695
        %v2185 = vpow.pop %v2184
        %v2186 = vmul.f32 %v2100, 1.442695
        %v2187 = vpow.pop %v2186
        %v2188 = vmul.f32 %v2101, 1.442695
        %v2189 = vpow.pop %v2188
        %v2190 = vmul.f32 %v2102, 1.442695
        %v2191 = vpow.pop %v2190
        %v2192 = vmul.f32 %v2103, 1.442695
        %v2193 = vpow.pop %v2192
        %v2194 = vmul.f32 %v2104, 1.442695
        %v2195 = vpow.pop %v2194
        %v2196 = vmul.f32 %v2105, 1.442695
        %v2197 = vpow.pop %v2196
        %v2198 = vmul.f32 %v2106, 1.442695
        %v2199 = vpow.pop %v2198
        %v2200 = vmul.f32 %v2107, 1.442695
        %v2201 = vpow.pop %v2200
        %v2202 = vmul.f32 %v2108, 1.442695
        %v2203 = vpow.pop %v2202
        %v2204 = vmul.f32 %v2109, 1.442695
        %v2205 = vpow.pop %v2204
        %v2206 = vmul.f32 %v2110, 1.442695
        %v2207 = vpow.pop %v2206
        %v2208 = vmul.f32 %v2111, 1.442695
        %v2209 = vpow.pop %v2208
        %v2210 = vmul.f32 %v2112, 1.442695
        %v2211 = vpow.pop %v2210
        %v2212 = vmul.f32 %v2113, 1.442695
        %v2213 = vpow.pop %v2212
        %v2214 = vmul.f32 %v2114, 1.442695
        %v2215 = vpow.pop %v2214
        %v2216 = vmul.f32 %v2115, 1.442695
        %v2217 = vpow.pop %v2216
        %v2218 = vmul.f32 %v2116, 1.442695
        %v2219 = vpow.pop %v2218
        %v2220 = vmul.f32 %v2117, 1.442695
        %v2221 = vpow.pop %v2220
        %v2222 = vmul.f32 %v2118, 1.442695
        %v2223 = vpow.pop %v2222
        %v2224 = vmul.f32 %v2119, 1.442695
        %v2225 = vpow.pop %v2224
        %v2226 = vmul.f32 %v2120, 1.442695
        %v2227 = vpow.pop %v2226
        %v2228 = vmul.f32 %v2121, 1.442695
        %v2229 = vpow.pop %v2228
        %v2230 = vmul.f32 %v2122, 1.442695
        %v2231 = vpow.pop %v2230
        %v2232 = vmul.f32 %v2123, 1.442695
        %v2233 = vpow.pop %v2232
        %v2234 = vmul.f32 %v2124, 1.442695
        %v2235 = vpow.pop %v2234
        %v2236 = vmul.f32 %v2125, 1.442695
        %v2237 = vpow.pop %v2236
        %v2238 = vmul.f32 %v2126, 1.442695
        %v2239 = vpow.pop %v2238
        %v2240 = vmul.f32 %v2127, 1.442695
        %v2241 = vpow.pop %v2240
        %v2242 = vmul.f32 %v2128, 1.442695
        %v2243 = vpow.pop %v2242
        %v2244 = vmul.f32 %v2129, 1.442695
        %v2245 = vpow.pop %v2244
        %v2246 = vmul.f32 %v2130, 1.442695
        %v2247 = vpow.pop %v2246
        %v2248 = vmul.f32 %v2131, 1.442695
        %v2249 = vpow.pop %v2248
        %v2250 = vmul.f32 %v2132, 1.442695
        %v2251 = vpow.pop %v2250
        %v2252 = vmul.f32 %v2133, 1.442695
        %v2253 = vpow.pop %v2252
        %v2254 = vmul.f32 %v2134, 1.442695
        %v2255 = vpow.pop %v2254
        %v2256 = vmul.f32 %v2135, 1.442695
        %v2257 = vpow.pop %v2256
        %v2258 = vmul.f32 %v2136, 1.442695
        %v2259 = vpow.pop %v2258
        %v2260 = vmul.f32 %v2137, 1.442695
        %v2261 = vpow.pop %v2260
        %v2262 = vmul.f32 %v2138, 1.442695
        %v2263 = vpow.pop %v2262
        %v2264 = vmul.f32 %v2139, 1.442695
        %v2265 = vpow.pop %v2264
        %v2266 = vmul.f32 %v2140, 1.442695
        %v2267 = vpow.pop %v2266
        %v2268 = vmul.f32 %v2141, 1.442695
        %v2269 = vpow.pop %v2268
        %v2270 = vrcp.pop %v1982
        %v2271 = vmul.f32 %v2143, %v2270
        %v2272 = vrcp.pop %v1983
        %v2273 = vmul.f32 %v2145, %v2272
        %v2274 = vrcp.pop %v1984
        %v2275 = vmul.f32 %v2147, %v2274
        %v2276 = vrcp.pop %v1985
        %v2277 = vmul.f32 %v2149, %v2276
        %v2278 = vrcp.pop %v1986
        %v2279 = vmul.f32 %v2151, %v2278
        %v2280 = vrcp.pop %v1987
        %v2281 = vmul.f32 %v2153, %v2280
        %v2282 = vrcp.pop %v1988
        %v2283 = vmul.f32 %v2155, %v2282
        %v2284 = vrcp.pop %v1989
        %v2285 = vmul.f32 %v2157, %v2284
        %v2286 = vrcp.pop %v1990
        %v2287 = vmul.f32 %v2159, %v2286
        %v2288 = vrcp.pop %v1991
        %v2289 = vmul.f32 %v2161, %v2288
        %v2290 = vrcp.pop %v1992
        %v2291 = vmul.f32 %v2163, %v2290
        %v2292 = vrcp.pop %v1993
        %v2293 = vmul.f32 %v2165, %v2292
        %v2294 = vrcp.pop %v1994
        %v2295 = vmul.f32 %v2167, %v2294
        %v2296 = vrcp.pop %v1995
        %v2297 = vmul.f32 %v2169, %v2296
        %v2298 = vrcp.pop %v1996
        %v2299 = vmul.f32 %v2171, %v2298
        %v2300 = vrcp.pop %v1997
        %v2301 = vmul.f32 %v2173, %v2300
        %v2302 = vrcp.pop %v1998
        %v2303 = vmul.f32 %v2175, %v2302
        %v2304 = vrcp.pop %v1999
        %v2305 = vmul.f32 %v2177, %v2304
        %v2306 = vrcp.pop %v2000
        %v2307 = vmul.f32 %v2179, %v2306
        %v2308 = vrcp.pop %v2001
        %v2309 = vmul.f32 %v2181, %v2308
        %v2310 = vrcp.pop %v2002
        %v2311 = vmul.f32 %v2183, %v2310
        %v2312 = vrcp.pop %v2003
        %v2313 = vmul.f32 %v2185, %v2312
        %v2314 = vrcp.pop %v2004
        %v2315 = vmul.f32 %v2187, %v2314
        %v2316 = vrcp.pop %v2005
        %v2317 = vmul.f32 %v2189, %v2316
        %v2318 = vrcp.pop %v2006
        %v2319 = vmul.f32 %v2191, %v2318
        %v2320 = vrcp.pop %v2007
        %v2321 = vmul.f32 %v2193, %v2320
        %v2322 = vrcp.pop %v2008
        %v2323 = vmul.f32 %v2195, %v2322
        %v2324 = vrcp.pop %v2009
        %v2325 = vmul.f32 %v2197, %v2324
        %v2326 = vrcp.pop %v2010
        %v2327 = vmul.f32 %v2199, %v2326
        %v2328 = vrcp.pop %v2011
        %v2329 = vmul.f32 %v2201, %v2328
        %v2330 = vrcp.pop %v2012
        %v2331 = vmul.f32 %v2203, %v2330
        %v2332 = vrcp.pop %v2013
        %v2333 = vmul.f32 %v2205, %v2332
        %v2334 = vrcp.pop %v2014
        %v2335 = vmul.f32 %v2207, %v2334
        %v2336 = vrcp.pop %v2015
        %v2337 = vmul.f32 %v2209, %v2336
        %v2338 = vrcp.pop %v2016
        %v2339 = vmul.f32 %v2211, %v2338
        %v2340 = vrcp.pop %v2017
        %v2341 = vmul.f32 %v2213, %v2340
        %v2342 = vrcp.pop %v2018
        %v2343 = vmul.f32 %v2215, %v2342
        %v2344 = vrcp.pop %v2019
        %v2345 = vmul.f32 %v2217, %v2344
        %v2346 = vrcp.pop %v2020
        %v2347 = vmul.f32 %v2219, %v2346
        %v2348 = vrcp.pop %v2021
        %v2349 = vmul.f32 %v2221, %v2348
        %v2350 = vrcp.pop %v2022
        %v2351 = vmul.f32 %v2223, %v2350
        %v2352 = vrcp.pop %v2023
        %v2353 = vmul.f32 %v2225, %v2352
        %v2354 = vrcp.pop %v2024
        %v2355 = vmul.f32 %v2227, %v2354
        %v2356 = vrcp.pop %v2025
        %v2357 = vmul.f32 %v2229, %v2356
        %v2358 = vrcp.pop %v2026
        %v2359 = vmul.f32 %v2231, %v2358
        %v2360 = vrcp.pop %v2027
        %v2361 = vmul.f32 %v2233, %v2360
        %v2362 = vrcp.pop %v2028
        %v2363 = vmul.f32 %v2235, %v2362
        %v2364 = vrcp.pop %v2029
        %v2365 = vmul.f32 %v2237, %v2364
        %v2366 = vrcp.pop %v2030
        %v2367 = vmul.f32 %v2239, %v2366
        %v2368 = vrcp.pop %v2031
        %v2369 = vmul.f32 %v2241, %v2368
        %v2370 = vrcp.pop %v2032
        %v2371 = vmul.f32 %v2243, %v2370
        %v2372 = vrcp.pop %v2033
        %v2373 = vmul.f32 %v2245, %v2372
        %v2374 = vrcp.pop %v2034
        %v2375 = vmul.f32 %v2247, %v2374
        %v2376 = vrcp.pop %v2035
        %v2377 = vmul.f32 %v2249, %v2376
        %v2378 = vrcp.pop %v2036
        %v2379 = vmul.f32 %v2251, %v2378
        %v2380 = vrcp.pop %v2037
        %v2381 = vmul.f32 %v2253, %v2380
        %v2382 = vrcp.pop %v2038
        %v2383 = vmul.f32 %v2255, %v2382
        %v2384 = vrcp.pop %v2039
        %v2385 = vmul.f32 %v2257, %v2384
        %v2386 = vrcp.pop %v2040
        %v2387 = vmul.f32 %v2259, %v2386
        %v2388 = vrcp.pop %v2041
        %v2389 = vmul.f32 %v2261, %v2388
        %v2390 = vrcp.pop %v2042
        %v2391 = vmul.f32 %v2263, %v2390
        %v2392 = vrcp.pop %v2043
        %v2393 = vmul.f32 %v2265, %v2392
        %v2394 = vrcp.pop %v2044
        %v2395 = vmul.f32 %v2267, %v2394
        %v2396 = vrcp.pop %v2045
        %v2397 = vmul.f32 %v2269, %v2396
        %v2398 = vadd.f32 %v2271, %v2335
        %v2399 = vadd.f32 %v2273, %v2337
        %v2400 = vadd.f32 %v2275, %v2339
        %v2401 = vadd.f32 %v2277, %v2341
        %v2402 = vadd.f32 %v2279, %v2343
        %v2403 = vadd.f32 %v2281, %v2345
        %v2404 = vadd.f32 %v2283, %v2347
        %v2405 = vadd.f32 %v2285, %v2349
        %v2406 = vadd.f32 %v2287, %v2351
        %v2407 = vadd.f32 %v2289, %v2353
        %v2408 = vadd.f32 %v2291, %v2355
        %v2409 = vadd.f32 %v2293, %v2357
        %v2410 = vadd.f32 %v2295, %v2359
        %v2411 = vadd.f32 %v2297, %v2361
        %v2412 = vadd.f32 %v2299, %v2363
        %v2413 = vadd.f32 %v2301, %v2365
        %v2414 = vadd.f32 %v2303, %v2367
        %v2415 = vadd.f32 %v2305, %v2369
        %v2416 = vadd.f32 %v2307, %v2371
        %v2417 = vadd.f32 %v2309, %v2373
        %v2418 = vadd.f32 %v2311, %v2375
        %v2419 = vadd.f32 %v2313, %v2377
        %v2420 = vadd.f32 %v2315, %v2379
        %v2421 = vadd.f32 %v2317, %v2381
        %v2422 = vadd.f32 %v2319, %v2383
        %v2423 = vadd.f32 %v2321, %v2385
        %v2424 = vadd.f32 %v2323, %v2387
        %v2425 = vadd.f32 %v2325, %v2389
        %v2426 = vadd.f32 %v2327, %v2391
        %v2427 = vadd.f32 %v2329, %v2393
        %v2428 = vadd.f32 %v2331, %v2395
        %v2429 = vadd.f32 %v2333, %v2397
        %v2430 = vrcp.pop %v2398
        %v2431 = vmul.f32 1.0, %v2430
        %v2432 = vrcp.pop %v2399
        %v2433 = vmul.f32 1.0, %v2432
        %v2434 = vrcp.pop %v2400
        %v2435 = vmul.f32 1.0, %v2434
        %v2436 = vrcp.pop %v2401
        %v2437 = vmul.f32 1.0, %v2436
        %v2438 = vrcp.pop %v2402
        %v2439 = vmul.f32 1.0, %v2438
        %v2440 = vrcp.pop %v2403
        %v2441 = vmul.f32 1.0, %v2440
        %v2442 = vrcp.pop %v2404
        %v2443 = vmul.f32 1.0, %v2442
        %v2444 = vrcp.pop %v2405
        %v2445 = vmul.f32 1.0, %v2444
        %v2446 = vrcp.pop %v2406
        %v2447 = vmul.f32 1.0, %v2446
        %v2448 = vrcp.pop %v2407
        %v2449 = vmul.f32 1.0, %v2448
        %v2450 = vrcp.pop %v2408
        %v2451 = vmul.f32 1.0, %v2450
        %v2452 = vrcp.pop %v2409
        %v2453 = vmul.f32 1.0, %v2452
        %v2454 = vrcp.pop %v2410
        %v2455 = vmul.f32 1.0, %v2454
        %v2456 = vrcp.pop %v2411
        %v2457 = vmul.f32 1.0, %v2456
        %v2458 = vrcp.pop %v2412
        %v2459 = vmul.f32 1.0, %v2458
        %v2460 = vrcp.pop %v2413
        %v2461 = vmul.f32 1.0, %v2460
        %v2462 = vrcp.pop %v2414
        %v2463 = vmul.f32 1.0, %v2462
        %v2464 = vrcp.pop %v2415
        %v2465 = vmul.f32 1.0, %v2464
        %v2466 = vrcp.pop %v2416
        %v2467 = vmul.f32 1.0, %v2466
        %v2468 = vrcp.pop %v2417
        %v2469 = vmul.f32 1.0, %v2468
        %v2470 = vrcp.pop %v2418
        %v2471 = vmul.f32 1.0, %v2470
        %v2472 = vrcp.pop %v2419
        %v2473 = vmul.f32 1.0, %v2472
        %v2474 = vrcp.pop %v2420
        %v2475 = vmul.f32 1.0, %v2474
        %v2476 = vrcp.pop %v2421
        %v2477 = vmul.f32 1.0, %v2476
        %v2478 = vrcp.pop %v2422
        %v2479 = vmul.f32 1.0, %v2478
        %v2480 = vrcp.pop %v2423
        %v2481 = vmul.f32 1.0, %v2480
        %v2482 = vrcp.pop %v2424
        %v2483 = vmul.f32 1.0, %v2482
        %v2484 = vrcp.pop %v2425
        %v2485 = vmul.f32 1.0, %v2484
        %v2486 = vrcp.pop %v2426
        %v2487 = vmul.f32 1.0, %v2486
        %v2488 = vrcp.pop %v2427
        %v2489 = vmul.f32 1.0, %v2488
        %v2490 = vrcp.pop %v2428
        %v2491 = vmul.f32 1.0, %v2490
        %v2492 = vrcp.pop %v2429
        %v2493 = vmul.f32 1.0, %v2492
        %v2494 = vmul.f32 %v2271, %v2431
        %v2495 = vmul.f32 %v2273, %v2433
        %v2496 = vmul.f32 %v2275, %v2435
        %v2497 = vmul.f32 %v2277, %v2437
        %v2498 = vmul.f32 %v2279, %v2439
        %v2499 = vmul.f32 %v2281, %v2441
        %v2500 = vmul.f32 %v2283, %v2443
        %v2501 = vmul.f32 %v2285, %v2445
        %v2502 = vmul.f32 %v2287, %v2447
        %v2503 = vmul.f32 %v2289, %v2449
        %v2504 = vmul.f32 %v2291, %v2451
        %v2505 = vmul.f32 %v2293, %v2453
        %v2506 = vmul.f32 %v2295, %v2455
        %v2507 = vmul.f32 %v2297, %v2457
        %v2508 = vmul.f32 %v2299, %v2459
        %v2509 = vmul.f32 %v2301, %v2461
        %v2510 = vmul.f32 %v2303, %v2463
        %v2511 = vmul.f32 %v2305, %v2465
        %v2512 = vmul.f32 %v2307, %v2467
        %v2513 = vmul.f32 %v2309, %v2469
        %v2514 = vmul.f32 %v2311, %v2471
        %v2515 = vmul.f32 %v2313, %v2473
        %v2516 = vmul.f32 %v2315, %v2475
        %v2517 = vmul.f32 %v2317, %v2477
        %v2518 = vmul.f32 %v2319, %v2479
        %v2519 = vmul.f32 %v2321, %v2481
        %v2520 = vmul.f32 %v2323, %v2483
        %v2521 = vmul.f32 %v2325, %v2485
        %v2522 = vmul.f32 %v2327, %v2487
        %v2523 = vmul.f32 %v2329, %v2489
        %v2524 = vmul.f32 %v2331, %v2491
        %v2525 = vmul.f32 %v2333, %v2493
        %v2526 = vmul.f32 %v2335, %v2431
        %v2527 = vmul.f32 %v2337, %v2433
        %v2528 = vmul.f32 %v2339, %v2435
        %v2529 = vmul.f32 %v2341, %v2437
        %v2530 = vmul.f32 %v2343, %v2439
        %v2531 = vmul.f32 %v2345, %v2441
        %v2532 = vmul.f32 %v2347, %v2443
        %v2533 = vmul.f32 %v2349, %v2445
        %v2534 = vmul.f32 %v2351, %v2447
        %v2535 = vmul.f32 %v2353, %v2449
        %v2536 = vmul.f32 %v2355, %v2451
        %v2537 = vmul.f32 %v2357, %v2453
        %v2538 = vmul.f32 %v2359, %v2455
        %v2539 = vmul.f32 %v2361, %v2457
        %v2540 = vmul.f32 %v2363, %v2459
        %v2541 = vmul.f32 %v2365, %v2461
        %v2542 = vmul.f32 %v2367, %v2463
        %v2543 = vmul.f32 %v2369, %v2465
        %v2544 = vmul.f32 %v2371, %v2467
        %v2545 = vmul.f32 %v2373, %v2469
        %v2546 = vmul.f32 %v2375, %v2471
        %v2547 = vmul.f32 %v2377, %v2473
        %v2548 = vmul.f32 %v2379, %v2475
        %v2549 = vmul.f32 %v2381, %v2477
        %v2550 = vmul.f32 %v2383, %v2479
        %v2551 = vmul.f32 %v2385, %v2481
        %v2552 = vmul.f32 %v2387, %v2483
        %v2553 = vmul.f32 %v2389, %v2485
        %v2554 = vmul.f32 %v2391, %v2487
        %v2555 = vmul.f32 %v2393, %v2489
        %v2556 = vmul.f32 %v2395, %v2491
        %v2557 = vmul.f32 %v2397, %v2493
        %v2558 = vld [vmem:[%s493] sm:$0xf]
        %v2559 = vld [vmem:[%s493 + $0x4] sm:$0xf]
        %v2560 = vld [vmem:[%s493 + $0x8] sm:$0xf]
        %v2561 = vld [vmem:[%s493 + $0xc] sm:$0xf]
        %v2562 = vld [vmem:[%s493 + $0x10] sm:$0xf]
        %v2563 = vld [vmem:[%s493 + $0x14] sm:$0xf]
        %v2564 = vld [vmem:[%s493 + $0x18] sm:$0xf]
        %v2565 = vld [vmem:[%s493 + $0x1c] sm:$0xf]
        %v2566 = vld [vmem:[%s493 + $0x20] sm:$0xf]
        %v2567 = vld [vmem:[%s493 + $0x24] sm:$0xf]
        %v2568 = vld [vmem:[%s493 + $0x28] sm:$0xf]
        %v2569 = vld [vmem:[%s493 + $0x2c] sm:$0xf]
        %v2570 = vld [vmem:[%s493 + $0x30] sm:$0xf]
        %v2571 = vld [vmem:[%s493 + $0x34] sm:$0xf]
        %v2572 = vld [vmem:[%s493 + $0x38] sm:$0xf]
        %v2573 = vld [vmem:[%s493 + $0x3c] sm:$0xf]
        %v2574 = vld [vmem:[%s493 + $0x40] sm:$0xf]
        %v2575 = vld [vmem:[%s493 + $0x44] sm:$0xf]
        %v2576 = vld [vmem:[%s493 + $0x48] sm:$0xf]
        %v2577 = vld [vmem:[%s493 + $0x4c] sm:$0xf]
        %v2578 = vld [vmem:[%s493 + $0x50] sm:$0xf]
        %v2579 = vld [vmem:[%s493 + $0x54] sm:$0xf]
        %v2580 = vld [vmem:[%s493 + $0x58] sm:$0xf]
        %v2581 = vld [vmem:[%s493 + $0x5c] sm:$0xf]
        %v2582 = vld [vmem:[%s493 + $0x60] sm:$0xf]
        %v2583 = vld [vmem:[%s493 + $0x64] sm:$0xf]
        %v2584 = vld [vmem:[%s493 + $0x68] sm:$0xf]
        %v2585 = vld [vmem:[%s493 + $0x6c] sm:$0xf]
        %v2586 = vld [vmem:[%s493 + $0x70] sm:$0xf]
        %v2587 = vld [vmem:[%s493 + $0x74] sm:$0xf]
        %v2588 = vld [vmem:[%s493 + $0x78] sm:$0xf]
        %v2589 = vld [vmem:[%s493 + $0x7c] sm:$0xf]
        %v2590 = vld [vmem:[%s493 + $0x80] sm:$0xf]
        %v2591 = vld [vmem:[%s493 + $0x84] sm:$0xf]
        %v2592 = vld [vmem:[%s493 + $0x88] sm:$0xf]
        %v2593 = vld [vmem:[%s493 + $0x8c] sm:$0xf]
        %v2594 = vld [vmem:[%s493 + $0x90] sm:$0xf]
        %v2595 = vld [vmem:[%s493 + $0x94] sm:$0xf]
        %v2596 = vld [vmem:[%s493 + $0x98] sm:$0xf]
        %v2597 = vld [vmem:[%s493 + $0x9c] sm:$0xf]
        %v2598 = vld [vmem:[%s493 + $0xa0] sm:$0xf]
        %v2599 = vld [vmem:[%s493 + $0xa4] sm:$0xf]
        %v2600 = vld [vmem:[%s493 + $0xa8] sm:$0xf]
        %v2601 = vld [vmem:[%s493 + $0xac] sm:$0xf]
        %v2602 = vld [vmem:[%s493 + $0xb0] sm:$0xf]
        %v2603 = vld [vmem:[%s493 + $0xb4] sm:$0xf]
        %v2604 = vld [vmem:[%s493 + $0xb8] sm:$0xf]
        %v2605 = vld [vmem:[%s493 + $0xbc] sm:$0xf]
        %v2606 = vld [vmem:[%s493 + $0xc0] sm:$0xf]
        %v2607 = vld [vmem:[%s493 + $0xc4] sm:$0xf]
        %v2608 = vld [vmem:[%s493 + $0xc8] sm:$0xf]
        %v2609 = vld [vmem:[%s493 + $0xcc] sm:$0xf]
        %v2610 = vld [vmem:[%s493 + $0xd0] sm:$0xf]
        %v2611 = vld [vmem:[%s493 + $0xd4] sm:$0xf]
        %v2612 = vld [vmem:[%s493 + $0xd8] sm:$0xf]
        %v2613 = vld [vmem:[%s493 + $0xdc] sm:$0xf]
        %v2614 = vld [vmem:[%s493 + $0xe0] sm:$0xf]
        %v2615 = vld [vmem:[%s493 + $0xe4] sm:$0xf]
        %v2616 = vld [vmem:[%s493 + $0xe8] sm:$0xf]
        %v2617 = vld [vmem:[%s493 + $0xec] sm:$0xf]
        %v2618 = vld [vmem:[%s493 + $0xf0] sm:$0xf]
        %v2619 = vld [vmem:[%s493 + $0xf4] sm:$0xf]
        %v2620 = vld [vmem:[%s493 + $0xf8] sm:$0xf]
        %v2621 = vld [vmem:[%s493 + $0xfc] sm:$0xf]
        %v2622 = vunpack.c.l.bf16 %v2558
        %v2623 = vunpack.c.l.bf16 %v2559
        %v2624 = vunpack.c.l.bf16 %v2560
        %v2625 = vunpack.c.l.bf16 %v2561
        %v2626 = vunpack.c.l.bf16 %v2562
        %v2627 = vunpack.c.l.bf16 %v2563
        %v2628 = vunpack.c.l.bf16 %v2564
        %v2629 = vunpack.c.l.bf16 %v2565
        %v2630 = vunpack.c.l.bf16 %v2566
        %v2631 = vunpack.c.l.bf16 %v2567
        %v2632 = vunpack.c.l.bf16 %v2568
        %v2633 = vunpack.c.l.bf16 %v2569
        %v2634 = vunpack.c.l.bf16 %v2570
        %v2635 = vunpack.c.l.bf16 %v2571
        %v2636 = vunpack.c.l.bf16 %v2572
        %v2637 = vunpack.c.l.bf16 %v2573
        %v2638 = vunpack.c.l.bf16 %v2574
        %v2639 = vunpack.c.l.bf16 %v2575
        %v2640 = vunpack.c.l.bf16 %v2576
        %v2641 = vunpack.c.l.bf16 %v2577
        %v2642 = vunpack.c.l.bf16 %v2578
        %v2643 = vunpack.c.l.bf16 %v2579
        %v2644 = vunpack.c.l.bf16 %v2580
        %v2645 = vunpack.c.l.bf16 %v2581
        %v2646 = vunpack.c.l.bf16 %v2582
        %v2647 = vunpack.c.l.bf16 %v2583
        %v2648 = vunpack.c.l.bf16 %v2584
        %v2649 = vunpack.c.l.bf16 %v2585
        %v2650 = vunpack.c.l.bf16 %v2586
        %v2651 = vunpack.c.l.bf16 %v2587
        %v2652 = vunpack.c.l.bf16 %v2588
        %v2653 = vunpack.c.l.bf16 %v2589
        %v2654 = vunpack.c.l.bf16 %v2590
        %v2655 = vunpack.c.l.bf16 %v2591
        %v2656 = vunpack.c.l.bf16 %v2592
        %v2657 = vunpack.c.l.bf16 %v2593
        %v2658 = vunpack.c.l.bf16 %v2594
        %v2659 = vunpack.c.l.bf16 %v2595
        %v2660 = vunpack.c.l.bf16 %v2596
        %v2661 = vunpack.c.l.bf16 %v2597
        %v2662 = vunpack.c.l.bf16 %v2598
        %v2663 = vunpack.c.l.bf16 %v2599
        %v2664 = vunpack.c.l.bf16 %v2600
        %v2665 = vunpack.c.l.bf16 %v2601
        %v2666 = vunpack.c.l.bf16 %v2602
        %v2667 = vunpack.c.l.bf16 %v2603
        %v2668 = vunpack.c.l.bf16 %v2604
        %v2669 = vunpack.c.l.bf16 %v2605
        %v2670 = vunpack.c.l.bf16 %v2606
        %v2671 = vunpack.c.l.bf16 %v2607
        %v2672 = vunpack.c.l.bf16 %v2608
        %v2673 = vunpack.c.l.bf16 %v2609
        %v2674 = vunpack.c.l.bf16 %v2610
        %v2675 = vunpack.c.l.bf16 %v2611
        %v2676 = vunpack.c.l.bf16 %v2612
        %v2677 = vunpack.c.l.bf16 %v2613
        %v2678 = vunpack.c.l.bf16 %v2614
        %v2679 = vunpack.c.l.bf16 %v2615
        %v2680 = vunpack.c.l.bf16 %v2616
        %v2681 = vunpack.c.l.bf16 %v2617
        %v2682 = vunpack.c.l.bf16 %v2618
        %v2683 = vunpack.c.l.bf16 %v2619
        %v2684 = vunpack.c.l.bf16 %v2620
        %v2685 = vunpack.c.l.bf16 %v2621
        %v2686 = vmul.f32 %v2622, %v2494
        %v2687 = vmul.f32 %v2623, %v2495
        %v2688 = vmul.f32 %v2624, %v2496
        %v2689 = vmul.f32 %v2625, %v2497
        %v2690 = vmul.f32 %v2626, %v2498
        %v2691 = vmul.f32 %v2627, %v2499
        %v2692 = vmul.f32 %v2628, %v2500
        %v2693 = vmul.f32 %v2629, %v2501
        %v2694 = vmul.f32 %v2630, %v2502
        %v2695 = vmul.f32 %v2631, %v2503
        %v2696 = vmul.f32 %v2632, %v2504
        %v2697 = vmul.f32 %v2633, %v2505
        %v2698 = vmul.f32 %v2634, %v2506
        %v2699 = vmul.f32 %v2635, %v2507
        %v2700 = vmul.f32 %v2636, %v2508
        %v2701 = vmul.f32 %v2637, %v2509
        %v2702 = vmul.f32 %v2638, %v2510
        %v2703 = vmul.f32 %v2639, %v2511
        %v2704 = vmul.f32 %v2640, %v2512
        %v2705 = vmul.f32 %v2641, %v2513
        %v2706 = vmul.f32 %v2642, %v2514
        %v2707 = vmul.f32 %v2643, %v2515
        %v2708 = vmul.f32 %v2644, %v2516
        %v2709 = vmul.f32 %v2645, %v2517
        %v2710 = vmul.f32 %v2646, %v2518
        %v2711 = vmul.f32 %v2647, %v2519
        %v2712 = vmul.f32 %v2648, %v2520
        %v2713 = vmul.f32 %v2649, %v2521
        %v2714 = vmul.f32 %v2650, %v2522
        %v2715 = vmul.f32 %v2651, %v2523
        %v2716 = vmul.f32 %v2652, %v2524
        %v2717 = vmul.f32 %v2653, %v2525
        %v2718 = vmul.f32 %v2654, %v2526
        %v2719 = vmul.f32 %v2655, %v2527
        %v2720 = vmul.f32 %v2656, %v2528
        %v2721 = vmul.f32 %v2657, %v2529
        %v2722 = vmul.f32 %v2658, %v2530
        %v2723 = vmul.f32 %v2659, %v2531
        %v2724 = vmul.f32 %v2660, %v2532
        %v2725 = vmul.f32 %v2661, %v2533
        %v2726 = vmul.f32 %v2662, %v2534
        %v2727 = vmul.f32 %v2663, %v2535
        %v2728 = vmul.f32 %v2664, %v2536
        %v2729 = vmul.f32 %v2665, %v2537
        %v2730 = vmul.f32 %v2666, %v2538
        %v2731 = vmul.f32 %v2667, %v2539
        %v2732 = vmul.f32 %v2668, %v2540
        %v2733 = vmul.f32 %v2669, %v2541
        %v2734 = vmul.f32 %v2670, %v2542
        %v2735 = vmul.f32 %v2671, %v2543
        %v2736 = vmul.f32 %v2672, %v2544
        %v2737 = vmul.f32 %v2673, %v2545
        %v2738 = vmul.f32 %v2674, %v2546
        %v2739 = vmul.f32 %v2675, %v2547
        %v2740 = vmul.f32 %v2676, %v2548
        %v2741 = vmul.f32 %v2677, %v2549
        %v2742 = vmul.f32 %v2678, %v2550
        %v2743 = vmul.f32 %v2679, %v2551
        %v2744 = vmul.f32 %v2680, %v2552
        %v2745 = vmul.f32 %v2681, %v2553
        %v2746 = vmul.f32 %v2682, %v2554
        %v2747 = vmul.f32 %v2683, %v2555
        %v2748 = vmul.f32 %v2684, %v2556
        %v2749 = vmul.f32 %v2685, %v2557
        %v2750 = vadd.f32 %v2686, %v2718
        %v2751 = vadd.f32 %v2687, %v2719
        %v2752 = vadd.f32 %v2688, %v2720
        %v2753 = vadd.f32 %v2689, %v2721
        %v2754 = vadd.f32 %v2690, %v2722
        %v2755 = vadd.f32 %v2691, %v2723
        %v2756 = vadd.f32 %v2692, %v2724
        %v2757 = vadd.f32 %v2693, %v2725
        %v2758 = vadd.f32 %v2694, %v2726
        %v2759 = vadd.f32 %v2695, %v2727
        %v2760 = vadd.f32 %v2696, %v2728
        %v2761 = vadd.f32 %v2697, %v2729
        %v2762 = vadd.f32 %v2698, %v2730
        %v2763 = vadd.f32 %v2699, %v2731
        %v2764 = vadd.f32 %v2700, %v2732
        %v2765 = vadd.f32 %v2701, %v2733
        %v2766 = vadd.f32 %v2702, %v2734
        %v2767 = vadd.f32 %v2703, %v2735
        %v2768 = vadd.f32 %v2704, %v2736
        %v2769 = vadd.f32 %v2705, %v2737
        %v2770 = vadd.f32 %v2706, %v2738
        %v2771 = vadd.f32 %v2707, %v2739
        %v2772 = vadd.f32 %v2708, %v2740
        %v2773 = vadd.f32 %v2709, %v2741
        %v2774 = vadd.f32 %v2710, %v2742
        %v2775 = vadd.f32 %v2711, %v2743
        %v2776 = vadd.f32 %v2712, %v2744
        %v2777 = vadd.f32 %v2713, %v2745
        %v2778 = vadd.f32 %v2714, %v2746
        %v2779 = vadd.f32 %v2715, %v2747
        %v2780 = vadd.f32 %v2716, %v2748
        %v2781 = vadd.f32 %v2717, %v2749
        %v2782 = vld [vmem:[%s502] sm:$0xf]
        %v2783 = vld [vmem:[%s502 + $0x4] sm:$0xf]
        %v2784 = vld [vmem:[%s502 + $0x8] sm:$0xf]
        %v2785 = vld [vmem:[%s502 + $0xc] sm:$0xf]
        %v2786 = vld [vmem:[%s502 + $0x10] sm:$0xf]
        %v2787 = vld [vmem:[%s502 + $0x14] sm:$0xf]
        %v2788 = vld [vmem:[%s502 + $0x18] sm:$0xf]
        %v2789 = vld [vmem:[%s502 + $0x1c] sm:$0xf]
        %v2790 = vld [vmem:[%s502 + $0x20] sm:$0xf]
        %v2791 = vld [vmem:[%s502 + $0x24] sm:$0xf]
        %v2792 = vld [vmem:[%s502 + $0x28] sm:$0xf]
        %v2793 = vld [vmem:[%s502 + $0x2c] sm:$0xf]
        %v2794 = vld [vmem:[%s502 + $0x30] sm:$0xf]
        %v2795 = vld [vmem:[%s502 + $0x34] sm:$0xf]
        %v2796 = vld [vmem:[%s502 + $0x38] sm:$0xf]
        %v2797 = vld [vmem:[%s502 + $0x3c] sm:$0xf]
        %v2798 = vld [vmem:[%s502 + $0x40] sm:$0xf]
        %v2799 = vld [vmem:[%s502 + $0x44] sm:$0xf]
        %v2800 = vld [vmem:[%s502 + $0x48] sm:$0xf]
        %v2801 = vld [vmem:[%s502 + $0x4c] sm:$0xf]
        %v2802 = vld [vmem:[%s502 + $0x50] sm:$0xf]
        %v2803 = vld [vmem:[%s502 + $0x54] sm:$0xf]
        %v2804 = vld [vmem:[%s502 + $0x58] sm:$0xf]
        %v2805 = vld [vmem:[%s502 + $0x5c] sm:$0xf]
        %v2806 = vld [vmem:[%s502 + $0x60] sm:$0xf]
        %v2807 = vld [vmem:[%s502 + $0x64] sm:$0xf]
        %v2808 = vld [vmem:[%s502 + $0x68] sm:$0xf]
        %v2809 = vld [vmem:[%s502 + $0x6c] sm:$0xf]
        %v2810 = vld [vmem:[%s502 + $0x70] sm:$0xf]
        %v2811 = vld [vmem:[%s502 + $0x74] sm:$0xf]
        %v2812 = vld [vmem:[%s502 + $0x78] sm:$0xf]
        %v2813 = vld [vmem:[%s502 + $0x7c] sm:$0xf]
        %v2814 = vld [vmem:[%s502 + $0x80] sm:$0xf]
        %v2815 = vld [vmem:[%s502 + $0x84] sm:$0xf]
        %v2816 = vld [vmem:[%s502 + $0x88] sm:$0xf]
        %v2817 = vld [vmem:[%s502 + $0x8c] sm:$0xf]
        %v2818 = vld [vmem:[%s502 + $0x90] sm:$0xf]
        %v2819 = vld [vmem:[%s502 + $0x94] sm:$0xf]
        %v2820 = vld [vmem:[%s502 + $0x98] sm:$0xf]
        %v2821 = vld [vmem:[%s502 + $0x9c] sm:$0xf]
        %v2822 = vld [vmem:[%s502 + $0xa0] sm:$0xf]
        %v2823 = vld [vmem:[%s502 + $0xa4] sm:$0xf]
        %v2824 = vld [vmem:[%s502 + $0xa8] sm:$0xf]
        %v2825 = vld [vmem:[%s502 + $0xac] sm:$0xf]
        %v2826 = vld [vmem:[%s502 + $0xb0] sm:$0xf]
        %v2827 = vld [vmem:[%s502 + $0xb4] sm:$0xf]
        %v2828 = vld [vmem:[%s502 + $0xb8] sm:$0xf]
        %v2829 = vld [vmem:[%s502 + $0xbc] sm:$0xf]
        %v2830 = vld [vmem:[%s502 + $0xc0] sm:$0xf]
        %v2831 = vld [vmem:[%s502 + $0xc4] sm:$0xf]
        %v2832 = vld [vmem:[%s502 + $0xc8] sm:$0xf]
        %v2833 = vld [vmem:[%s502 + $0xcc] sm:$0xf]
        %v2834 = vld [vmem:[%s502 + $0xd0] sm:$0xf]
        %v2835 = vld [vmem:[%s502 + $0xd4] sm:$0xf]
        %v2836 = vld [vmem:[%s502 + $0xd8] sm:$0xf]
        %v2837 = vld [vmem:[%s502 + $0xdc] sm:$0xf]
        %v2838 = vld [vmem:[%s502 + $0xe0] sm:$0xf]
        %v2839 = vld [vmem:[%s502 + $0xe4] sm:$0xf]
        %v2840 = vld [vmem:[%s502 + $0xe8] sm:$0xf]
        %v2841 = vld [vmem:[%s502 + $0xec] sm:$0xf]
        %v2842 = vld [vmem:[%s502 + $0xf0] sm:$0xf]
        %v2843 = vld [vmem:[%s502 + $0xf4] sm:$0xf]
        %v2844 = vld [vmem:[%s502 + $0xf8] sm:$0xf]
        %v2845 = vld [vmem:[%s502 + $0xfc] sm:$0xf]
        %v2846 = vunpack.c.l.bf16 %v2782
        %v2847 = vunpack.c.l.bf16 %v2783
        %v2848 = vunpack.c.l.bf16 %v2784
        %v2849 = vunpack.c.l.bf16 %v2785
        %v2850 = vunpack.c.l.bf16 %v2786
        %v2851 = vunpack.c.l.bf16 %v2787
        %v2852 = vunpack.c.l.bf16 %v2788
        %v2853 = vunpack.c.l.bf16 %v2789
        %v2854 = vunpack.c.l.bf16 %v2790
        %v2855 = vunpack.c.l.bf16 %v2791
        %v2856 = vunpack.c.l.bf16 %v2792
        %v2857 = vunpack.c.l.bf16 %v2793
        %v2858 = vunpack.c.l.bf16 %v2794
        %v2859 = vunpack.c.l.bf16 %v2795
        %v2860 = vunpack.c.l.bf16 %v2796
        %v2861 = vunpack.c.l.bf16 %v2797
        %v2862 = vunpack.c.l.bf16 %v2798
        %v2863 = vunpack.c.l.bf16 %v2799
        %v2864 = vunpack.c.l.bf16 %v2800
        %v2865 = vunpack.c.l.bf16 %v2801
        %v2866 = vunpack.c.l.bf16 %v2802
        %v2867 = vunpack.c.l.bf16 %v2803
        %v2868 = vunpack.c.l.bf16 %v2804
        %v2869 = vunpack.c.l.bf16 %v2805
        %v2870 = vunpack.c.l.bf16 %v2806
        %v2871 = vunpack.c.l.bf16 %v2807
        %v2872 = vunpack.c.l.bf16 %v2808
        %v2873 = vunpack.c.l.bf16 %v2809
        %v2874 = vunpack.c.l.bf16 %v2810
        %v2875 = vunpack.c.l.bf16 %v2811
        %v2876 = vunpack.c.l.bf16 %v2812
        %v2877 = vunpack.c.l.bf16 %v2813
        %v2878 = vunpack.c.l.bf16 %v2814
        %v2879 = vunpack.c.l.bf16 %v2815
        %v2880 = vunpack.c.l.bf16 %v2816
        %v2881 = vunpack.c.l.bf16 %v2817
        %v2882 = vunpack.c.l.bf16 %v2818
        %v2883 = vunpack.c.l.bf16 %v2819
        %v2884 = vunpack.c.l.bf16 %v2820
        %v2885 = vunpack.c.l.bf16 %v2821
        %v2886 = vunpack.c.l.bf16 %v2822
        %v2887 = vunpack.c.l.bf16 %v2823
        %v2888 = vunpack.c.l.bf16 %v2824
        %v2889 = vunpack.c.l.bf16 %v2825
        %v2890 = vunpack.c.l.bf16 %v2826
        %v2891 = vunpack.c.l.bf16 %v2827
        %v2892 = vunpack.c.l.bf16 %v2828
        %v2893 = vunpack.c.l.bf16 %v2829
        %v2894 = vunpack.c.l.bf16 %v2830
        %v2895 = vunpack.c.l.bf16 %v2831
        %v2896 = vunpack.c.l.bf16 %v2832
        %v2897 = vunpack.c.l.bf16 %v2833
        %v2898 = vunpack.c.l.bf16 %v2834
        %v2899 = vunpack.c.l.bf16 %v2835
        %v2900 = vunpack.c.l.bf16 %v2836
        %v2901 = vunpack.c.l.bf16 %v2837
        %v2902 = vunpack.c.l.bf16 %v2838
        %v2903 = vunpack.c.l.bf16 %v2839
        %v2904 = vunpack.c.l.bf16 %v2840
        %v2905 = vunpack.c.l.bf16 %v2841
        %v2906 = vunpack.c.l.bf16 %v2842
        %v2907 = vunpack.c.l.bf16 %v2843
        %v2908 = vunpack.c.l.bf16 %v2844
        %v2909 = vunpack.c.l.bf16 %v2845
        %v2910 = vmul.f32 %v2846, %v2494
        %v2911 = vmul.f32 %v2847, %v2495
        %v2912 = vmul.f32 %v2848, %v2496
        %v2913 = vmul.f32 %v2849, %v2497
        %v2914 = vmul.f32 %v2850, %v2498
        %v2915 = vmul.f32 %v2851, %v2499
        %v2916 = vmul.f32 %v2852, %v2500
        %v2917 = vmul.f32 %v2853, %v2501
        %v2918 = vmul.f32 %v2854, %v2502
        %v2919 = vmul.f32 %v2855, %v2503
        %v2920 = vmul.f32 %v2856, %v2504
        %v2921 = vmul.f32 %v2857, %v2505
        %v2922 = vmul.f32 %v2858, %v2506
        %v2923 = vmul.f32 %v2859, %v2507
        %v2924 = vmul.f32 %v2860, %v2508
        %v2925 = vmul.f32 %v2861, %v2509
        %v2926 = vmul.f32 %v2862, %v2510
        %v2927 = vmul.f32 %v2863, %v2511
        %v2928 = vmul.f32 %v2864, %v2512
        %v2929 = vmul.f32 %v2865, %v2513
        %v2930 = vmul.f32 %v2866, %v2514
        %v2931 = vmul.f32 %v2867, %v2515
        %v2932 = vmul.f32 %v2868, %v2516
        %v2933 = vmul.f32 %v2869, %v2517
        %v2934 = vmul.f32 %v2870, %v2518
        %v2935 = vmul.f32 %v2871, %v2519
        %v2936 = vmul.f32 %v2872, %v2520
        %v2937 = vmul.f32 %v2873, %v2521
        %v2938 = vmul.f32 %v2874, %v2522
        %v2939 = vmul.f32 %v2875, %v2523
        %v2940 = vmul.f32 %v2876, %v2524
        %v2941 = vmul.f32 %v2877, %v2525
        %v2942 = vmul.f32 %v2878, %v2526
        %v2943 = vmul.f32 %v2879, %v2527
        %v2944 = vmul.f32 %v2880, %v2528
        %v2945 = vmul.f32 %v2881, %v2529
        %v2946 = vmul.f32 %v2882, %v2530
        %v2947 = vmul.f32 %v2883, %v2531
        %v2948 = vmul.f32 %v2884, %v2532
        %v2949 = vmul.f32 %v2885, %v2533
        %v2950 = vmul.f32 %v2886, %v2534
        %v2951 = vmul.f32 %v2887, %v2535
        %v2952 = vmul.f32 %v2888, %v2536
        %v2953 = vmul.f32 %v2889, %v2537
        %v2954 = vmul.f32 %v2890, %v2538
        %v2955 = vmul.f32 %v2891, %v2539
        %v2956 = vmul.f32 %v2892, %v2540
        %v2957 = vmul.f32 %v2893, %v2541
        %v2958 = vmul.f32 %v2894, %v2542
        %v2959 = vmul.f32 %v2895, %v2543
        %v2960 = vmul.f32 %v2896, %v2544
        %v2961 = vmul.f32 %v2897, %v2545
        %v2962 = vmul.f32 %v2898, %v2546
        %v2963 = vmul.f32 %v2899, %v2547
        %v2964 = vmul.f32 %v2900, %v2548
        %v2965 = vmul.f32 %v2901, %v2549
        %v2966 = vmul.f32 %v2902, %v2550
        %v2967 = vmul.f32 %v2903, %v2551
        %v2968 = vmul.f32 %v2904, %v2552
        %v2969 = vmul.f32 %v2905, %v2553
        %v2970 = vmul.f32 %v2906, %v2554
        %v2971 = vmul.f32 %v2907, %v2555
        %v2972 = vmul.f32 %v2908, %v2556
        %v2973 = vmul.f32 %v2909, %v2557
        %v2974 = vadd.f32 %v2910, %v2942
        %v2975 = vadd.f32 %v2911, %v2943
        %v2976 = vadd.f32 %v2912, %v2944
        %v2977 = vadd.f32 %v2913, %v2945
        %v2978 = vadd.f32 %v2914, %v2946
        %v2979 = vadd.f32 %v2915, %v2947
        %v2980 = vadd.f32 %v2916, %v2948
        %v2981 = vadd.f32 %v2917, %v2949
        %v2982 = vadd.f32 %v2918, %v2950
        %v2983 = vadd.f32 %v2919, %v2951
        %v2984 = vadd.f32 %v2920, %v2952
        %v2985 = vadd.f32 %v2921, %v2953
        %v2986 = vadd.f32 %v2922, %v2954
        %v2987 = vadd.f32 %v2923, %v2955
        %v2988 = vadd.f32 %v2924, %v2956
        %v2989 = vadd.f32 %v2925, %v2957
        %v2990 = vadd.f32 %v2926, %v2958
        %v2991 = vadd.f32 %v2927, %v2959
        %v2992 = vadd.f32 %v2928, %v2960
        %v2993 = vadd.f32 %v2929, %v2961
        %v2994 = vadd.f32 %v2930, %v2962
        %v2995 = vadd.f32 %v2931, %v2963
        %v2996 = vadd.f32 %v2932, %v2964
        %v2997 = vadd.f32 %v2933, %v2965
        %v2998 = vadd.f32 %v2934, %v2966
        %v2999 = vadd.f32 %v2935, %v2967
        %v3000 = vadd.f32 %v2936, %v2968
        %v3001 = vadd.f32 %v2937, %v2969
        %v3002 = vadd.f32 %v2938, %v2970
        %v3003 = vadd.f32 %v2939, %v2971
        %v3004 = vadd.f32 %v2940, %v2972
        %v3005 = vadd.f32 %v2941, %v2973
        %v3006 = vmul.f32 %v2974, 1.442695
        %v3007 = vpow.pop %v3006
        %v3008 = vmul.f32 %v2975, 1.442695
        %v3009 = vpow.pop %v3008
        %v3010 = vmul.f32 %v2976, 1.442695
        %v3011 = vpow.pop %v3010
        %v3012 = vmul.f32 %v2977, 1.442695
        %v3013 = vpow.pop %v3012
        %v3014 = vmul.f32 %v2978, 1.442695
        %v3015 = vpow.pop %v3014
        %v3016 = vmul.f32 %v2979, 1.442695
        %v3017 = vpow.pop %v3016
        %v3018 = vmul.f32 %v2980, 1.442695
        %v3019 = vpow.pop %v3018
        %v3020 = vmul.f32 %v2981, 1.442695
        %v3021 = vpow.pop %v3020
        %v3022 = vmul.f32 %v2982, 1.442695
        %v3023 = vpow.pop %v3022
        %v3024 = vmul.f32 %v2983, 1.442695
        %v3025 = vpow.pop %v3024
        %v3026 = vmul.f32 %v2984, 1.442695
        %v3027 = vpow.pop %v3026
        %v3028 = vmul.f32 %v2985, 1.442695
        %v3029 = vpow.pop %v3028
        %v3030 = vmul.f32 %v2986, 1.442695
        %v3031 = vpow.pop %v3030
        %v3032 = vmul.f32 %v2987, 1.442695
        %v3033 = vpow.pop %v3032
        %v3034 = vmul.f32 %v2988, 1.442695
        %v3035 = vpow.pop %v3034
        %v3036 = vmul.f32 %v2989, 1.442695
        %v3037 = vpow.pop %v3036
        %v3038 = vmul.f32 %v2990, 1.442695
        %v3039 = vpow.pop %v3038
        %v3040 = vmul.f32 %v2991, 1.442695
        %v3041 = vpow.pop %v3040
        %v3042 = vmul.f32 %v2992, 1.442695
        %v3043 = vpow.pop %v3042
        %v3044 = vmul.f32 %v2993, 1.442695
        %v3045 = vpow.pop %v3044
        %v3046 = vmul.f32 %v2994, 1.442695
        %v3047 = vpow.pop %v3046
        %v3048 = vmul.f32 %v2995, 1.442695
        %v3049 = vpow.pop %v3048
        %v3050 = vmul.f32 %v2996, 1.442695
        %v3051 = vpow.pop %v3050
        %v3052 = vmul.f32 %v2997, 1.442695
        %v3053 = vpow.pop %v3052
        %v3054 = vmul.f32 %v2998, 1.442695
        %v3055 = vpow.pop %v3054
        %v3056 = vmul.f32 %v2999, 1.442695
        %v3057 = vpow.pop %v3056
        %v3058 = vmul.f32 %v3000, 1.442695
        %v3059 = vpow.pop %v3058
        %v3060 = vmul.f32 %v3001, 1.442695
        %v3061 = vpow.pop %v3060
        %v3062 = vmul.f32 %v3002, 1.442695
        %v3063 = vpow.pop %v3062
        %v3064 = vmul.f32 %v3003, 1.442695
        %v3065 = vpow.pop %v3064
        %v3066 = vmul.f32 %v3004, 1.442695
        %v3067 = vpow.pop %v3066
        %v3068 = vmul.f32 %v3005, 1.442695
        %v3069 = vpow.pop %v3068
        %v3070 = vld [vmem:[%s484] sm:$0xff]
        %v3071 = vld [vmem:[%s484 + $0x8] sm:$0xff]
        %v3072 = vld [vmem:[#allocation2] sm:$0xff]
        %v3073 = vpack.c.bf16 %v3070, %v3070
        %v3074 = vpack.c.bf16 %v3071, %v3071
        %v3075 = vpack.c.bf16 %v2751, %v2750
        %v3076 = vpack.c.bf16 %v2753, %v2752
        %v3077 = vpack.c.bf16 %v2755, %v2754
        %v3078 = vpack.c.bf16 %v2757, %v2756
        %v3079 = vpack.c.bf16 %v2759, %v2758
        %v3080 = vpack.c.bf16 %v2761, %v2760
        %v3081 = vpack.c.bf16 %v2763, %v2762
        %v3082 = vpack.c.bf16 %v2765, %v2764
        %v3083 = vpack.c.bf16 %v2767, %v2766
        %v3084 = vpack.c.bf16 %v2769, %v2768
        %v3085 = vpack.c.bf16 %v2771, %v2770
        %v3086 = vpack.c.bf16 %v2773, %v2772
        %v3087 = vpack.c.bf16 %v2775, %v2774
        %v3088 = vpack.c.bf16 %v2777, %v2776
        %v3089 = vpack.c.bf16 %v2779, %v2778
        %v3090 = vpack.c.bf16 %v2781, %v2780
        %3091 = vmatprep.subr.bf16.mxu0 0
        %3092 = vmatpush1.bf16.msra.mxu0 %v3075
        %3093 = vmatprep.subr.bf16.mxu0 0
        %3094 = vmatpush1.bf16.msra.mxu0 %v3076
        %3095 = vmatprep.subr.bf16.mxu0 0
        %3096 = vmatpush1.bf16.msra.mxu0 %v3077
        %3097 = vmatprep.subr.bf16.mxu0 0
        %3098 = vmatpush1.bf16.msra.mxu0 %v3078
        %3099 = vmatprep.subr.bf16.mxu0 0
        %3100 = vmatpush1.bf16.msra.mxu0 %v3079
        %3101 = vmatprep.subr.bf16.mxu0 0
        %3102 = vmatpush1.bf16.msra.mxu0 %v3080
        %3103 = vmatprep.subr.bf16.mxu0 0
        %3104 = vmatpush1.bf16.msra.mxu0 %v3081
        %3105 = vmatprep.subr.bf16.mxu0 0
        %3106 = vmatpush1.bf16.msra.mxu0 %v3082
        %3107 = vmatprep.subr.bf16.mxu0 0
        %3108 = vmatpush1.bf16.msra.mxu0 %v3083
        %3109 = vmatprep.subr.bf16.mxu0 0
        %3110 = vmatpush1.bf16.msra.mxu0 %v3084
        %3111 = vmatprep.subr.bf16.mxu0 0
        %3112 = vmatpush1.bf16.msra.mxu0 %v3085
        %3113 = vmatprep.subr.bf16.mxu0 0
        %3114 = vmatpush1.bf16.msra.mxu0 %v3086
        %3115 = vmatprep.subr.bf16.mxu0 0
        %3116 = vmatpush1.bf16.msra.mxu0 %v3087
        %3117 = vmatprep.subr.bf16.mxu0 0
        %3118 = vmatpush1.bf16.msra.mxu0 %v3088
        %3119 = vmatprep.subr.bf16.mxu0 0
        %3120 = vmatpush1.bf16.msra.mxu0 %v3089
        %3121 = vmatprep.subr.bf16.mxu0 0
        %3122 = vmatpush1.bf16.msra.mxu0 %v3090
        %3123 = vmatprep.mubr.bf16.mxu0 %v3074
        %3124 = vmatmul.mubr.bf16.gmra.mrb[0].mxu0 %v3073
        %v3125 = vpop.f32.mrb[0].mxu0
        %v3126 = vadd.f32 0.0, %v3125
        %v3127 = vpop.f32.mrb[0].mxu0
        %v3128 = vpop.f32.mrb[0].mxu0
        %v3129 = vpop.f32.mrb[0].mxu0
        %3130 = vdwg.mxu0
        %v3131 = vadd.f32 %v3072, %v3126
        %3132 = vst [vmem:[#allocation2] sm:$0xff] %v3131
        %v3133 = vld [vmem:[#allocation3] sm:$0xff]
        %v3134 = vmul.f32 %v3070, %v3070
        %v3135 = vmul.f32 %v3071, %v3071
        %v3136 = vpack.c.bf16 %v3134, %v3134
        %v3137 = vpack.c.bf16 %v3135, %v3135
        %v3138 = vpack.c.bf16 %v3009, %v3007
        %v3139 = vpack.c.bf16 %v3013, %v3011
        %v3140 = vpack.c.bf16 %v3017, %v3015
        %v3141 = vpack.c.bf16 %v3021, %v3019
        %v3142 = vpack.c.bf16 %v3025, %v3023
        %v3143 = vpack.c.bf16 %v3029, %v3027
        %v3144 = vpack.c.bf16 %v3033, %v3031
        %v3145 = vpack.c.bf16 %v3037, %v3035
        %v3146 = vpack.c.bf16 %v3041, %v3039
        %v3147 = vpack.c.bf16 %v3045, %v3043
        %v3148 = vpack.c.bf16 %v3049, %v3047
        %v3149 = vpack.c.bf16 %v3053, %v3051
        %v3150 = vpack.c.bf16 %v3057, %v3055
        %v3151 = vpack.c.bf16 %v3061, %v3059
        %v3152 = vpack.c.bf16 %v3065, %v3063
        %v3153 = vpack.c.bf16 %v3069, %v3067
        %3154 = vmatprep.subr.bf16.mxu0 0
        %3155 = vmatpush1.bf16.msra.mxu0 %v3138
        %3156 = vmatprep.subr.bf16.mxu0 0
        %3157 = vmatpush1.bf16.msra.mxu0 %v3139
        %3158 = vmatprep.subr.bf16.mxu0 0
        %3159 = vmatpush1.bf16.msra.mxu0 %v3140
        %3160 = vmatprep.subr.bf16.mxu0 0
        %3161 = vmatpush1.bf16.msra.mxu0 %v3141
        %3162 = vmatprep.subr.bf16.mxu0 0
        %3163 = vmatpush1.bf16.msra.mxu0 %v3142
        %3164 = vmatprep.subr.bf16.mxu0 0
        %3165 = vmatpush1.bf16.msra.mxu0 %v3143
        %3166 = vmatprep.subr.bf16.mxu0 0
        %3167 = vmatpush1.bf16.msra.mxu0 %v3144
        %3168 = vmatprep.subr.bf16.mxu0 0
        %3169 = vmatpush1.bf16.msra.mxu0 %v3145
        %3170 = vmatprep.subr.bf16.mxu0 0
        %3171 = vmatpush1.bf16.msra.mxu0 %v3146
        %3172 = vmatprep.subr.bf16.mxu0 0
        %3173 = vmatpush1.bf16.msra.mxu0 %v3147
        %3174 = vmatprep.subr.bf16.mxu0 0
        %3175 = vmatpush1.bf16.msra.mxu0 %v3148
        %3176 = vmatprep.subr.bf16.mxu0 0
        %3177 = vmatpush1.bf16.msra.mxu0 %v3149
        %3178 = vmatprep.subr.bf16.mxu0 0
        %3179 = vmatpush1.bf16.msra.mxu0 %v3150
        %3180 = vmatprep.subr.bf16.mxu0 0
        %3181 = vmatpush1.bf16.msra.mxu0 %v3151
        %3182 = vmatprep.subr.bf16.mxu0 0
        %3183 = vmatpush1.bf16.msra.mxu0 %v3152
        %3184 = vmatprep.subr.bf16.mxu0 0
        %3185 = vmatpush1.bf16.msra.mxu0 %v3153
        %3186 = vmatprep.mubr.bf16.mxu0 %v3137
        %3187 = vmatmul.mubr.bf16.gmra.mrb[0].mxu0 %v3136
        %v3188 = vpop.f32.mrb[0].mxu0
        %v3189 = vadd.f32 0.0, %v3188
        %v3190 = vpop.f32.mrb[0].mxu0
        %v3191 = vpop.f32.mrb[0].mxu0
        %v3192 = vpop.f32.mrb[0].mxu0
        %3193 = vdwg.mxu0
        %v3194 = vadd.f32 %v3133, %v3189
        %3195 = vst [vmem:[#allocation3] sm:$0xff] %v3194
        %p3196 = scmp.eq.s32.totalorder %s39, 1
        // Predicated region
        $region69: #{tpu_custom_call.1} parent=47 // pred_check
          %p3197 = pneg %p3196
        $region70: #{tpu_custom_call.1} parent=47 // pred_check_branch
          %3199 = sbr.rel (%p3197) target = $region72
        $region71: #{tpu_custom_call.1} parent=47 // pred_region
          %v3200 = vld [vmem:[#allocation2] sm:$0xff]
          %v3201 = vld [vmem:[%s577] sm:$0x1]
          %v3203 = vlaneseq
          %v3204 = vshrl.u32 %v3203, 7
          %v3205 = vsub.s32 0, %v3204
          %v3206 = vrot.slane %v3201, %v3205
          %v3208 = vadd.f32 %v3200, %v3206
          %v3209 = vld [vmem:[#allocation3] sm:$0xff]
          %v3210 = vld [vmem:[%s580] sm:$0x1]
          %v3212 = vlaneseq
          %v3213 = vshrl.u32 %v3212, 7
          %v3214 = vsub.s32 0, %v3213
          %v3215 = vrot.slane %v3210, %v3214
          %v3217 = vadd.f32 %v3209, %v3215
          %v3218 = vrsqrt.pop %v3217
          %v3219 = vmul.f32 %v3217, %v3218
          %vm3220 = vcmp.eq.f32.partialorder %v3217, inf
          %v3221 = vsel %vm3220, %v3217, %v3219
          %vm3222 = vcmp.eq.f32.partialorder %v3217, 0.0
          %v3223 = vand.u32 %v3217, 2147483648
          %v3224 = vsel %vm3222, %v3223, %v3221
          %v3225 = vld [vmem:[%s588] sm:$0xff]
          %v3226 = vmul.f32 %v3224, %v3225
          %v3227 = vadd.f32 %v3208, %v3226
          %3228 = vst [vmem:[%s570] sm:$0xff] %v3227
        $region72: #{tpu_custom_call.1} parent=47 // pred_fallthru
          _
        %s3229 = sand.u32 %s253, 1
        %s3230 = scalar_lea.sflag [#allocation8], %s3229
        %s3231 = sand.u32 %s253, 1
        %s3232 = smul.addr %s3231, 8
        %s3233 = scalar_lea.vmem [#allocation14], %s3232
        // Predicated region
        $region73: #{tpu_custom_call.1} parent=47 // pred_check
          %p3234 = pneg %p263
        $region74: #{tpu_custom_call.1} parent=47 // pred_check_branch
          %3236 = sbr.rel (%p3234) target = $region76
        $region75: #{tpu_custom_call.1} parent=47 // pred_region
          %s3238 = ssub.s32 128, 128
          %3239 = vsyncadd %s3230, %s3238
          %s3240 = smul.addr %s37, 2
          %s3241 = sadd.s32 %s38, %s3240
          %s3242 = smul.addr %s3241, 128
          %s3243 = scalar_lea.hbm %s8, %s3242
          %s3245 = sshll.u32 %s3233, 4
          %s3246 = int_to_ptr.vmem [resolvable:$true] %s3245
          %3248 = dma.vmem_to_hbm [thread:$0]  %s3246, 128, %s3243, %s3230
        $region76: #{tpu_custom_call.1} parent=47 // pred_fallthru
          _
      $region48: #{tpu_custom_call.1} parent=5 // pred_fallthru
        _
      %p3249 = scmp.le.s32.totalorder 2, %s27
      // Predicated region
      $region77: #{tpu_custom_call.1} parent=5 // pred_check
        %p3250 = pneg %p3249
      $region78: #{tpu_custom_call.1} parent=5 // pred_check_branch
        %3252 = sbr.rel (%p3250) target = $region80
      $region79: #{tpu_custom_call.1} parent=5 // pred_region
        %s3253 = ssub.s32 %s27, 2
        // Predicated region
        $region81: #{tpu_custom_call.1} parent=79 // pred_check
          %p3254 = pneg %p269
        $region82: #{tpu_custom_call.1} parent=79 // pred_check_branch
          %3256 = sbr.rel (%p3254) target = $region84
        $region83: #{tpu_custom_call.1} parent=79 // pred_region
          %s3257 = sand.u32 %s254, 1
          %s3258 = scalar_lea.sflag [#allocation8], %s3257
          %s3259 = sand.u32 %s254, 1
          %s3260 = smul.addr %s3259, 8
          %s3261 = scalar_lea.vmem [#allocation14], %s3260
          %3262 = dma.done %s3258, 128
        $region84: #{tpu_custom_call.1} parent=79 // pred_fallthru
          _
      $region80: #{tpu_custom_call.1} parent=5 // pred_fallthru
        _
    $region6: #{tpu_custom_call.1} parent=1 // loop_footer
      %s31 = sadd.s32 1, %s27
    $region7: #{tpu_custom_call.1} parent=1 // loop_footer_branch
      %26 = sbr.rel target = $region3
    $region8: #{tpu_custom_call.1} parent=1 // loop_exit
      _
    %3263 = vsyncpa [#allocation7], 1
    %s3264 = scalar_lea.sflag [#allocation7], 1
    %3265 = vsyncpa %s3264, 1
    %3266 = vsyncpa [#allocation10], 1
    %s3267 = scalar_lea.sflag [#allocation10], 1
    %3268 = vsyncpa %s3267, 1
    %3269 = vsyncpa [#allocation13], 1
    %s3270 = scalar_lea.sflag [#allocation13], 1
    %3271 = vsyncpa %s3270, 1
    %3272 = vsyncpa [#allocation8], 1
    %s3273 = scalar_lea.sflag [#allocation8], 1
    %3274 = vsyncpa %s3273, 1

</llo_original>
